<compile_context>
chip_gen: v6e
topology: v6e:2x2x1
jax: 0.10.0
libtpu: 0.0.40
codegen_flags: <defaults>
</compile_context>

<pallas_src>
import math

import jax
import jax.numpy as jnp
from jax.experimental import pallas as pl
from jax.experimental.pallas import tpu as pltpu

# ---------------- model config (scaled-down DistilBERT, 4 layers) ------------
HIDDEN = 128          # DistilBERT: 768
N_HEADS = 4           # DistilBERT: 12
HEAD_DIM = HIDDEN // N_HEADS
FFN = 4 * HIDDEN      # DistilBERT: 3072
N_LAYERS = 4          # self.bert.transformer.layer[:4]
VOCAB = 1000          # DistilBERT: 30522
MAX_POS = 64          # DistilBERT: 512
N_CLASSES = 2
LN_EPS = 1e-12
CLS_PAD = 128         # lane-dense classifier output slab width
MASK_SCALE = 1e9      # additive attention bias magnitude for padded keys


def _layernorm(x, gamma, beta, eps=LN_EPS):
    mean = jnp.mean(x, axis=-1, keepdims=True)
    var = jnp.mean(jnp.square(x - mean), axis=-1, keepdims=True)
    return (x - mean) * jax.lax.rsqrt(var + eps) * gamma + beta


# ---------------------------- fused Pallas kernel -----------------------------
def fused_bert_kernel(x_emb_ref, bias_ref, emb_g_ref, emb_b_ref,
                      wqkv_ref, bqkv_ref, wo_ref, bo_ref,
                      ln1_g_ref, ln1_b_ref,
                      w1_ref, b1_ref, w2_ref, b2_ref,
                      ln2_g_ref, ln2_b_ref,
                      clsw_ref, clsb_ref,
                      logits_ref,
                      x_vmem):
    layer = pl.program_id(0)

    # ---- grid step 0: embedding LayerNorm into the resident activation ----
    @pl.when(layer == 0)
    def _():
        x_vmem[...] = _layernorm(x_emb_ref[...], emb_g_ref[...], emb_b_ref[...])

    # ---- one transformer encoder layer (runs every grid step) ----
    x = x_vmem[...]                                  # (B, S, H) f32
    B, S, H = x.shape
    x2d = x.reshape(B * S, H)

    # fused Q/K/V projection: one (B*S, H) @ (H, 3H) MXU pass
    qkv = (jnp.dot(x2d.astype(jnp.bfloat16), wqkv_ref[...],
                   preferred_element_type=jnp.float32) + bqkv_ref[...])
    inv_sqrt_d = 1.0 / math.sqrt(HEAD_DIM)
    # scale Q once over the full slab (single VPU multiply, not per-head)
    q3 = (qkv[:, :HIDDEN] * inv_sqrt_d).reshape(B, S, H)
    k3 = qkv[:, HIDDEN:2 * HIDDEN].reshape(B, S, H)
    v3 = qkv[:, 2 * HIDDEN:].reshape(B, S, H)

    bias = bias_ref[...]                             # (B, 1, S) additive bias

    ctx_heads = []
    for h_i in range(N_HEADS):                       # static unroll over heads
        sl = slice(h_i * HEAD_DIM, (h_i + 1) * HEAD_DIM)
        qh = q3[:, :, sl]                            # (B, S, hd)
        kh = k3[:, :, sl]
        vh = v3[:, :, sl]
        scores = jnp.einsum('bqd,bkd->bqk', qh, kh,
                            preferred_element_type=jnp.float32) + bias
        scores = scores - jnp.max(scores, axis=-1, keepdims=True)
        p = jnp.exp(scores)
        p = p * pl.reciprocal(jnp.sum(p, axis=-1, keepdims=True), approx=True)
        ctx_heads.append(jnp.einsum('bqk,bkd->bqd', p, vh,
                                    preferred_element_type=jnp.float32))
    ctx = jnp.concatenate(ctx_heads, axis=-1).reshape(B * S, H)

    attn = (jnp.dot(ctx.astype(jnp.bfloat16), wo_ref[...],
                    preferred_element_type=jnp.float32) + bo_ref[...])
    h1 = _layernorm(x2d + attn, ln1_g_ref[...], ln1_b_ref[...])

    ff = (jnp.dot(h1.astype(jnp.bfloat16), w1_ref[...],
                  preferred_element_type=jnp.float32) + b1_ref[...])
    # TODO(synk): HF DistilBERT uses exact erf-GELU; tanh-approx GELU used here.
    ff = jax.nn.gelu(ff, approximate=True)
    ff = (jnp.dot(ff.astype(jnp.bfloat16), w2_ref[...],
                  preferred_element_type=jnp.float32) + b2_ref[...])

    out2d = _layernorm(h1 + ff, ln2_g_ref[...], ln2_b_ref[...])
    x_vmem[...] = out2d.reshape(B, S, H)

    # ---- last grid step: classifier on the CLS token, lane-dense store ----
    @pl.when(layer == pl.num_programs(0) - 1)
    def _():
        cls = out2d.reshape(B, S, H)[:, 0, :]        # (B, H)
        logits_ref[...] = (jnp.dot(cls, clsw_ref[...],
                                   preferred_element_type=jnp.float32)
                           + clsb_ref[...])


# ------------------------------ wrapper ---------------------------------------
def _const_spec(shape):
    # same block every grid step -> stays resident in VMEM (no re-DMA)
    return pl.BlockSpec(shape, lambda l, _n=len(shape): (0,) * _n)


def _layer_spec(shape):
    # leading N_LAYERS axis indexed by the grid, squeezed out of the kernel view
    n_rest = len(shape) - 1
    return pl.BlockSpec((None,) + tuple(shape[1:]),
                        lambda l, _n=n_rest: (l,) + (0,) * _n)


@jax.jit
def forward(params, url_input_ids, url_attention_mask):
    B, S = url_input_ids.shape

    # ---- plain-JAX glue: embedding gathers + additive attention bias ----
    we = jnp.take(params['word_emb'], url_input_ids, axis=0)   # (B, S, H)
    pe = params['pos_emb'][:S][None, :, :]                     # (1, S, H)
    x_emb = (we + pe).astype(jnp.float32)
    attn_bias = ((url_attention_mask.astype(jnp.float32) - 1.0)
                 .reshape(B, 1, S) * MASK_SCALE)               # 0 keep / -1e9 pad

    # classifier weights padded to a lane-dense 128-wide slab
    clsw = jnp.zeros((HIDDEN, CLS_PAD), jnp.float32).at[:, :N_CLASSES].set(
        params['cls_w'])
    clsb = jnp.zeros((1, CLS_PAD), jnp.float32).at[:, :N_CLASSES].set(
        params['cls_b'])

    grid_spec = pltpu.PrefetchScalarGridSpec(
        num_scalar_prefetch=0,
        grid=(N_LAYERS,),
        in_specs=[
            _const_spec((B, S, HIDDEN)),            # x_emb
            _const_spec((B, 1, S)),                 # attention bias
            _const_spec((1, HIDDEN)),               # emb LN gamma
            _const_spec((1, HIDDEN)),               # emb LN beta
            _layer_spec(params['wqkv'].shape),      # (L, H, 3H) bf16
            _layer_spec(params['bqkv'].shape),      # (L, 1, 3H)
            _layer_spec(params['wo'].shape),        # (L, H, H) bf16
            _layer_spec(params['bo'].shape),        # (L, 1, H)
            _layer_spec(params['ln1_g'].shape),
            _layer_spec(params['ln1_b'].shape),
            _layer_spec(params['w1'].shape),        # (L, H, FFN) bf16
            _layer_spec(params['b1'].shape),
            _layer_spec(params['w2'].shape),        # (L, FFN, H) bf16
            _layer_spec(params['b2'].shape),
            _layer_spec(params['ln2_g'].shape),
            _layer_spec(params['ln2_b'].shape),
            _const_spec((HIDDEN, CLS_PAD)),         # padded classifier W
            _const_spec((1, CLS_PAD)),              # padded classifier b
        ],
        out_specs=pl.BlockSpec((B, CLS_PAD), lambda l: (0, 0)),
        scratch_shapes=[pltpu.VMEM((B, S, HIDDEN), jnp.float32)],
    )

    logits_pad = pl.pallas_call(
        fused_bert_kernel,
        out_shape=jax.ShapeDtypeStruct((B, CLS_PAD), jnp.float32),
        grid_spec=grid_spec,
        compiler_params=pltpu.CompilerParams(
            dimension_semantics=("arbitrary",)),    # sequential layer dependency
    )(x_emb, attn_bias, params['emb_ln_g'], params['emb_ln_b'],
      params['wqkv'], params['bqkv'], params['wo'], params['bo'],
      params['ln1_g'], params['ln1_b'],
      params['w1'], params['b1'], params['w2'], params['b2'],
      params['ln2_g'], params['ln2_b'],
      clsw, clsb)

    return logits_pad[:, :N_CLASSES]


# --------------------------- deterministic params ------------------------------
def init_params(key):
    def dense(k, shape):
        return jax.random.normal(k, shape, jnp.float32) * 0.02

    keys = jax.random.split(key, 3 + N_LAYERS)
    params = {
        'word_emb': dense(keys[0], (VOCAB, HIDDEN)),
        'pos_emb':  dense(keys[1], (MAX_POS, HIDDEN)),
        'emb_ln_g': jnp.ones((1, HIDDEN), jnp.float32),
        'emb_ln_b': jnp.zeros((1, HIDDEN), jnp.float32),
        'cls_w':    dense(keys[2], (HIDDEN, N_CLASSES)),
        'cls_b':    jnp.zeros((1, N_CLASSES), jnp.float32),
    }
    wqkv, wo, w1, w2 = [], [], [], []
    for i in range(N_LAYERS):
        kq, kk, kv, ko, k1, k2 = jax.random.split(keys[3 + i], 6)
        # fused QKV weight: concat of q_lin / k_lin / v_lin along the out dim
        wqkv.append(jnp.concatenate([dense(kq, (HIDDEN, HIDDEN)),
                                     dense(kk, (HIDDEN, HIDDEN)),
                                     dense(kv, (HIDDEN, HIDDEN))], axis=1))
        wo.append(dense(ko, (HIDDEN, HIDDEN)))
        w1.append(dense(k1, (HIDDEN, FFN)))
        w2.append(dense(k2, (FFN, HIDDEN)))
    params.update({
        'wqkv':  jnp.stack(wqkv).astype(jnp.bfloat16),              # (L, H, 3H)
        'bqkv':  jnp.zeros((N_LAYERS, 1, 3 * HIDDEN), jnp.float32),
        'wo':    jnp.stack(wo).astype(jnp.bfloat16),                # (L, H, H)
        'bo':    jnp.zeros((N_LAYERS, 1, HIDDEN), jnp.float32),
        'ln1_g': jnp.ones((N_LAYERS, 1, HIDDEN), jnp.float32),
        'ln1_b': jnp.zeros((N_LAYERS, 1, HIDDEN), jnp.float32),
        'w1':    jnp.stack(w1).astype(jnp.bfloat16),                # (L, H, FFN)
        'b1':    jnp.zeros((N_LAYERS, 1, FFN), jnp.float32),
        'w2':    jnp.stack(w2).astype(jnp.bfloat16),                # (L, FFN, H)
        'b2':    jnp.zeros((N_LAYERS, 1, HIDDEN), jnp.float32),
        'ln2_g': jnp.ones((N_LAYERS, 1, HIDDEN), jnp.float32),
        'ln2_b': jnp.zeros((N_LAYERS, 1, HIDDEN), jnp.float32),
    })
    return params


# -------------------------------- main ----------------------------------------
if __name__ == "__main__":
    B, S = 2, 8
    key = jax.random.PRNGKey(0)
    k_ids, k_params = jax.random.split(key)

    url_input_ids = jax.random.randint(k_ids, (B, S), 0, VOCAB, dtype=jnp.int32)
    url_attention_mask = jnp.array([[1, 1, 1, 1, 1, 1, 0, 0],
                                    [1, 1, 1, 1, 1, 1, 1, 1]], dtype=jnp.int32)

    params = init_params(k_params)

    logits = forward(params, url_input_ids, url_attention_mask)
    logits = jax.block_until_ready(logits)
    assert logits.shape == (B, N_CLASSES) and logits.dtype == jnp.float32
    assert bool(jnp.all(jnp.isfinite(logits)))
    print("KERNEL_OK")
</pallas_src>

<mosaic_0001>
module attributes {stable_mosaic.version = 11 : i64} {
  func.func @fused_bert_kernel(%arg0: i32, %arg1: memref<2x8x128xf32, #tpu.memory_space<vmem>>, %arg2: memref<2x1x8xf32, #tpu.memory_space<vmem>>, %arg3: memref<1x128xf32, #tpu.memory_space<vmem>>, %arg4: memref<1x128xf32, #tpu.memory_space<vmem>>, %arg5: memref<1x128x384xbf16, #tpu.memory_space<vmem>>, %arg6: memref<1x1x384xf32, #tpu.memory_space<vmem>>, %arg7: memref<1x128x128xbf16, #tpu.memory_space<vmem>>, %arg8: memref<1x1x128xf32, #tpu.memory_space<vmem>>, %arg9: memref<1x1x128xf32, #tpu.memory_space<vmem>>, %arg10: memref<1x1x128xf32, #tpu.memory_space<vmem>>, %arg11: memref<1x128x512xbf16, #tpu.memory_space<vmem>>, %arg12: memref<1x1x512xf32, #tpu.memory_space<vmem>>, %arg13: memref<1x512x128xbf16, #tpu.memory_space<vmem>>, %arg14: memref<1x1x128xf32, #tpu.memory_space<vmem>>, %arg15: memref<1x1x128xf32, #tpu.memory_space<vmem>>, %arg16: memref<1x1x128xf32, #tpu.memory_space<vmem>>, %arg17: memref<128x128xf32, #tpu.memory_space<vmem>>, %arg18: memref<1x128xf32, #tpu.memory_space<vmem>>, %arg19: memref<2x128xf32, #tpu.memory_space<vmem>>, %arg20: memref<2x8x128xf32, #tpu.memory_space<vmem>>) attributes {dimension_semantics = [#tpu.dimension_semantics<arbitrary>], iteration_bounds = array<i64: 4>, scalar_prefetch = 0 : i64, scratch_operands = 1 : i64, tpu.core_type = #tpu.core_type<tc>, window_params = [{pipeline_mode = #tpu.pipeline_mode<synchronous>, transform_indices = @transform_0, window_bounds = array<i64: 2, 8, 128>}, {pipeline_mode = #tpu.pipeline_mode<synchronous>, transform_indices = @transform_1, window_bounds = array<i64: 2, 1, 8>}, {pipeline_mode = #tpu.pipeline_mode<synchronous>, transform_indices = @transform_2, window_bounds = array<i64: 1, 128>}, {pipeline_mode = #tpu.pipeline_mode<synchronous>, transform_indices = @transform_3, window_bounds = array<i64: 1, 128>}, {transform_indices = @transform_4, window_bounds = array<i64: 1, 128, 384>}, {transform_indices = @transform_5, window_bounds = array<i64: 1, 1, 384>}, {transform_indices = @transform_6, window_bounds = array<i64: 1, 128, 128>}, {transform_indices = @transform_7, window_bounds = array<i64: 1, 1, 128>}, {transform_indices = @transform_8, window_bounds = array<i64: 1, 1, 128>}, {transform_indices = @transform_9, window_bounds = array<i64: 1, 1, 128>}, {transform_indices = @transform_10, window_bounds = array<i64: 1, 128, 512>}, {transform_indices = @transform_11, window_bounds = array<i64: 1, 1, 512>}, {transform_indices = @transform_12, window_bounds = array<i64: 1, 512, 128>}, {transform_indices = @transform_13, window_bounds = array<i64: 1, 1, 128>}, {transform_indices = @transform_14, window_bounds = array<i64: 1, 1, 128>}, {transform_indices = @transform_15, window_bounds = array<i64: 1, 1, 128>}, {pipeline_mode = #tpu.pipeline_mode<synchronous>, transform_indices = @transform_16, window_bounds = array<i64: 128, 128>}, {pipeline_mode = #tpu.pipeline_mode<synchronous>, transform_indices = @transform_17, window_bounds = array<i64: 1, 128>}, {pipeline_mode = #tpu.pipeline_mode<synchronous>, transform_indices = @transform_18, window_bounds = array<i64: 2, 128>}]} {
    %c0_i32 = arith.constant 0 : i32
    %0 = arith.cmpi eq, %arg0, %c0_i32 : i32
    %1 = arith.extui %0 : i1 to i32
    %c0_i32_0 = arith.constant 0 : i32
    %2 = arith.cmpi ne, %1, %c0_i32_0 : i32
    scf.if %2 {
      %c0_80 = arith.constant 0 : index
      %c0_81 = arith.constant 0 : index
      %c0_82 = arith.constant 0 : index
      %188 = vector.load %arg1[%c0_80, %c0_81, %c0_82] : memref<2x8x128xf32, #tpu.memory_space<vmem>>, vector<2x8x128xf32>
      %c0_83 = arith.constant 0 : index
      %c0_84 = arith.constant 0 : index
      %189 = vector.load %arg3[%c0_83, %c0_84] : memref<1x128xf32, #tpu.memory_space<vmem>>, vector<1x128xf32>
      %c0_85 = arith.constant 0 : index
      %c0_86 = arith.constant 0 : index
      %190 = vector.load %arg4[%c0_85, %c0_86] : memref<1x128xf32, #tpu.memory_space<vmem>>, vector<1x128xf32>
      %cst_87 = arith.constant dense<0.000000e+00> : vector<2x8xf32>
      %191 = vector.multi_reduction <add>, %188, %cst_87 [2] : vector<2x8x128xf32> to vector<2x8xf32>
      %192 = vector.shape_cast %191 : vector<2x8xf32> to vector<2x8x1xf32>
      %cst_88 = arith.constant 1.280000e+02 : f32
      %193 = vector.broadcast %cst_88 : f32 to vector<2x8x1xf32>
      %194 = arith.divf %192, %193 : vector<2x8x1xf32>
      %195 = vector.broadcast %194 : vector<2x8x1xf32> to vector<2x8x128xf32>
      %196 = arith.subf %188, %195 : vector<2x8x128xf32>
      %197 = arith.mulf %196, %196 : vector<2x8x128xf32>
      %cst_89 = arith.constant dense<0.000000e+00> : vector<2x8xf32>
      %198 = vector.multi_reduction <add>, %197, %cst_89 [2] : vector<2x8x128xf32> to vector<2x8xf32>
      %199 = vector.shape_cast %198 : vector<2x8xf32> to vector<2x8x1xf32>
      %cst_90 = arith.constant 1.280000e+02 : f32
      %200 = vector.broadcast %cst_90 : f32 to vector<2x8x1xf32>
      %201 = arith.divf %199, %200 : vector<2x8x1xf32>
      %202 = vector.broadcast %194 : vector<2x8x1xf32> to vector<2x8x128xf32>
      %203 = arith.subf %188, %202 : vector<2x8x128xf32>
      %cst_91 = arith.constant 9.99999996E-13 : f32
      %204 = vector.broadcast %cst_91 : f32 to vector<2x8x1xf32>
      %205 = arith.addf %201, %204 : vector<2x8x1xf32>
      %206 = math.rsqrt %205 : vector<2x8x1xf32>
      %207 = vector.broadcast %206 : vector<2x8x1xf32> to vector<2x8x128xf32>
      %208 = arith.mulf %203, %207 : vector<2x8x128xf32>
      %209 = vector.shape_cast %189 : vector<1x128xf32> to vector<1x1x128xf32>
      %210 = vector.broadcast %209 : vector<1x1x128xf32> to vector<2x8x128xf32>
      %211 = arith.mulf %208, %210 : vector<2x8x128xf32>
      %212 = vector.shape_cast %190 : vector<1x128xf32> to vector<1x1x128xf32>
      %213 = vector.broadcast %212 : vector<1x1x128xf32> to vector<2x8x128xf32>
      %214 = arith.addf %211, %213 : vector<2x8x128xf32>
      %c0_92 = arith.constant 0 : index
      %c0_93 = arith.constant 0 : index
      %c0_94 = arith.constant 0 : index
      %215 = vector.load %arg20[%c0_92, %c0_93, %c0_94] : memref<2x8x128xf32, #tpu.memory_space<vmem>>, vector<2x8x128xf32>
      tpu.vector_store %arg20[%c0_92, %c0_93, %c0_94], %214 {strides = array<i32>} : memref<2x8x128xf32, #tpu.memory_space<vmem>>, vector<2x8x128xf32>,
    } else {
    }
    %c0 = arith.constant 0 : index
    %c0_1 = arith.constant 0 : index
    %c0_2 = arith.constant 0 : index
    %3 = vector.load %arg20[%c0, %c0_1, %c0_2] : memref<2x8x128xf32, #tpu.memory_space<vmem>>, vector<2x8x128xf32>
    %4 = vector.shape_cast %3 : vector<2x8x128xf32> to vector<16x128xf32>
    %5 = arith.truncf %4 : vector<16x128xf32> to vector<16x128xbf16>
    %c0_3 = arith.constant 0 : index
    %c0_4 = arith.constant 0 : index
    %c0_5 = arith.constant 0 : index
    %6 = vector.load %arg5[%c0_3, %c0_4, %c0_5] : memref<1x128x384xbf16, #tpu.memory_space<vmem>>, vector<1x128x384xbf16>
    %7 = vector.shape_cast %6 : vector<1x128x384xbf16> to vector<128x384xbf16>
    %cst = arith.constant dense<0.000000e+00> : vector<16x384xf32>
    %8 = tpu.matmul %5, %7, %cst {dimension_numbers = #tpu.dot_dimension_numbers<[1], [0], [0], [1], [0, 0, 1, 1], [], []>} : vector<16x128xbf16>, vector<128x384xbf16>, vector<16x384xf32> -> vector<16x384xf32>
    %c0_6 = arith.constant 0 : index
    %c0_7 = arith.constant 0 : index
    %c0_8 = arith.constant 0 : index
    %9 = vector.load %arg6[%c0_6, %c0_7, %c0_8] : memref<1x1x384xf32, #tpu.memory_space<vmem>>, vector<1x1x384xf32>
    %10 = vector.shape_cast %9 : vector<1x1x384xf32> to vector<1x384xf32>
    %11 = vector.broadcast %10 : vector<1x384xf32> to vector<16x384xf32>
    %12 = arith.addf %8, %11 : vector<16x384xf32>
    %13 = vector.extract_strided_slice %12 {offsets = [0, 0], sizes = [16, 128], strides = [1, 1]} : vector<16x384xf32> to vector<16x128xf32>
    %cst_9 = arith.constant 0.176776692 : f32
    %14 = vector.broadcast %cst_9 : f32 to vector<16x128xf32>
    %15 = arith.mulf %13, %14 : vector<16x128xf32>
    %16 = vector.shape_cast %15 : vector<16x128xf32> to vector<2x8x128xf32>
    %17 = vector.extract_strided_slice %12 {offsets = [0, 128], sizes = [16, 128], strides = [1, 1]} : vector<16x384xf32> to vector<16x128xf32>
    %18 = vector.shape_cast %17 : vector<16x128xf32> to vector<2x8x128xf32>
    %19 = vector.extract_strided_slice %12 {offsets = [0, 256], sizes = [16, 128], strides = [1, 1]} : vector<16x384xf32> to vector<16x128xf32>
    %20 = vector.shape_cast %19 : vector<16x128xf32> to vector<2x8x128xf32>
    %c0_10 = arith.constant 0 : index
    %c0_11 = arith.constant 0 : index
    %c0_12 = arith.constant 0 : index
    %21 = vector.load %arg2[%c0_10, %c0_11, %c0_12] : memref<2x1x8xf32, #tpu.memory_space<vmem>>, vector<2x1x8xf32>
    %22 = vector.extract_strided_slice %16 {offsets = [0, 0, 0], sizes = [2, 8, 32], strides = [1, 1, 1]} : vector<2x8x128xf32> to vector<2x8x32xf32>
    %23 = vector.extract_strided_slice %18 {offsets = [0, 0, 0], sizes = [2, 8, 32], strides = [1, 1, 1]} : vector<2x8x128xf32> to vector<2x8x32xf32>
    %24 = vector.extract_strided_slice %20 {offsets = [0, 0, 0], sizes = [2, 8, 32], strides = [1, 1, 1]} : vector<2x8x128xf32> to vector<2x8x32xf32>
    "tpu.trace_start"() <{level = 10 : i32, message = "bqd,bkd->bqk"}> : () -> ()
    %cst_13 = arith.constant dense<0.000000e+00> : vector<2x8x8xf32>
    %25 = tpu.matmul %22, %23, %cst_13 {dimension_numbers = #tpu.dot_dimension_numbers<[2], [2], [1], [1], [0, 0, 0, 1, 1, 1], [0], [0]>} : vector<2x8x32xf32>, vector<2x8x32xf32>, vector<2x8x8xf32> -> vector<2x8x8xf32>
    "tpu.trace_stop"() : () -> ()
    %26 = vector.broadcast %21 : vector<2x1x8xf32> to vector<2x8x8xf32>
    %27 = arith.addf %25, %26 : vector<2x8x8xf32>
    %cst_14 = arith.constant dense<0xFF800000> : vector<2x8xf32>
    %28 = vector.multi_reduction <maximumf>, %27, %cst_14 [2] : vector<2x8x8xf32> to vector<2x8xf32>
    %29 = vector.shape_cast %28 : vector<2x8xf32> to vector<2x8x1xf32>
    %30 = vector.broadcast %29 : vector<2x8x1xf32> to vector<2x8x8xf32>
    %31 = arith.subf %27, %30 : vector<2x8x8xf32>
    %32 = math.exp %31 : vector<2x8x8xf32>
    %cst_15 = arith.constant dense<0.000000e+00> : vector<2x8xf32>
    %33 = vector.multi_reduction <add>, %32, %cst_15 [2] : vector<2x8x8xf32> to vector<2x8xf32>
    %34 = vector.shape_cast %33 : vector<2x8xf32> to vector<2x8x1xf32>
    %35 = tpu.reciprocal %34 {approx = true} : vector<2x8x1xf32> -> vector<2x8x1xf32>
    %36 = vector.broadcast %35 : vector<2x8x1xf32> to vector<2x8x8xf32>
    %37 = arith.mulf %32, %36 : vector<2x8x8xf32>
    "tpu.trace_start"() <{level = 10 : i32, message = "bqk,bkd->bqd"}> : () -> ()
    %cst_16 = arith.constant dense<0.000000e+00> : vector<2x8x32xf32>
    %38 = tpu.matmul %37, %24, %cst_16 {dimension_numbers = #tpu.dot_dimension_numbers<[2], [1], [1], [2], [0, 0, 0, 1, 1, 2], [0], [0]>} : vector<2x8x8xf32>, vector<2x8x32xf32>, vector<2x8x32xf32> -> vector<2x8x32xf32>
    "tpu.trace_stop"() : () -> ()
    %39 = vector.extract_strided_slice %16 {offsets = [0, 0, 32], sizes = [2, 8, 32], strides = [1, 1, 1]} : vector<2x8x128xf32> to vector<2x8x32xf32>
    %40 = vector.extract_strided_slice %18 {offsets = [0, 0, 32], sizes = [2, 8, 32], strides = [1, 1, 1]} : vector<2x8x128xf32> to vector<2x8x32xf32>
    %41 = vector.extract_strided_slice %20 {offsets = [0, 0, 32], sizes = [2, 8, 32], strides = [1, 1, 1]} : vector<2x8x128xf32> to vector<2x8x32xf32>
    "tpu.trace_start"() <{level = 10 : i32, message = "bqd,bkd->bqk"}> : () -> ()
    %cst_17 = arith.constant dense<0.000000e+00> : vector<2x8x8xf32>
    %42 = tpu.matmul %39, %40, %cst_17 {dimension_numbers = #tpu.dot_dimension_numbers<[2], [2], [1], [1], [0, 0, 0, 1, 1, 1], [0], [0]>} : vector<2x8x32xf32>, vector<2x8x32xf32>, vector<2x8x8xf32> -> vector<2x8x8xf32>
    "tpu.trace_stop"() : () -> ()
    %43 = vector.broadcast %21 : vector<2x1x8xf32> to vector<2x8x8xf32>
    %44 = arith.addf %42, %43 : vector<2x8x8xf32>
    %cst_18 = arith.constant dense<0xFF800000> : vector<2x8xf32>
    %45 = vector.multi_reduction <maximumf>, %44, %cst_18 [2] : vector<2x8x8xf32> to vector<2x8xf32>
    %46 = vector.shape_cast %45 : vector<2x8xf32> to vector<2x8x1xf32>
    %47 = vector.broadcast %46 : vector<2x8x1xf32> to vector<2x8x8xf32>
    %48 = arith.subf %44, %47 : vector<2x8x8xf32>
    %49 = math.exp %48 : vector<2x8x8xf32>
    %cst_19 = arith.constant dense<0.000000e+00> : vector<2x8xf32>
    %50 = vector.multi_reduction <add>, %49, %cst_19 [2] : vector<2x8x8xf32> to vector<2x8xf32>
    %51 = vector.shape_cast %50 : vector<2x8xf32> to vector<2x8x1xf32>
    %52 = tpu.reciprocal %51 {approx = true} : vector<2x8x1xf32> -> vector<2x8x1xf32>
    %53 = vector.broadcast %52 : vector<2x8x1xf32> to vector<2x8x8xf32>
    %54 = arith.mulf %49, %53 : vector<2x8x8xf32>
    "tpu.trace_start"() <{level = 10 : i32, message = "bqk,bkd->bqd"}> : () -> ()
    %cst_20 = arith.constant dense<0.000000e+00> : vector<2x8x32xf32>
    %55 = tpu.matmul %54, %41, %cst_20 {dimension_numbers = #tpu.dot_dimension_numbers<[2], [1], [1], [2], [0, 0, 0, 1, 1, 2], [0], [0]>} : vector<2x8x8xf32>, vector<2x8x32xf32>, vector<2x8x32xf32> -> vector<2x8x32xf32>
    "tpu.trace_stop"() : () -> ()
    %56 = vector.extract_strided_slice %16 {offsets = [0, 0, 64], sizes = [2, 8, 32], strides = [1, 1, 1]} : vector<2x8x128xf32> to vector<2x8x32xf32>
    %57 = vector.extract_strided_slice %18 {offsets = [0, 0, 64], sizes = [2, 8, 32], strides = [1, 1, 1]} : vector<2x8x128xf32> to vector<2x8x32xf32>
    %58 = vector.extract_strided_slice %20 {offsets = [0, 0, 64], sizes = [2, 8, 32], strides = [1, 1, 1]} : vector<2x8x128xf32> to vector<2x8x32xf32>
    "tpu.trace_start"() <{level = 10 : i32, message = "bqd,bkd->bqk"}> : () -> ()
    %cst_21 = arith.constant dense<0.000000e+00> : vector<2x8x8xf32>
    %59 = tpu.matmul %56, %57, %cst_21 {dimension_numbers = #tpu.dot_dimension_numbers<[2], [2], [1], [1], [0, 0, 0, 1, 1, 1], [0], [0]>} : vector<2x8x32xf32>, vector<2x8x32xf32>, vector<2x8x8xf32> -> vector<2x8x8xf32>
    "tpu.trace_stop"() : () -> ()
    %60 = vector.broadcast %21 : vector<2x1x8xf32> to vector<2x8x8xf32>
    %61 = arith.addf %59, %60 : vector<2x8x8xf32>
    %cst_22 = arith.constant dense<0xFF800000> : vector<2x8xf32>
    %62 = vector.multi_reduction <maximumf>, %61, %cst_22 [2] : vector<2x8x8xf32> to vector<2x8xf32>
    %63 = vector.shape_cast %62 : vector<2x8xf32> to vector<2x8x1xf32>
    %64 = vector.broadcast %63 : vector<2x8x1xf32> to vector<2x8x8xf32>
    %65 = arith.subf %61, %64 : vector<2x8x8xf32>
    %66 = math.exp %65 : vector<2x8x8xf32>
    %cst_23 = arith.constant dense<0.000000e+00> : vector<2x8xf32>
    %67 = vector.multi_reduction <add>, %66, %cst_23 [2] : vector<2x8x8xf32> to vector<2x8xf32>
    %68 = vector.shape_cast %67 : vector<2x8xf32> to vector<2x8x1xf32>
    %69 = tpu.reciprocal %68 {approx = true} : vector<2x8x1xf32> -> vector<2x8x1xf32>
    %70 = vector.broadcast %69 : vector<2x8x1xf32> to vector<2x8x8xf32>
    %71 = arith.mulf %66, %70 : vector<2x8x8xf32>
    "tpu.trace_start"() <{level = 10 : i32, message = "bqk,bkd->bqd"}> : () -> ()
    %cst_24 = arith.constant dense<0.000000e+00> : vector<2x8x32xf32>
    %72 = tpu.matmul %71, %58, %cst_24 {dimension_numbers = #tpu.dot_dimension_numbers<[2], [1], [1], [2], [0, 0, 0, 1, 1, 2], [0], [0]>} : vector<2x8x8xf32>, vector<2x8x32xf32>, vector<2x8x32xf32> -> vector<2x8x32xf32>
    "tpu.trace_stop"() : () -> ()
    %73 = vector.extract_strided_slice %16 {offsets = [0, 0, 96], sizes = [2, 8, 32], strides = [1, 1, 1]} : vector<2x8x128xf32> to vector<2x8x32xf32>
    %74 = vector.extract_strided_slice %18 {offsets = [0, 0, 96], sizes = [2, 8, 32], strides = [1, 1, 1]} : vector<2x8x128xf32> to vector<2x8x32xf32>
    %75 = vector.extract_strided_slice %20 {offsets = [0, 0, 96], sizes = [2, 8, 32], strides = [1, 1, 1]} : vector<2x8x128xf32> to vector<2x8x32xf32>
    "tpu.trace_start"() <{level = 10 : i32, message = "bqd,bkd->bqk"}> : () -> ()
    %cst_25 = arith.constant dense<0.000000e+00> : vector<2x8x8xf32>
    %76 = tpu.matmul %73, %74, %cst_25 {dimension_numbers = #tpu.dot_dimension_numbers<[2], [2], [1], [1], [0, 0, 0, 1, 1, 1], [0], [0]>} : vector<2x8x32xf32>, vector<2x8x32xf32>, vector<2x8x8xf32> -> vector<2x8x8xf32>
    "tpu.trace_stop"() : () -> ()
    %77 = vector.broadcast %21 : vector<2x1x8xf32> to vector<2x8x8xf32>
    %78 = arith.addf %76, %77 : vector<2x8x8xf32>
    %cst_26 = arith.constant dense<0xFF800000> : vector<2x8xf32>
    %79 = vector.multi_reduction <maximumf>, %78, %cst_26 [2] : vector<2x8x8xf32> to vector<2x8xf32>
    %80 = vector.shape_cast %79 : vector<2x8xf32> to vector<2x8x1xf32>
    %81 = vector.broadcast %80 : vector<2x8x1xf32> to vector<2x8x8xf32>
    %82 = arith.subf %78, %81 : vector<2x8x8xf32>
    %83 = math.exp %82 : vector<2x8x8xf32>
    %cst_27 = arith.constant dense<0.000000e+00> : vector<2x8xf32>
    %84 = vector.multi_reduction <add>, %83, %cst_27 [2] : vector<2x8x8xf32> to vector<2x8xf32>
    %85 = vector.shape_cast %84 : vector<2x8xf32> to vector<2x8x1xf32>
    %86 = tpu.reciprocal %85 {approx = true} : vector<2x8x1xf32> -> vector<2x8x1xf32>
    %87 = vector.broadcast %86 : vector<2x8x1xf32> to vector<2x8x8xf32>
    %88 = arith.mulf %83, %87 : vector<2x8x8xf32>
    "tpu.trace_start"() <{level = 10 : i32, message = "bqk,bkd->bqd"}> : () -> ()
    %cst_28 = arith.constant dense<0.000000e+00> : vector<2x8x32xf32>
    %89 = tpu.matmul %88, %75, %cst_28 {dimension_numbers = #tpu.dot_dimension_numbers<[2], [1], [1], [2], [0, 0, 0, 1, 1, 2], [0], [0]>} : vector<2x8x8xf32>, vector<2x8x32xf32>, vector<2x8x32xf32> -> vector<2x8x32xf32>
    "tpu.trace_stop"() : () -> ()
    %90 = tpu.concatenate %38, %55, %72, %89 in 2 : vector<2x8x32xf32>, vector<2x8x32xf32>, vector<2x8x32xf32>, vector<2x8x32xf32> -> vector<2x8x128xf32>
    %91 = vector.shape_cast %90 : vector<2x8x128xf32> to vector<16x128xf32>
    %92 = arith.truncf %91 : vector<16x128xf32> to vector<16x128xbf16>
    %c0_29 = arith.constant 0 : index
    %c0_30 = arith.constant 0 : index
    %c0_31 = arith.constant 0 : index
    %93 = vector.load %arg7[%c0_29, %c0_30, %c0_31] : memref<1x128x128xbf16, #tpu.memory_space<vmem>>, vector<1x128x128xbf16>
    %94 = vector.shape_cast %93 : vector<1x128x128xbf16> to vector<128x128xbf16>
    %cst_32 = arith.constant dense<0.000000e+00> : vector<16x128xf32>
    %95 = tpu.matmul %92, %94, %cst_32 {dimension_numbers = #tpu.dot_dimension_numbers<[1], [0], [0], [1], [0, 0, 1, 1], [], []>} : vector<16x128xbf16>, vector<128x128xbf16>, vector<16x128xf32> -> vector<16x128xf32>
    %c0_33 = arith.constant 0 : index
    %c0_34 = arith.constant 0 : index
    %c0_35 = arith.constant 0 : index
    %96 = vector.load %arg8[%c0_33, %c0_34, %c0_35] : memref<1x1x128xf32, #tpu.memory_space<vmem>>, vector<1x1x128xf32>
    %97 = vector.shape_cast %96 : vector<1x1x128xf32> to vector<1x128xf32>
    %98 = vector.broadcast %97 : vector<1x128xf32> to vector<16x128xf32>
    %99 = arith.addf %95, %98 : vector<16x128xf32>
    %100 = arith.addf %4, %99 : vector<16x128xf32>
    %c0_36 = arith.constant 0 : index
    %c0_37 = arith.constant 0 : index
    %c0_38 = arith.constant 0 : index
    %101 = vector.load %arg9[%c0_36, %c0_37, %c0_38] : memref<1x1x128xf32, #tpu.memory_space<vmem>>, vector<1x1x128xf32>
    %102 = vector.shape_cast %101 : vector<1x1x128xf32> to vector<1x128xf32>
    %c0_39 = arith.constant 0 : index
    %c0_40 = arith.constant 0 : index
    %c0_41 = arith.constant 0 : index
    %103 = vector.load %arg10[%c0_39, %c0_40, %c0_41] : memref<1x1x128xf32, #tpu.memory_space<vmem>>, vector<1x1x128xf32>
    %104 = vector.shape_cast %103 : vector<1x1x128xf32> to vector<1x128xf32>
    %cst_42 = arith.constant dense<0.000000e+00> : vector<16xf32>
    %105 = vector.multi_reduction <add>, %100, %cst_42 [1] : vector<16x128xf32> to vector<16xf32>
    %106 = vector.shape_cast %105 : vector<16xf32> to vector<16x1xf32>
    %cst_43 = arith.constant 1.280000e+02 : f32
    %107 = vector.broadcast %cst_43 : f32 to vector<16x1xf32>
    %108 = arith.divf %106, %107 : vector<16x1xf32>
    %109 = vector.broadcast %108 : vector<16x1xf32> to vector<16x128xf32>
    %110 = arith.subf %100, %109 : vector<16x128xf32>
    %111 = arith.mulf %110, %110 : vector<16x128xf32>
    %cst_44 = arith.constant dense<0.000000e+00> : vector<16xf32>
    %112 = vector.multi_reduction <add>, %111, %cst_44 [1] : vector<16x128xf32> to vector<16xf32>
    %113 = vector.shape_cast %112 : vector<16xf32> to vector<16x1xf32>
    %cst_45 = arith.constant 1.280000e+02 : f32
    %114 = vector.broadcast %cst_45 : f32 to vector<16x1xf32>
    %115 = arith.divf %113, %114 : vector<16x1xf32>
    %116 = vector.broadcast %108 : vector<16x1xf32> to vector<16x128xf32>
    %117 = arith.subf %100, %116 : vector<16x128xf32>
    %cst_46 = arith.constant 9.99999996E-13 : f32
    %118 = vector.broadcast %cst_46 : f32 to vector<16x1xf32>
    %119 = arith.addf %115, %118 : vector<16x1xf32>
    %120 = math.rsqrt %119 : vector<16x1xf32>
    %121 = vector.broadcast %120 : vector<16x1xf32> to vector<16x128xf32>
    %122 = arith.mulf %117, %121 : vector<16x128xf32>
    %123 = vector.broadcast %102 : vector<1x128xf32> to vector<16x128xf32>
    %124 = arith.mulf %122, %123 : vector<16x128xf32>
    %125 = vector.broadcast %104 : vector<1x128xf32> to vector<16x128xf32>
    %126 = arith.addf %124, %125 : vector<16x128xf32>
    %127 = arith.truncf %126 : vector<16x128xf32> to vector<16x128xbf16>
    %c0_47 = arith.constant 0 : index
    %c0_48 = arith.constant 0 : index
    %c0_49 = arith.constant 0 : index
    %128 = vector.load %arg11[%c0_47, %c0_48, %c0_49] : memref<1x128x512xbf16, #tpu.memory_space<vmem>>, vector<1x128x512xbf16>
    %129 = vector.shape_cast %128 : vector<1x128x512xbf16> to vector<128x512xbf16>
    %cst_50 = arith.constant dense<0.000000e+00> : vector<16x512xf32>
    %130 = tpu.matmul %127, %129, %cst_50 {dimension_numbers = #tpu.dot_dimension_numbers<[1], [0], [0], [1], [0, 0, 1, 1], [], []>} : vector<16x128xbf16>, vector<128x512xbf16>, vector<16x512xf32> -> vector<16x512xf32>
    %c0_51 = arith.constant 0 : index
    %c0_52 = arith.constant 0 : index
    %c0_53 = arith.constant 0 : index
    %131 = vector.load %arg12[%c0_51, %c0_52, %c0_53] : memref<1x1x512xf32, #tpu.memory_space<vmem>>, vector<1x1x512xf32>
    %132 = vector.shape_cast %131 : vector<1x1x512xf32> to vector<1x512xf32>
    %133 = vector.broadcast %132 : vector<1x512xf32> to vector<16x512xf32>
    %134 = arith.addf %130, %133 : vector<16x512xf32>
    %135 = arith.mulf %134, %134 : vector<16x512xf32>
    %136 = arith.mulf %134, %135 : vector<16x512xf32>
    %cst_54 = arith.constant 4.471500e-02 : f32
    %137 = vector.broadcast %cst_54 : f32 to vector<16x512xf32>
    %138 = arith.mulf %137, %136 : vector<16x512xf32>
    %139 = arith.addf %134, %138 : vector<16x512xf32>
    %cst_55 = arith.constant 0.797884583 : f32
    %140 = vector.broadcast %cst_55 : f32 to vector<16x512xf32>
    %141 = arith.mulf %140, %139 : vector<16x512xf32>
    %142 = math.tanh %141 : vector<16x512xf32>
    %cst_56 = arith.constant 1.000000e+00 : f32
    %143 = vector.broadcast %cst_56 : f32 to vector<16x512xf32>
    %144 = arith.addf %143, %142 : vector<16x512xf32>
    %cst_57 = arith.constant 5.000000e-01 : f32
    %145 = vector.broadcast %cst_57 : f32 to vector<16x512xf32>
    %146 = arith.mulf %145, %144 : vector<16x512xf32>
    %147 = arith.mulf %134, %146 : vector<16x512xf32>
    %148 = arith.truncf %147 : vector<16x512xf32> to vector<16x512xbf16>
    %c0_58 = arith.constant 0 : index
    %c0_59 = arith.constant 0 : index
    %c0_60 = arith.constant 0 : index
    %149 = vector.load %arg13[%c0_58, %c0_59, %c0_60] : memref<1x512x128xbf16, #tpu.memory_space<vmem>>, vector<1x512x128xbf16>
    %150 = vector.shape_cast %149 : vector<1x512x128xbf16> to vector<512x128xbf16>
    %cst_61 = arith.constant dense<0.000000e+00> : vector<16x128xf32>
    %151 = tpu.matmul %148, %150, %cst_61 {dimension_numbers = #tpu.dot_dimension_numbers<[1], [0], [0], [1], [0, 0, 1, 1], [], []>} : vector<16x512xbf16>, vector<512x128xbf16>, vector<16x128xf32> -> vector<16x128xf32>
    %c0_62 = arith.constant 0 : index
    %c0_63 = arith.constant 0 : index
    %c0_64 = arith.constant 0 : index
    %152 = vector.load %arg14[%c0_62, %c0_63, %c0_64] : memref<1x1x128xf32, #tpu.memory_space<vmem>>, vector<1x1x128xf32>
    %153 = vector.shape_cast %152 : vector<1x1x128xf32> to vector<1x128xf32>
    %154 = vector.broadcast %153 : vector<1x128xf32> to vector<16x128xf32>
    %155 = arith.addf %151, %154 : vector<16x128xf32>
    %156 = arith.addf %126, %155 : vector<16x128xf32>
    %c0_65 = arith.constant 0 : index
    %c0_66 = arith.constant 0 : index
    %c0_67 = arith.constant 0 : index
    %157 = vector.load %arg15[%c0_65, %c0_66, %c0_67] : memref<1x1x128xf32, #tpu.memory_space<vmem>>, vector<1x1x128xf32>
    %158 = vector.shape_cast %157 : vector<1x1x128xf32> to vector<1x128xf32>
    %c0_68 = arith.constant 0 : index
    %c0_69 = arith.constant 0 : index
    %c0_70 = arith.constant 0 : index
    %159 = vector.load %arg16[%c0_68, %c0_69, %c0_70] : memref<1x1x128xf32, #tpu.memory_space<vmem>>, vector<1x1x128xf32>
    %160 = vector.shape_cast %159 : vector<1x1x128xf32> to vector<1x128xf32>
    %cst_71 = arith.constant dense<0.000000e+00> : vector<16xf32>
    %161 = vector.multi_reduction <add>, %156, %cst_71 [1] : vector<16x128xf32> to vector<16xf32>
    %162 = vector.shape_cast %161 : vector<16xf32> to vector<16x1xf32>
    %cst_72 = arith.constant 1.280000e+02 : f32
    %163 = vector.broadcast %cst_72 : f32 to vector<16x1xf32>
    %164 = arith.divf %162, %163 : vector<16x1xf32>
    %165 = vector.broadcast %164 : vector<16x1xf32> to vector<16x128xf32>
    %166 = arith.subf %156, %165 : vector<16x128xf32>
    %167 = arith.mulf %166, %166 : vector<16x128xf32>
    %cst_73 = arith.constant dense<0.000000e+00> : vector<16xf32>
    %168 = vector.multi_reduction <add>, %167, %cst_73 [1] : vector<16x128xf32> to vector<16xf32>
    %169 = vector.shape_cast %168 : vector<16xf32> to vector<16x1xf32>
    %cst_74 = arith.constant 1.280000e+02 : f32
    %170 = vector.broadcast %cst_74 : f32 to vector<16x1xf32>
    %171 = arith.divf %169, %170 : vector<16x1xf32>
    %172 = vector.broadcast %164 : vector<16x1xf32> to vector<16x128xf32>
    %173 = arith.subf %156, %172 : vector<16x128xf32>
    %cst_75 = arith.constant 9.99999996E-13 : f32
    %174 = vector.broadcast %cst_75 : f32 to vector<16x1xf32>
    %175 = arith.addf %171, %174 : vector<16x1xf32>
    %176 = math.rsqrt %175 : vector<16x1xf32>
    %177 = vector.broadcast %176 : vector<16x1xf32> to vector<16x128xf32>
    %178 = arith.mulf %173, %177 : vector<16x128xf32>
    %179 = vector.broadcast %158 : vector<1x128xf32> to vector<16x128xf32>
    %180 = arith.mulf %178, %179 : vector<16x128xf32>
    %181 = vector.broadcast %160 : vector<1x128xf32> to vector<16x128xf32>
    %182 = arith.addf %180, %181 : vector<16x128xf32>
    %183 = vector.shape_cast %182 : vector<16x128xf32> to vector<2x8x128xf32>
    %c0_76 = arith.constant 0 : index
    %c0_77 = arith.constant 0 : index
    %c0_78 = arith.constant 0 : index
    %184 = vector.load %arg20[%c0_76, %c0_77, %c0_78] : memref<2x8x128xf32, #tpu.memory_space<vmem>>, vector<2x8x128xf32>
    tpu.vector_store %arg20[%c0_76, %c0_77, %c0_78], %183 {strides = array<i32>} : memref<2x8x128xf32, #tpu.memory_space<vmem>>, vector<2x8x128xf32>,
    %c3_i32 = arith.constant 3 : i32
    %185 = arith.cmpi eq, %arg0, %c3_i32 : i32
    %186 = arith.extui %185 : i1 to i32
    %c0_i32_79 = arith.constant 0 : i32
    %187 = arith.cmpi ne, %186, %c0_i32_79 : i32
    scf.if %187 {
      %188 = vector.shape_cast %182 : vector<16x128xf32> to vector<2x8x128xf32>
      %189 = vector.extract_strided_slice %188 {offsets = [0, 0, 0], sizes = [2, 1, 128], strides = [1, 1, 1]} : vector<2x8x128xf32> to vector<2x1x128xf32>
      %190 = vector.shape_cast %189 : vector<2x1x128xf32> to vector<2x128xf32>
      %c0_80 = arith.constant 0 : index
      %c0_81 = arith.constant 0 : index
      %191 = vector.load %arg17[%c0_80, %c0_81] : memref<128x128xf32, #tpu.memory_space<vmem>>, vector<128x128xf32>
      %cst_82 = arith.constant dense<0.000000e+00> : vector<2x128xf32>
      %192 = tpu.matmul %190, %191, %cst_82 {dimension_numbers = #tpu.dot_dimension_numbers<[1], [0], [0], [1], [0, 0, 1, 1], [], []>} : vector<2x128xf32>, vector<128x128xf32>, vector<2x128xf32> -> vector<2x128xf32>
      %c0_83 = arith.constant 0 : index
      %c0_84 = arith.constant 0 : index
      %193 = vector.load %arg18[%c0_83, %c0_84] : memref<1x128xf32, #tpu.memory_space<vmem>>, vector<1x128xf32>
      %194 = vector.broadcast %193 : vector<1x128xf32> to vector<2x128xf32>
      %195 = arith.addf %192, %194 : vector<2x128xf32>
      %c0_85 = arith.constant 0 : index
      %c0_86 = arith.constant 0 : index
      %196 = vector.load %arg19[%c0_85, %c0_86] : memref<2x128xf32, #tpu.memory_space<vmem>>, vector<2x128xf32>
      tpu.vector_store %arg19[%c0_85, %c0_86], %195 {strides = array<i32>} : memref<2x128xf32, #tpu.memory_space<vmem>>, vector<2x128xf32>,
    } else {
    }
    return
  }
  func.func @transform_0(%arg0: i32) -> (i32, i32, i32) {
    %c0_i32 = arith.constant 0 : i32
    %c0_i32_0 = arith.constant 0 : i32
    %c0_i32_1 = arith.constant 0 : i32
    %c0_i32_2 = arith.constant 0 : i32
    return %c0_i32, %c0_i32_0, %c0_i32_1 : i32, i32, i32
  }
  func.func @transform_1(%arg0: i32) -> (i32, i32, i32) {
    %c0_i32 = arith.constant 0 : i32
    %c0_i32_0 = arith.constant 0 : i32
    %c0_i32_1 = arith.constant 0 : i32
    %c0_i32_2 = arith.constant 0 : i32
    return %c0_i32, %c0_i32_0, %c0_i32_1 : i32, i32, i32
  }
  func.func @transform_2(%arg0: i32) -> (i32, i32) {
    %c0_i32 = arith.constant 0 : i32
    %c0_i32_0 = arith.constant 0 : i32
    %c0_i32_1 = arith.constant 0 : i32
    return %c0_i32, %c0_i32_0 : i32, i32
  }
  func.func @transform_3(%arg0: i32) -> (i32, i32) {
    %c0_i32 = arith.constant 0 : i32
    %c0_i32_0 = arith.constant 0 : i32
    %c0_i32_1 = arith.constant 0 : i32
    return %c0_i32, %c0_i32_0 : i32, i32
  }
  func.func @transform_4(%arg0: i32) -> (i32, i32, i32) {
    %c0_i32 = arith.constant 0 : i32
    %c0_i32_0 = arith.constant 0 : i32
    %c0_i32_1 = arith.constant 0 : i32
    return %arg0, %c0_i32, %c0_i32_0 : i32, i32, i32
  }
  func.func @transform_5(%arg0: i32) -> (i32, i32, i32) {
    %c0_i32 = arith.constant 0 : i32
    %c0_i32_0 = arith.constant 0 : i32
    %c0_i32_1 = arith.constant 0 : i32
    return %arg0, %c0_i32, %c0_i32_0 : i32, i32, i32
  }
  func.func @transform_6(%arg0: i32) -> (i32, i32, i32) {
    %c0_i32 = arith.constant 0 : i32
    %c0_i32_0 = arith.constant 0 : i32
    %c0_i32_1 = arith.constant 0 : i32
    return %arg0, %c0_i32, %c0_i32_0 : i32, i32, i32
  }
  func.func @transform_7(%arg0: i32) -> (i32, i32, i32) {
    %c0_i32 = arith.constant 0 : i32
    %c0_i32_0 = arith.constant 0 : i32
    %c0_i32_1 = arith.constant 0 : i32
    return %arg0, %c0_i32, %c0_i32_0 : i32, i32, i32
  }
  func.func @transform_8(%arg0: i32) -> (i32, i32, i32) {
    %c0_i32 = arith.constant 0 : i32
    %c0_i32_0 = arith.constant 0 : i32
    %c0_i32_1 = arith.constant 0 : i32
    return %arg0, %c0_i32, %c0_i32_0 : i32, i32, i32
  }
  func.func @transform_9(%arg0: i32) -> (i32, i32, i32) {
    %c0_i32 = arith.constant 0 : i32
    %c0_i32_0 = arith.constant 0 : i32
    %c0_i32_1 = arith.constant 0 : i32
    return %arg0, %c0_i32, %c0_i32_0 : i32, i32, i32
  }
  func.func @transform_10(%arg0: i32) -> (i32, i32, i32) {
    %c0_i32 = arith.constant 0 : i32
    %c0_i32_0 = arith.constant 0 : i32
    %c0_i32_1 = arith.constant 0 : i32
    return %arg0, %c0_i32, %c0_i32_0 : i32, i32, i32
  }
  func.func @transform_11(%arg0: i32) -> (i32, i32, i32) {
    %c0_i32 = arith.constant 0 : i32
    %c0_i32_0 = arith.constant 0 : i32
    %c0_i32_1 = arith.constant 0 : i32
    return %arg0, %c0_i32, %c0_i32_0 : i32, i32, i32
  }
  func.func @transform_12(%arg0: i32) -> (i32, i32, i32) {
    %c0_i32 = arith.constant 0 : i32
    %c0_i32_0 = arith.constant 0 : i32
    %c0_i32_1 = arith.constant 0 : i32
    return %arg0, %c0_i32, %c0_i32_0 : i32, i32, i32
  }
  func.func @transform_13(%arg0: i32) -> (i32, i32, i32) {
    %c0_i32 = arith.constant 0 : i32
    %c0_i32_0 = arith.constant 0 : i32
    %c0_i32_1 = arith.constant 0 : i32
    return %arg0, %c0_i32, %c0_i32_0 : i32, i32, i32
  }
  func.func @transform_14(%arg0: i32) -> (i32, i32, i32) {
    %c0_i32 = arith.constant 0 : i32
    %c0_i32_0 = arith.constant 0 : i32
    %c0_i32_1 = arith.constant 0 : i32
    return %arg0, %c0_i32, %c0_i32_0 : i32, i32, i32
  }
  func.func @transform_15(%arg0: i32) -> (i32, i32, i32) {
    %c0_i32 = arith.constant 0 : i32
    %c0_i32_0 = arith.constant 0 : i32
    %c0_i32_1 = arith.constant 0 : i32
    return %arg0, %c0_i32, %c0_i32_0 : i32, i32, i32
  }
  func.func @transform_16(%arg0: i32) -> (i32, i32) {
    %c0_i32 = arith.constant 0 : i32
    %c0_i32_0 = arith.constant 0 : i32
    %c0_i32_1 = arith.constant 0 : i32
    return %c0_i32, %c0_i32_0 : i32, i32
  }
  func.func @transform_17(%arg0: i32) -> (i32, i32) {
    %c0_i32 = arith.constant 0 : i32
    %c0_i32_0 = arith.constant 0 : i32
    %c0_i32_1 = arith.constant 0 : i32
    return %c0_i32, %c0_i32_0 : i32, i32
  }
  func.func @transform_18(%arg0: i32) -> (i32, i32) {
    %c0_i32 = arith.constant 0 : i32
    %c0_i32_0 = arith.constant 0 : i32
    %c0_i32_1 = arith.constant 0 : i32
    return %c0_i32, %c0_i32_0 : i32, i32
  }
}

</mosaic_0001>

<llo_original>
// kernel: forward.1
$region0: #{forward.1}
  #allocation0 [shape = 'u32[]', space=smem, size = 0x4, offset = 0x4, fixed_abs, tag = 'smem constant byte address 0x4 - core index']
  #allocation1 [shape = 'u32[144,128]{1,0:T(1,128)}', space=vmem, size = 0x12000, scoped, tag = 'internal scratch']
  #allocation2 [shape = 'f32[2,8,128]{2,1,0:T(8,128)}', space=vmem, size = 0x2000, scoped, tag = 'scratch operand']
  %s0 = inlined_call_operand.vmem [shape: f32[2,8,128], index: 0, kind: input, shape index: {}]
  %s1 = inlined_call_operand.vmem [shape: f32[2,1,8], index: 1, kind: input, shape index: {}]
  %s2 = inlined_call_operand.vmem [shape: f32[1,128], index: 2, kind: input, shape index: {}]
  %s3 = inlined_call_operand.vmem [shape: f32[1,128], index: 3, kind: input, shape index: {}]
  %s4 = inlined_call_operand.vmem [shape: bf16[4,128,384], index: 4, kind: input, shape index: {}]
  %s5 = inlined_call_operand.vmem [shape: f32[4,1,384], index: 5, kind: input, shape index: {}]
  %s6 = inlined_call_operand.hbm [shape: bf16[4,128,128], index: 6, kind: input, shape index: {}]
  %s7 = inlined_call_operand.vmem [shape: f32[4,1,128], index: 7, kind: input, shape index: {}]
  %s8 = inlined_call_operand.vmem [shape: f32[4,1,128], index: 8, kind: input, shape index: {}]
  %s9 = inlined_call_operand.vmem [shape: f32[4,1,128], index: 9, kind: input, shape index: {}]
  %s10 = inlined_call_operand.hbm [shape: bf16[4,128,512], index: 10, kind: input, shape index: {}]
  %s11 = inlined_call_operand.vmem [shape: f32[4,1,512], index: 11, kind: input, shape index: {}]
  %s12 = inlined_call_operand.hbm [shape: bf16[4,512,128], index: 12, kind: input, shape index: {}]
  %s13 = inlined_call_operand.vmem [shape: f32[4,1,128], index: 13, kind: input, shape index: {}]
  %s14 = inlined_call_operand.vmem [shape: f32[4,1,128], index: 14, kind: input, shape index: {}]
  %s15 = inlined_call_operand.vmem [shape: f32[4,1,128], index: 15, kind: input, shape index: {}]
  %s16 = inlined_call_operand.vmem [shape: f32[128,128], index: 16, kind: input, shape index: {}]
  %s17 = inlined_call_operand.vmem [shape: f32[1,128], index: 17, kind: input, shape index: {}]
  %s18 = inlined_call_operand.hbm [shape: f32[2,128], index: 18, kind: output, shape index: {}]
  %s19 = sld [smem:[#allocation0]]
  $region125: #{forward.1} parent=0
    _
  %s21 = ssub.s32 1, %s19
  %s22 = scalar_select 0, %s21, %s19
  $region1: #{forward.1} parent=0
    #allocation3 [shape = 'u8[65536]{0}', space=vmem, size = 0x10000, scoped, tag = 'input window, operand 6']
    #allocation4 [shape = 's32[2]{0}', space=sflag, size = 0x8, scoped, tag = 'scoped memory for forward.1']
    #allocation5 [shape = 's32[2]{0}', space=sflag, size = 0x8, scoped, tag = 'scoped memory for forward.1']
    #allocation6 [shape = 'u8[262144]{0}', space=vmem, size = 0x40000, scoped, tag = 'input window, operand 10']
    #allocation7 [shape = 's32[2]{0}', space=sflag, size = 0x8, scoped, tag = 'scoped memory for forward.1']
    #allocation8 [shape = 'u8[262144]{0}', space=vmem, size = 0x40000, scoped, tag = 'input window, operand 12']
    #allocation9 [shape = 'u8[1024]{0}', space=vmem, size = 0x400, scoped, tag = 'output window, operand 0, single buffered']
    %23 = vsyncpa [#allocation4], 0
    %s24 = scalar_lea.sflag [#allocation4], 1
    %25 = vsyncpa %s24, 0
    %26 = vsyncpa [#allocation7], 0
    %s27 = scalar_lea.sflag [#allocation7], 1
    %28 = vsyncpa %s27, 0
    %29 = vsyncpa [#allocation5], 0
    loop: start=0, step=1, limit=6
    $region2: #{forward.1} parent=1 // loop_pre_header
      _
    $region3: #{forward.1} parent=1 // loop_header
      %s31 = sphi 0, %s35
      %p32 = scmp.ge.s32.totalorder %s31, 6
      %s39 = sphi 0, %s39
      %s41 = sphi 0, %s39
      %s42 = sphi 0, %s41
      %s56 = sphi 0, %s42
      %s60 = sphi 0, %s60
      %s62 = sphi 0, %s60
      %s63 = sphi 0, %s62
      %s77 = sphi 0, %s63
      %s81 = sphi 0, %s81
      %s83 = sphi 0, %s81
      %s84 = sphi 0, %s83
      %s98 = sphi 0, %s84
      %s102 = sphi 0, %s102
      %s104 = sphi 0, %s102
      %s105 = sphi 0, %s104
      %s119 = sphi 0, %s105
      %s125 = sphi 0, %s127
      %s128 = sphi 0, %s125
      %s129 = sphi 0, %s128
      %s145 = sphi 0, %s129
      %s151 = sphi 0, %s153
      %s154 = sphi 0, %s151
      %s155 = sphi 0, %s154
      %s171 = sphi 0, %s155
      %s177 = sphi 0, %s179
      %s180 = sphi 0, %s177
      %s181 = sphi 0, %s180
      %s197 = sphi 0, %s181
      %s203 = sphi 0, %s205
      %s206 = sphi 0, %s203
      %s207 = sphi 0, %s206
      %s223 = sphi 0, %s207
      %s229 = sphi 0, %s231
      %s232 = sphi 0, %s229
      %s233 = sphi 0, %s232
      %s249 = sphi 0, %s233
      %s255 = sphi 0, %s257
      %s258 = sphi 0, %s255
      %s259 = sphi 0, %s258
      %s275 = sphi 0, %s259
      %s281 = sphi 0, %s283
      %s284 = sphi 0, %s281
      %s285 = sphi 0, %s284
      %s301 = sphi 0, %s285
      %s307 = sphi 0, %s309
      %s310 = sphi 0, %s307
      %s311 = sphi 0, %s310
      %s327 = sphi 0, %s311
      %s333 = sphi 0, %s335
      %s336 = sphi 0, %s333
      %s337 = sphi 0, %s336
      %s353 = sphi 0, %s337
      %s359 = sphi 0, %s361
      %s362 = sphi 0, %s359
      %s363 = sphi 0, %s362
      %s379 = sphi 0, %s363
      %s385 = sphi 0, %s387
      %s388 = sphi 0, %s385
      %s389 = sphi 0, %s388
      %s405 = sphi 0, %s389
      %s411 = sphi 0, %s413
      %s414 = sphi 0, %s411
      %s415 = sphi 0, %s414
      %s431 = sphi 0, %s415
      %s435 = sphi 0, %s435
      %s437 = sphi 0, %s435
      %s438 = sphi 0, %s437
      %s452 = sphi 0, %s438
      %s456 = sphi 0, %s456
      %s458 = sphi 0, %s456
      %s459 = sphi 0, %s458
      %s473 = sphi 0, %s459
      %s477 = sphi 0, %s477
      %s479 = sphi 0, %s477
      %s480 = sphi 0, %s479
      %s494 = sphi 0, %s480
    $region4: #{forward.1} parent=1 // loop_header_branch
      %34 = sbr.rel (%p32) target = $region8
    $region5: #{forward.1} parent=1 // loop_body
      %s36 = ssub.s32 %s31, 1
      %s37 = ssub.s32 %s31, 2
      %s38 = sadd.s32 %s31, 1
      %s40 = sadd.s32 %s39, 1
      %p43 = scmp.eq.s32.totalorder %s31, 3
      %p44 = scmp.ne.s32.totalorder %s39, %s41
      %p45 = scmp.eq.s32.totalorder %s31, 0
      %p46 = por %p44, %p45
      %p47 = scmp.ne.s32.totalorder %s39, %s41
      %p48 = scmp.eq.s32.totalorder %s36, 3
      %p49 = por %p47, %p48
      %p50 = scmp.ne.s32.totalorder %s41, %s42
      %p51 = scmp.eq.s32.totalorder %s36, 0
      %p52 = por %p50, %p51
      %p53 = scmp.ne.s32.totalorder %s41, %s42
      %p54 = scmp.eq.s32.totalorder %s37, 3
      %p55 = por %p53, %p54
      %p57 = scmp.ne.s32.totalorder %s42, %s56
      %p58 = scmp.eq.s32.totalorder %s37, 0
      %p59 = por %p57, %p58
      %s61 = sadd.s32 %s60, 1
      %p64 = scmp.eq.s32.totalorder %s31, 3
      %p65 = scmp.ne.s32.totalorder %s60, %s62
      %p66 = scmp.eq.s32.totalorder %s31, 0
      %p67 = por %p65, %p66
      %p68 = scmp.ne.s32.totalorder %s60, %s62
      %p69 = scmp.eq.s32.totalorder %s36, 3
      %p70 = por %p68, %p69
      %p71 = scmp.ne.s32.totalorder %s62, %s63
      %p72 = scmp.eq.s32.totalorder %s36, 0
      %p73 = por %p71, %p72
      %p74 = scmp.ne.s32.totalorder %s62, %s63
      %p75 = scmp.eq.s32.totalorder %s37, 3
      %p76 = por %p74, %p75
      %p78 = scmp.ne.s32.totalorder %s63, %s77
      %p79 = scmp.eq.s32.totalorder %s37, 0
      %p80 = por %p78, %p79
      %s82 = sadd.s32 %s81, 1
      %p85 = scmp.eq.s32.totalorder %s31, 3
      %p86 = scmp.ne.s32.totalorder %s81, %s83
      %p87 = scmp.eq.s32.totalorder %s31, 0
      %p88 = por %p86, %p87
      %p89 = scmp.ne.s32.totalorder %s81, %s83
      %p90 = scmp.eq.s32.totalorder %s36, 3
      %p91 = por %p89, %p90
      %p92 = scmp.ne.s32.totalorder %s83, %s84
      %p93 = scmp.eq.s32.totalorder %s36, 0
      %p94 = por %p92, %p93
      %p95 = scmp.ne.s32.totalorder %s83, %s84
      %p96 = scmp.eq.s32.totalorder %s37, 3
      %p97 = por %p95, %p96
      %p99 = scmp.ne.s32.totalorder %s84, %s98
      %p100 = scmp.eq.s32.totalorder %s37, 0
      %p101 = por %p99, %p100
      %s103 = sadd.s32 %s102, 1
      %p106 = scmp.eq.s32.totalorder %s31, 3
      %p107 = scmp.ne.s32.totalorder %s102, %s104
      %p108 = scmp.eq.s32.totalorder %s31, 0
      %p109 = por %p107, %p108
      %p110 = scmp.ne.s32.totalorder %s102, %s104
      %p111 = scmp.eq.s32.totalorder %s36, 3
      %p112 = por %p110, %p111
      %p113 = scmp.ne.s32.totalorder %s104, %s105
      %p114 = scmp.eq.s32.totalorder %s36, 0
      %p115 = por %p113, %p114
      %p116 = scmp.ne.s32.totalorder %s104, %s105
      %p117 = scmp.eq.s32.totalorder %s37, 3
      %p118 = por %p116, %p117
      %p120 = scmp.ne.s32.totalorder %s105, %s119
      %p121 = scmp.eq.s32.totalorder %s37, 0
      %p122 = por %p120, %p121
      %s123 = ssub.s32 %s31, %s38
      %p124 = scmp.eq.s32.totalorder %s123, 0
      %s126 = sadd.s32 %s125, 1
      %s127 = scalar_select %p124, %s125, %s126
      %p130 = pneg %p124
      %p131 = scmp.eq.s32.totalorder %s31, 3
      %p132 = por %p130, %p131
      %p133 = scmp.ne.s32.totalorder %s125, %s128
      %p134 = scmp.eq.s32.totalorder %s31, 0
      %p135 = por %p133, %p134
      %p136 = scmp.ne.s32.totalorder %s125, %s128
      %p137 = scmp.eq.s32.totalorder %s36, 3
      %p138 = por %p136, %p137
      %p139 = scmp.ne.s32.totalorder %s128, %s129
      %p140 = scmp.eq.s32.totalorder %s36, 0
      %p141 = por %p139, %p140
      %p142 = scmp.ne.s32.totalorder %s128, %s129
      %p143 = scmp.eq.s32.totalorder %s37, 3
      %p144 = por %p142, %p143
      %p146 = scmp.ne.s32.totalorder %s129, %s145
      %p147 = scmp.eq.s32.totalorder %s37, 0
      %p148 = por %p146, %p147
      %s149 = ssub.s32 %s31, %s38
      %p150 = scmp.eq.s32.totalorder %s149, 0
      %s152 = sadd.s32 %s151, 1
      %s153 = scalar_select %p150, %s151, %s152
      %p156 = pneg %p150
      %p157 = scmp.eq.s32.totalorder %s31, 3
      %p158 = por %p156, %p157
      %p159 = scmp.ne.s32.totalorder %s151, %s154
      %p160 = scmp.eq.s32.totalorder %s31, 0
      %p161 = por %p159, %p160
      %p162 = scmp.ne.s32.totalorder %s151, %s154
      %p163 = scmp.eq.s32.totalorder %s36, 3
      %p164 = por %p162, %p163
      %p165 = scmp.ne.s32.totalorder %s154, %s155
      %p166 = scmp.eq.s32.totalorder %s36, 0
      %p167 = por %p165, %p166
      %p168 = scmp.ne.s32.totalorder %s154, %s155
      %p169 = scmp.eq.s32.totalorder %s37, 3
      %p170 = por %p168, %p169
      %p172 = scmp.ne.s32.totalorder %s155, %s171
      %p173 = scmp.eq.s32.totalorder %s37, 0
      %p174 = por %p172, %p173
      %s175 = ssub.s32 %s31, %s38
      %p176 = scmp.eq.s32.totalorder %s175, 0
      %s178 = sadd.s32 %s177, 1
      %s179 = scalar_select %p176, %s177, %s178
      %p182 = pneg %p176
      %p183 = scmp.eq.s32.totalorder %s31, 3
      %p184 = por %p182, %p183
      %p185 = scmp.ne.s32.totalorder %s177, %s180
      %p186 = scmp.eq.s32.totalorder %s31, 0
      %p187 = por %p185, %p186
      %p188 = scmp.ne.s32.totalorder %s177, %s180
      %p189 = scmp.eq.s32.totalorder %s36, 3
      %p190 = por %p188, %p189
      %p191 = scmp.ne.s32.totalorder %s180, %s181
      %p192 = scmp.eq.s32.totalorder %s36, 0
      %p193 = por %p191, %p192
      %p194 = scmp.ne.s32.totalorder %s180, %s181
      %p195 = scmp.eq.s32.totalorder %s37, 3
      %p196 = por %p194, %p195
      %p198 = scmp.ne.s32.totalorder %s181, %s197
      %p199 = scmp.eq.s32.totalorder %s37, 0
      %p200 = por %p198, %p199
      %s201 = ssub.s32 %s31, %s38
      %p202 = scmp.eq.s32.totalorder %s201, 0
      %s204 = sadd.s32 %s203, 1
      %s205 = scalar_select %p202, %s203, %s204
      %p208 = pneg %p202
      %p209 = scmp.eq.s32.totalorder %s31, 3
      %p210 = por %p208, %p209
      %p211 = scmp.ne.s32.totalorder %s203, %s206
      %p212 = scmp.eq.s32.totalorder %s31, 0
      %p213 = por %p211, %p212
      %p214 = scmp.ne.s32.totalorder %s203, %s206
      %p215 = scmp.eq.s32.totalorder %s36, 3
      %p216 = por %p214, %p215
      %p217 = scmp.ne.s32.totalorder %s206, %s207
      %p218 = scmp.eq.s32.totalorder %s36, 0
      %p219 = por %p217, %p218
      %p220 = scmp.ne.s32.totalorder %s206, %s207
      %p221 = scmp.eq.s32.totalorder %s37, 3
      %p222 = por %p220, %p221
      %p224 = scmp.ne.s32.totalorder %s207, %s223
      %p225 = scmp.eq.s32.totalorder %s37, 0
      %p226 = por %p224, %p225
      %s227 = ssub.s32 %s31, %s38
      %p228 = scmp.eq.s32.totalorder %s227, 0
      %s230 = sadd.s32 %s229, 1
      %s231 = scalar_select %p228, %s229, %s230
      %p234 = pneg %p228
      %p235 = scmp.eq.s32.totalorder %s31, 3
      %p236 = por %p234, %p235
      %p237 = scmp.ne.s32.totalorder %s229, %s232
      %p238 = scmp.eq.s32.totalorder %s31, 0
      %p239 = por %p237, %p238
      %p240 = scmp.ne.s32.totalorder %s229, %s232
      %p241 = scmp.eq.s32.totalorder %s36, 3
      %p242 = por %p240, %p241
      %p243 = scmp.ne.s32.totalorder %s232, %s233
      %p244 = scmp.eq.s32.totalorder %s36, 0
      %p245 = por %p243, %p244
      %p246 = scmp.ne.s32.totalorder %s232, %s233
      %p247 = scmp.eq.s32.totalorder %s37, 3
      %p248 = por %p246, %p247
      %p250 = scmp.ne.s32.totalorder %s233, %s249
      %p251 = scmp.eq.s32.totalorder %s37, 0
      %p252 = por %p250, %p251
      %s253 = ssub.s32 %s31, %s38
      %p254 = scmp.eq.s32.totalorder %s253, 0
      %s256 = sadd.s32 %s255, 1
      %s257 = scalar_select %p254, %s255, %s256
      %p260 = pneg %p254
      %p261 = scmp.eq.s32.totalorder %s31, 3
      %p262 = por %p260, %p261
      %p263 = scmp.ne.s32.totalorder %s255, %s258
      %p264 = scmp.eq.s32.totalorder %s31, 0
      %p265 = por %p263, %p264
      %p266 = scmp.ne.s32.totalorder %s255, %s258
      %p267 = scmp.eq.s32.totalorder %s36, 3
      %p268 = por %p266, %p267
      %p269 = scmp.ne.s32.totalorder %s258, %s259
      %p270 = scmp.eq.s32.totalorder %s36, 0
      %p271 = por %p269, %p270
      %p272 = scmp.ne.s32.totalorder %s258, %s259
      %p273 = scmp.eq.s32.totalorder %s37, 3
      %p274 = por %p272, %p273
      %p276 = scmp.ne.s32.totalorder %s259, %s275
      %p277 = scmp.eq.s32.totalorder %s37, 0
      %p278 = por %p276, %p277
      %s279 = ssub.s32 %s31, %s38
      %p280 = scmp.eq.s32.totalorder %s279, 0
      %s282 = sadd.s32 %s281, 1
      %s283 = scalar_select %p280, %s281, %s282
      %p286 = pneg %p280
      %p287 = scmp.eq.s32.totalorder %s31, 3
      %p288 = por %p286, %p287
      %p289 = scmp.ne.s32.totalorder %s281, %s284
      %p290 = scmp.eq.s32.totalorder %s31, 0
      %p291 = por %p289, %p290
      %p292 = scmp.ne.s32.totalorder %s281, %s284
      %p293 = scmp.eq.s32.totalorder %s36, 3
      %p294 = por %p292, %p293
      %p295 = scmp.ne.s32.totalorder %s284, %s285
      %p296 = scmp.eq.s32.totalorder %s36, 0
      %p297 = por %p295, %p296
      %p298 = scmp.ne.s32.totalorder %s284, %s285
      %p299 = scmp.eq.s32.totalorder %s37, 3
      %p300 = por %p298, %p299
      %p302 = scmp.ne.s32.totalorder %s285, %s301
      %p303 = scmp.eq.s32.totalorder %s37, 0
      %p304 = por %p302, %p303
      %s305 = ssub.s32 %s31, %s38
      %p306 = scmp.eq.s32.totalorder %s305, 0
      %s308 = sadd.s32 %s307, 1
      %s309 = scalar_select %p306, %s307, %s308
      %p312 = pneg %p306
      %p313 = scmp.eq.s32.totalorder %s31, 3
      %p314 = por %p312, %p313
      %p315 = scmp.ne.s32.totalorder %s307, %s310
      %p316 = scmp.eq.s32.totalorder %s31, 0
      %p317 = por %p315, %p316
      %p318 = scmp.ne.s32.totalorder %s307, %s310
      %p319 = scmp.eq.s32.totalorder %s36, 3
      %p320 = por %p318, %p319
      %p321 = scmp.ne.s32.totalorder %s310, %s311
      %p322 = scmp.eq.s32.totalorder %s36, 0
      %p323 = por %p321, %p322
      %p324 = scmp.ne.s32.totalorder %s310, %s311
      %p325 = scmp.eq.s32.totalorder %s37, 3
      %p326 = por %p324, %p325
      %p328 = scmp.ne.s32.totalorder %s311, %s327
      %p329 = scmp.eq.s32.totalorder %s37, 0
      %p330 = por %p328, %p329
      %s331 = ssub.s32 %s31, %s38
      %p332 = scmp.eq.s32.totalorder %s331, 0
      %s334 = sadd.s32 %s333, 1
      %s335 = scalar_select %p332, %s333, %s334
      %p338 = pneg %p332
      %p339 = scmp.eq.s32.totalorder %s31, 3
      %p340 = por %p338, %p339
      %p341 = scmp.ne.s32.totalorder %s333, %s336
      %p342 = scmp.eq.s32.totalorder %s31, 0
      %p343 = por %p341, %p342
      %p344 = scmp.ne.s32.totalorder %s333, %s336
      %p345 = scmp.eq.s32.totalorder %s36, 3
      %p346 = por %p344, %p345
      %p347 = scmp.ne.s32.totalorder %s336, %s337
      %p348 = scmp.eq.s32.totalorder %s36, 0
      %p349 = por %p347, %p348
      %p350 = scmp.ne.s32.totalorder %s336, %s337
      %p351 = scmp.eq.s32.totalorder %s37, 3
      %p352 = por %p350, %p351
      %p354 = scmp.ne.s32.totalorder %s337, %s353
      %p355 = scmp.eq.s32.totalorder %s37, 0
      %p356 = por %p354, %p355
      %s357 = ssub.s32 %s31, %s38
      %p358 = scmp.eq.s32.totalorder %s357, 0
      %s360 = sadd.s32 %s359, 1
      %s361 = scalar_select %p358, %s359, %s360
      %p364 = pneg %p358
      %p365 = scmp.eq.s32.totalorder %s31, 3
      %p366 = por %p364, %p365
      %p367 = scmp.ne.s32.totalorder %s359, %s362
      %p368 = scmp.eq.s32.totalorder %s31, 0
      %p369 = por %p367, %p368
      %p370 = scmp.ne.s32.totalorder %s359, %s362
      %p371 = scmp.eq.s32.totalorder %s36, 3
      %p372 = por %p370, %p371
      %p373 = scmp.ne.s32.totalorder %s362, %s363
      %p374 = scmp.eq.s32.totalorder %s36, 0
      %p375 = por %p373, %p374
      %p376 = scmp.ne.s32.totalorder %s362, %s363
      %p377 = scmp.eq.s32.totalorder %s37, 3
      %p378 = por %p376, %p377
      %p380 = scmp.ne.s32.totalorder %s363, %s379
      %p381 = scmp.eq.s32.totalorder %s37, 0
      %p382 = por %p380, %p381
      %s383 = ssub.s32 %s31, %s38
      %p384 = scmp.eq.s32.totalorder %s383, 0
      %s386 = sadd.s32 %s385, 1
      %s387 = scalar_select %p384, %s385, %s386
      %p390 = pneg %p384
      %p391 = scmp.eq.s32.totalorder %s31, 3
      %p392 = por %p390, %p391
      %p393 = scmp.ne.s32.totalorder %s385, %s388
      %p394 = scmp.eq.s32.totalorder %s31, 0
      %p395 = por %p393, %p394
      %p396 = scmp.ne.s32.totalorder %s385, %s388
      %p397 = scmp.eq.s32.totalorder %s36, 3
      %p398 = por %p396, %p397
      %p399 = scmp.ne.s32.totalorder %s388, %s389
      %p400 = scmp.eq.s32.totalorder %s36, 0
      %p401 = por %p399, %p400
      %p402 = scmp.ne.s32.totalorder %s388, %s389
      %p403 = scmp.eq.s32.totalorder %s37, 3
      %p404 = por %p402, %p403
      %p406 = scmp.ne.s32.totalorder %s389, %s405
      %p407 = scmp.eq.s32.totalorder %s37, 0
      %p408 = por %p406, %p407
      %s409 = ssub.s32 %s31, %s38
      %p410 = scmp.eq.s32.totalorder %s409, 0
      %s412 = sadd.s32 %s411, 1
      %s413 = scalar_select %p410, %s411, %s412
      %p416 = pneg %p410
      %p417 = scmp.eq.s32.totalorder %s31, 3
      %p418 = por %p416, %p417
      %p419 = scmp.ne.s32.totalorder %s411, %s414
      %p420 = scmp.eq.s32.totalorder %s31, 0
      %p421 = por %p419, %p420
      %p422 = scmp.ne.s32.totalorder %s411, %s414
      %p423 = scmp.eq.s32.totalorder %s36, 3
      %p424 = por %p422, %p423
      %p425 = scmp.ne.s32.totalorder %s414, %s415
      %p426 = scmp.eq.s32.totalorder %s36, 0
      %p427 = por %p425, %p426
      %p428 = scmp.ne.s32.totalorder %s414, %s415
      %p429 = scmp.eq.s32.totalorder %s37, 3
      %p430 = por %p428, %p429
      %p432 = scmp.ne.s32.totalorder %s415, %s431
      %p433 = scmp.eq.s32.totalorder %s37, 0
      %p434 = por %p432, %p433
      %s436 = sadd.s32 %s435, 1
      %p439 = scmp.eq.s32.totalorder %s31, 3
      %p440 = scmp.ne.s32.totalorder %s435, %s437
      %p441 = scmp.eq.s32.totalorder %s31, 0
      %p442 = por %p440, %p441
      %p443 = scmp.ne.s32.totalorder %s435, %s437
      %p444 = scmp.eq.s32.totalorder %s36, 3
      %p445 = por %p443, %p444
      %p446 = scmp.ne.s32.totalorder %s437, %s438
      %p447 = scmp.eq.s32.totalorder %s36, 0
      %p448 = por %p446, %p447
      %p449 = scmp.ne.s32.totalorder %s437, %s438
      %p450 = scmp.eq.s32.totalorder %s37, 3
      %p451 = por %p449, %p450
      %p453 = scmp.ne.s32.totalorder %s438, %s452
      %p454 = scmp.eq.s32.totalorder %s37, 0
      %p455 = por %p453, %p454
      %s457 = sadd.s32 %s456, 1
      %p460 = scmp.eq.s32.totalorder %s31, 3
      %p461 = scmp.ne.s32.totalorder %s456, %s458
      %p462 = scmp.eq.s32.totalorder %s31, 0
      %p463 = por %p461, %p462
      %p464 = scmp.ne.s32.totalorder %s456, %s458
      %p465 = scmp.eq.s32.totalorder %s36, 3
      %p466 = por %p464, %p465
      %p467 = scmp.ne.s32.totalorder %s458, %s459
      %p468 = scmp.eq.s32.totalorder %s36, 0
      %p469 = por %p467, %p468
      %p470 = scmp.ne.s32.totalorder %s458, %s459
      %p471 = scmp.eq.s32.totalorder %s37, 3
      %p472 = por %p470, %p471
      %p474 = scmp.ne.s32.totalorder %s459, %s473
      %p475 = scmp.eq.s32.totalorder %s37, 0
      %p476 = por %p474, %p475
      %s478 = sadd.s32 %s477, 1
      %p481 = scmp.eq.s32.totalorder %s31, 3
      %p482 = scmp.ne.s32.totalorder %s477, %s479
      %p483 = scmp.eq.s32.totalorder %s31, 0
      %p484 = por %p482, %p483
      %p485 = scmp.ne.s32.totalorder %s477, %s479
      %p486 = scmp.eq.s32.totalorder %s36, 3
      %p487 = por %p485, %p486
      %p488 = scmp.ne.s32.totalorder %s479, %s480
      %p489 = scmp.eq.s32.totalorder %s36, 0
      %p490 = por %p488, %p489
      %p491 = scmp.ne.s32.totalorder %s479, %s480
      %p492 = scmp.eq.s32.totalorder %s37, 3
      %p493 = por %p491, %p492
      %p495 = scmp.ne.s32.totalorder %s480, %s494
      %p496 = scmp.eq.s32.totalorder %s37, 0
      %p497 = por %p495, %p496
      %p498 = scmp.le.s32.totalorder 1, %s31
      %p499 = scmp.lt.s32.totalorder %s31, 5
      %p500 = pnand %p498, %p499
      %p501 = pneg %p500
      // Predicated region
      $region9: #{forward.1} parent=5 // pred_check
        _
      $region10: #{forward.1} parent=5 // pred_check_branch
        %503 = sbr.rel (%p500) target = $region12
      $region11: #{forward.1} parent=5 // pred_region
        %s504 = ssub.s32 %s31, 1
        // Predicated region
        $region13: #{forward.1} parent=11 // pred_check
          %p505 = pneg %p52
        $region14: #{forward.1} parent=11 // pred_check_branch
          %507 = sbr.rel (%p505) target = $region16
        $region15: #{forward.1} parent=11 // pred_region
          _
        $region16: #{forward.1} parent=11 // pred_fallthru
          _
        // Predicated region
        $region17: #{forward.1} parent=11 // pred_check
          %p508 = pneg %p73
        $region18: #{forward.1} parent=11 // pred_check_branch
          %510 = sbr.rel (%p508) target = $region20
        $region19: #{forward.1} parent=11 // pred_region
          _
        $region20: #{forward.1} parent=11 // pred_fallthru
          _
        // Predicated region
        $region21: #{forward.1} parent=11 // pred_check
          %p511 = pneg %p94
        $region22: #{forward.1} parent=11 // pred_check_branch
          %513 = sbr.rel (%p511) target = $region24
        $region23: #{forward.1} parent=11 // pred_region
          _
        $region24: #{forward.1} parent=11 // pred_fallthru
          _
        // Predicated region
        $region25: #{forward.1} parent=11 // pred_check
          %p514 = pneg %p115
        $region26: #{forward.1} parent=11 // pred_check_branch
          %516 = sbr.rel (%p514) target = $region28
        $region27: #{forward.1} parent=11 // pred_region
          _
        $region28: #{forward.1} parent=11 // pred_fallthru
          _
        // Predicated region
        $region29: #{forward.1} parent=11 // pred_check
          %p517 = pneg %p448
        $region30: #{forward.1} parent=11 // pred_check_branch
          %519 = sbr.rel (%p517) target = $region32
        $region31: #{forward.1} parent=11 // pred_region
          _
        $region32: #{forward.1} parent=11 // pred_fallthru
          _
        // Predicated region
        $region33: #{forward.1} parent=11 // pred_check
          %p520 = pneg %p469
        $region34: #{forward.1} parent=11 // pred_check_branch
          %522 = sbr.rel (%p520) target = $region36
        $region35: #{forward.1} parent=11 // pred_region
          _
        $region36: #{forward.1} parent=11 // pred_fallthru
          _
      $region12: #{forward.1} parent=5 // pred_fallthru
        _
      %p523 = scmp.lt.s32.totalorder %s31, 4
      // Predicated region
      $region37: #{forward.1} parent=5 // pred_check
        %p524 = pneg %p523
      $region38: #{forward.1} parent=5 // pred_check_branch
        %526 = sbr.rel (%p524) target = $region40
      $region39: #{forward.1} parent=5 // pred_region
        // Predicated region
        $region41: #{forward.1} parent=39 // pred_check
          %p527 = pneg %p135
        $region42: #{forward.1} parent=39 // pred_check_branch
          %529 = sbr.rel (%p527) target = $region44
        $region43: #{forward.1} parent=39 // pred_region
          %p530 = scmp.lt.s32.totalorder %s31, 3
          %s531 = scalar_select %p530, %s31, 3
          %s532 = smul.addr %s531, 48
          %s533 = smul.addr %s532, 4
          %s534 = scalar_lea.vmem %s4, %s533
        $region44: #{forward.1} parent=39 // pred_fallthru
          _
        // Predicated region
        $region45: #{forward.1} parent=39 // pred_check
          %p535 = pneg %p161
        $region46: #{forward.1} parent=39 // pred_check_branch
          %537 = sbr.rel (%p535) target = $region48
        $region47: #{forward.1} parent=39 // pred_region
          %p538 = scmp.lt.s32.totalorder %s31, 3
          %s539 = scalar_select %p538, %s31, 3
          %s540 = smul.addr %s539, 3
          %s541 = scalar_lea.vmem %s5, %s540
        $region48: #{forward.1} parent=39 // pred_fallthru
          _
        // Predicated region
        $region49: #{forward.1} parent=39 // pred_check
          %p542 = pneg %p187
        $region50: #{forward.1} parent=39 // pred_check_branch
          %544 = sbr.rel (%p542) target = $region52
        $region51: #{forward.1} parent=39 // pred_region
          %s545 = sand.u32 %s177, 1
          %s546 = scalar_lea.sflag [#allocation4], %s545
          %s547 = sand.u32 %s177, 1
          %s548 = smul.addr %s547, 64
          %s549 = scalar_lea.vmem [#allocation3], %s548
          %s551 = ssub.s32 1024, 1024
          %552 = vsyncadd %s546, %s551
          %s553 = smul.addr %s31, 16
          %s554 = smul.addr %s553, 64
          %s555 = scalar_lea.hbm %s6, %s554
          %s556 = sshll.u32 %s549, 4
          %s557 = int_to_ptr.vmem [resolvable:$true] %s556
          %562 = dma.hbm_to_vmem [thread:$0]  %s555, 1024, %s557, %s546, 64, 64, 4
        $region52: #{forward.1} parent=39 // pred_fallthru
          _
        // Predicated region
        $region53: #{forward.1} parent=39 // pred_check
          %p563 = pneg %p213
        $region54: #{forward.1} parent=39 // pred_check_branch
          %565 = sbr.rel (%p563) target = $region56
        $region55: #{forward.1} parent=39 // pred_region
          %p566 = scmp.lt.s32.totalorder %s31, 3
          %s567 = scalar_select %p566, %s31, 3
          %s568 = scalar_lea.vmem %s7, %s567
        $region56: #{forward.1} parent=39 // pred_fallthru
          _
        // Predicated region
        $region57: #{forward.1} parent=39 // pred_check
          %p569 = pneg %p239
        $region58: #{forward.1} parent=39 // pred_check_branch
          %571 = sbr.rel (%p569) target = $region60
        $region59: #{forward.1} parent=39 // pred_region
          %p572 = scmp.lt.s32.totalorder %s31, 3
          %s573 = scalar_select %p572, %s31, 3
          %s574 = scalar_lea.vmem %s8, %s573
        $region60: #{forward.1} parent=39 // pred_fallthru
          _
        // Predicated region
        $region61: #{forward.1} parent=39 // pred_check
          %p575 = pneg %p265
        $region62: #{forward.1} parent=39 // pred_check_branch
          %577 = sbr.rel (%p575) target = $region64
        $region63: #{forward.1} parent=39 // pred_region
          %p578 = scmp.lt.s32.totalorder %s31, 3
          %s579 = scalar_select %p578, %s31, 3
          %s580 = scalar_lea.vmem %s9, %s579
        $region64: #{forward.1} parent=39 // pred_fallthru
          _
        // Predicated region
        $region65: #{forward.1} parent=39 // pred_check
          %p581 = pneg %p291
        $region66: #{forward.1} parent=39 // pred_check_branch
          %583 = sbr.rel (%p581) target = $region68
        $region67: #{forward.1} parent=39 // pred_region
          %s584 = sand.u32 %s31, 1
          %s585 = scalar_lea.sflag [#allocation7], %s584
          %s586 = sand.u32 %s281, 1
          %s587 = smul.addr %s586, 256
          %s588 = scalar_lea.vmem [#allocation6], %s587
          %s590 = ssub.s32 4096, 4096
          %591 = vsyncadd %s585, %s590
          %s592 = smul.addr %s31, 64
          %s593 = smul.addr %s592, 64
          %s594 = scalar_lea.hbm %s10, %s593
          %s595 = sshll.u32 %s588, 4
          %s596 = int_to_ptr.vmem [resolvable:$true] %s595
          %601 = dma.hbm_to_vmem [thread:$0]  %s594, 4096, %s596, %s585, 256, 256, 16
        $region68: #{forward.1} parent=39 // pred_fallthru
          _
        // Predicated region
        $region69: #{forward.1} parent=39 // pred_check
          %p602 = pneg %p317
        $region70: #{forward.1} parent=39 // pred_check_branch
          %604 = sbr.rel (%p602) target = $region72
        $region71: #{forward.1} parent=39 // pred_region
          %p605 = scmp.lt.s32.totalorder %s31, 3
          %s606 = scalar_select %p605, %s31, 3
          %s607 = smul.addr %s606, 4
          %s608 = scalar_lea.vmem %s11, %s607
        $region72: #{forward.1} parent=39 // pred_fallthru
          _
        // Predicated region
        $region73: #{forward.1} parent=39 // pred_check
          %p609 = pneg %p343
        $region74: #{forward.1} parent=39 // pred_check_branch
          %611 = sbr.rel (%p609) target = $region76
        $region75: #{forward.1} parent=39 // pred_region
          %s612 = sand.u32 %s31, 1
          %s613 = scalar_lea.sflag [#allocation7], %s612
          %s614 = sand.u32 %s333, 1
          %s615 = smul.addr %s614, 256
          %s616 = scalar_lea.vmem [#allocation8], %s615
          %s618 = ssub.s32 4096, 4096
          %619 = vsyncadd %s613, %s618
          %s620 = smul.addr %s31, 64
          %s621 = smul.addr %s620, 64
          %s622 = scalar_lea.hbm %s12, %s621
          %s623 = sshll.u32 %s616, 4
          %s624 = int_to_ptr.vmem [resolvable:$true] %s623
          %629 = dma.hbm_to_vmem [thread:$0]  %s622, 4096, %s624, %s613, 64, 64, 4
        $region76: #{forward.1} parent=39 // pred_fallthru
          _
        // Predicated region
        $region77: #{forward.1} parent=39 // pred_check
          %p630 = pneg %p369
        $region78: #{forward.1} parent=39 // pred_check_branch
          %632 = sbr.rel (%p630) target = $region80
        $region79: #{forward.1} parent=39 // pred_region
          %p633 = scmp.lt.s32.totalorder %s31, 3
          %s634 = scalar_select %p633, %s31, 3
          %s635 = scalar_lea.vmem %s13, %s634
        $region80: #{forward.1} parent=39 // pred_fallthru
          _
        // Predicated region
        $region81: #{forward.1} parent=39 // pred_check
          %p636 = pneg %p395
        $region82: #{forward.1} parent=39 // pred_check_branch
          %638 = sbr.rel (%p636) target = $region84
        $region83: #{forward.1} parent=39 // pred_region
          %p639 = scmp.lt.s32.totalorder %s31, 3
          %s640 = scalar_select %p639, %s31, 3
          %s641 = scalar_lea.vmem %s14, %s640
        $region84: #{forward.1} parent=39 // pred_fallthru
          _
        // Predicated region
        $region85: #{forward.1} parent=39 // pred_check
          %p642 = pneg %p421
        $region86: #{forward.1} parent=39 // pred_check_branch
          %644 = sbr.rel (%p642) target = $region88
        $region87: #{forward.1} parent=39 // pred_region
          %p645 = scmp.lt.s32.totalorder %s31, 3
          %s646 = scalar_select %p645, %s31, 3
          %s647 = scalar_lea.vmem %s15, %s646
        $region88: #{forward.1} parent=39 // pred_fallthru
          _
      $region40: #{forward.1} parent=5 // pred_fallthru
        _
      %p648 = scmp.le.s32.totalorder 1, %s31
      %p649 = scmp.lt.s32.totalorder %s31, 5
      %p650 = pnand %p648, %p649
      %p651 = pneg %p650
      // Predicated region
      $region89: #{forward.1} parent=5 // pred_check
        _
      $region90: #{forward.1} parent=5 // pred_check_branch
        %653 = sbr.rel (%p650) target = $region92
      $region91: #{forward.1} parent=5 // pred_region
        %s654 = ssub.s32 %s31, 1
        %s655 = sand.u32 %s180, 1
        %s656 = scalar_lea.sflag [#allocation4], %s655
        %s657 = sand.u32 %s180, 1
        %s658 = smul.addr %s657, 64
        %s659 = scalar_lea.vmem [#allocation3], %s658
        // Predicated region
        $region93: #{forward.1} parent=91 // pred_check
          %p660 = pneg %p193
        $region94: #{forward.1} parent=91 // pred_check_branch
          %662 = sbr.rel (%p660) target = $region96
        $region95: #{forward.1} parent=91 // pred_region
          %663 = dma.done %s656, 1024
        $region96: #{forward.1} parent=91 // pred_fallthru
          _
        %s664 = sand.u32 %s36, 1
        %s665 = scalar_lea.sflag [#allocation7], %s664
        %s666 = sand.u32 %s284, 1
        %s667 = smul.addr %s666, 256
        %s668 = scalar_lea.vmem [#allocation6], %s667
        // Predicated region
        $region97: #{forward.1} parent=91 // pred_check
          %p669 = pneg %p297
        $region98: #{forward.1} parent=91 // pred_check_branch
          %671 = sbr.rel (%p669) target = $region100
        $region99: #{forward.1} parent=91 // pred_region
          %672 = dma.done %s665, 4096
        $region100: #{forward.1} parent=91 // pred_fallthru
          _
        %s673 = sand.u32 %s36, 1
        %s674 = scalar_lea.sflag [#allocation7], %s673
        %s675 = sand.u32 %s336, 1
        %s676 = smul.addr %s675, 256
        %s677 = scalar_lea.vmem [#allocation8], %s676
        // Predicated region
        $region101: #{forward.1} parent=91 // pred_check
          %p678 = pneg %p349
        $region102: #{forward.1} parent=91 // pred_check_branch
          %680 = sbr.rel (%p678) target = $region104
        $region103: #{forward.1} parent=91 // pred_region
          %681 = dma.done %s674, 4096
        $region104: #{forward.1} parent=91 // pred_fallthru
          _
        %p682 = pneg %p52
        %p683 = pneg %p49
        %p684 = pneg %p73
        %p685 = pneg %p70
        %p686 = pneg %p94
        %p687 = pneg %p91
        %p688 = pneg %p115
        %p689 = pneg %p112
        %p690 = scmp.lt.s32.totalorder %s36, 3
        %s691 = scalar_select %p690, %s36, 3
        %s692 = smul.addr %s691, 48
        %s693 = smul.addr %s692, 4
        %s694 = scalar_lea.vmem %s4, %s693
        %p695 = pneg %p141
        %p696 = pneg %p138
        %p697 = scmp.lt.s32.totalorder %s36, 3
        %s698 = scalar_select %p697, %s36, 3
        %s699 = smul.addr %s698, 3
        %s700 = scalar_lea.vmem %s5, %s699
        %p701 = pneg %p167
        %p702 = pneg %p164
        %s703 = sand.u32 %s180, 1
        %s704 = scalar_lea.sflag [#allocation4], %s703
        %s705 = sand.u32 %s180, 1
        %s706 = smul.addr %s705, 64
        %s707 = scalar_lea.vmem [#allocation3], %s706
        %p708 = pneg %p193
        %p709 = pneg %p190
        %p710 = scmp.lt.s32.totalorder %s36, 3
        %s711 = scalar_select %p710, %s36, 3
        %s712 = scalar_lea.vmem %s7, %s711
        %p713 = pneg %p219
        %p714 = pneg %p216
        %p715 = scmp.lt.s32.totalorder %s36, 3
        %s716 = scalar_select %p715, %s36, 3
        %s717 = scalar_lea.vmem %s8, %s716
        %p718 = pneg %p245
        %p719 = pneg %p242
        %p720 = scmp.lt.s32.totalorder %s36, 3
        %s721 = scalar_select %p720, %s36, 3
        %s722 = scalar_lea.vmem %s9, %s721
        %p723 = pneg %p271
        %p724 = pneg %p268
        %s725 = sand.u32 %s36, 1
        %s726 = scalar_lea.sflag [#allocation7], %s725
        %s727 = sand.u32 %s284, 1
        %s728 = smul.addr %s727, 256
        %s729 = scalar_lea.vmem [#allocation6], %s728
        %p730 = pneg %p297
        %p731 = pneg %p294
        %p732 = scmp.lt.s32.totalorder %s36, 3
        %s733 = scalar_select %p732, %s36, 3
        %s734 = smul.addr %s733, 4
        %s735 = scalar_lea.vmem %s11, %s734
        %p736 = pneg %p323
        %p737 = pneg %p320
        %s738 = sand.u32 %s36, 1
        %s739 = scalar_lea.sflag [#allocation7], %s738
        %s740 = sand.u32 %s336, 1
        %s741 = smul.addr %s740, 256
        %s742 = scalar_lea.vmem [#allocation8], %s741
        %p743 = pneg %p349
        %p744 = pneg %p346
        %p745 = scmp.lt.s32.totalorder %s36, 3
        %s746 = scalar_select %p745, %s36, 3
        %s747 = scalar_lea.vmem %s13, %s746
        %p748 = pneg %p375
        %p749 = pneg %p372
        %p750 = scmp.lt.s32.totalorder %s36, 3
        %s751 = scalar_select %p750, %s36, 3
        %s752 = scalar_lea.vmem %s14, %s751
        %p753 = pneg %p401
        %p754 = pneg %p398
        %p755 = scmp.lt.s32.totalorder %s36, 3
        %s756 = scalar_select %p755, %s36, 3
        %s757 = scalar_lea.vmem %s15, %s756
        %p758 = pneg %p427
        %p759 = pneg %p424
        %p760 = pneg %p448
        %p761 = pneg %p445
        %p762 = pneg %p469
        %p763 = pneg %p466
        %p764 = pneg %p490
        %p765 = pneg %p487
        %p766 = scmp.lt.s32.totalorder %s36, 3
        %s767 = scalar_select %p766, %s36, 3
        %s768 = smul.addr %s767, 48
        %s769 = smul.addr %s768, 4
        %s770 = scalar_lea.vmem %s4, %s769
        %p771 = scmp.lt.s32.totalorder %s36, 3
        %s772 = scalar_select %p771, %s36, 3
        %s773 = smul.addr %s772, 3
        %s774 = scalar_lea.vmem %s5, %s773
        %p775 = scmp.lt.s32.totalorder %s36, 3
        %s776 = scalar_select %p775, %s36, 3
        %s777 = scalar_lea.vmem %s7, %s776
        %p778 = scmp.lt.s32.totalorder %s36, 3
        %s779 = scalar_select %p778, %s36, 3
        %s780 = scalar_lea.vmem %s8, %s779
        %p781 = scmp.lt.s32.totalorder %s36, 3
        %s782 = scalar_select %p781, %s36, 3
        %s783 = scalar_lea.vmem %s9, %s782
        %p784 = scmp.lt.s32.totalorder %s36, 3
        %s785 = scalar_select %p784, %s36, 3
        %s786 = smul.addr %s785, 4
        %s787 = scalar_lea.vmem %s11, %s786
        %p788 = scmp.lt.s32.totalorder %s36, 3
        %s789 = scalar_select %p788, %s36, 3
        %s790 = scalar_lea.vmem %s13, %s789
        %p791 = scmp.lt.s32.totalorder %s36, 3
        %s792 = scalar_select %p791, %s36, 3
        %s793 = scalar_lea.vmem %s14, %s792
        %p794 = scmp.lt.s32.totalorder %s36, 3
        %s795 = scalar_select %p794, %s36, 3
        %s796 = scalar_lea.vmem %s15, %s795
        %p798 = scmp.eq.s32.totalorder %s36, 0
        // Predicated region
        $region105: #{forward.1} parent=91 // pred_check
          %p799 = pneg %p798
        $region106: #{forward.1} parent=91 // pred_check_branch
          %801 = sbr.rel (%p799) target = $region108
        $region107: #{forward.1} parent=91 // pred_region
          %v802 = vld [vmem:[%s0] sm:$0xff]
          %v803 = vld [vmem:[%s0 + $0x8] sm:$0xff]
          %v804 = vld [vmem:[%s2] sm:$0x1]
          %v805 = vld [vmem:[%s3] sm:$0x1]
          %806 = vadd.xlane.f32.xlu0 %v802
          %v807 = vpop.xlane.xlu0 %806
          %808 = vadd.xlane.f32.xlu0 %v803
          %v809 = vpop.xlane.xlu0 %808
          %v810 = vrcp.pop 128.0
          %v811 = vmul.f32 %v807, %v810
          %v812 = vmul.f32 %v809, %v810
          %v813 = vsub.f32 %v802, %v811
          %v814 = vsub.f32 %v803, %v812
          %v815 = vmul.f32 %v813, %v813
          %v816 = vmul.f32 %v814, %v814
          %817 = vadd.xlane.f32.xlu0 %v815
          %v818 = vpop.xlane.xlu0 %817
          %819 = vadd.xlane.f32.xlu0 %v816
          %v820 = vpop.xlane.xlu0 %819
          %v821 = vmul.f32 %v818, %v810
          %v822 = vmul.f32 %v820, %v810
          %v823 = vadd.f32 %v821, 1e-12
          %v824 = vadd.f32 %v822, 1e-12
          %v825 = vrsqrt.pop %v823
          %v826 = vrsqrt.pop %v824
          %v827 = vmul.f32 %v813, %v825
          %v828 = vmul.f32 %v814, %v826
          %v830 = vlaneseq
          %v831 = vshrl.u32 %v830, 7
          %v832 = vsub.s32 0, %v831
          %v833 = vrot.slane %v804, %v832
          %v835 = vmul.f32 %v827, %v833
          %v836 = vmul.f32 %v828, %v833
          %v838 = vlaneseq
          %v839 = vshrl.u32 %v838, 7
          %v840 = vsub.s32 0, %v839
          %v841 = vrot.slane %v805, %v840
          %v843 = vadd.f32 %v835, %v841
          %v844 = vadd.f32 %v836, %v841
          %845 = vst [vmem:[#allocation2] sm:$0xff] %v843
          %846 = vst [vmem:[#allocation2 + $0x8] sm:$0xff] %v844
        $region108: #{forward.1} parent=91 // pred_fallthru
          _
        %v847 = vld [vmem:[#allocation2] sm:$0xff]
        %v848 = vld [vmem:[#allocation2 + $0x8] sm:$0xff]
        %v849 = vpack.c.bf16 %v848, %v847
        %v850 = vld [vmem:[%s770] sm:$0xff]
        %v851 = vld [vmem:[%s770 + $0x8] sm:$0xf]
        %v852 = vld [vmem:[%s770 + $0xc] sm:$0xff]
        %v853 = vld [vmem:[%s770 + $0x14] sm:$0xf]
        %v854 = vld [vmem:[%s770 + $0x18] sm:$0xff]
        %v855 = vld [vmem:[%s770 + $0x20] sm:$0xf]
        %v856 = vld [vmem:[%s770 + $0x24] sm:$0xff]
        %v857 = vld [vmem:[%s770 + $0x2c] sm:$0xf]
        %v858 = vld [vmem:[%s770 + $0x30] sm:$0xff]
        %v859 = vld [vmem:[%s770 + $0x38] sm:$0xf]
        %v860 = vld [vmem:[%s770 + $0x3c] sm:$0xff]
        %v861 = vld [vmem:[%s770 + $0x44] sm:$0xf]
        %v862 = vld [vmem:[%s770 + $0x48] sm:$0xff]
        %v863 = vld [vmem:[%s770 + $0x50] sm:$0xf]
        %v864 = vld [vmem:[%s770 + $0x54] sm:$0xff]
        %v865 = vld [vmem:[%s770 + $0x5c] sm:$0xf]
        %v866 = vld [vmem:[%s770 + $0x60] sm:$0xff]
        %v867 = vld [vmem:[%s770 + $0x68] sm:$0xf]
        %v868 = vld [vmem:[%s770 + $0x6c] sm:$0xff]
        %v869 = vld [vmem:[%s770 + $0x74] sm:$0xf]
        %v870 = vld [vmem:[%s770 + $0x78] sm:$0xff]
        %v871 = vld [vmem:[%s770 + $0x80] sm:$0xf]
        %v872 = vld [vmem:[%s770 + $0x84] sm:$0xff]
        %v873 = vld [vmem:[%s770 + $0x8c] sm:$0xf]
        %v874 = vld [vmem:[%s770 + $0x90] sm:$0xff]
        %v875 = vld [vmem:[%s770 + $0x98] sm:$0xf]
        %v876 = vld [vmem:[%s770 + $0x9c] sm:$0xff]
        %v877 = vld [vmem:[%s770 + $0xa4] sm:$0xf]
        %v878 = vld [vmem:[%s770 + $0xa8] sm:$0xff]
        %v879 = vld [vmem:[%s770 + $0xb0] sm:$0xf]
        %v880 = vld [vmem:[%s770 + $0xb4] sm:$0xff]
        %v881 = vld [vmem:[%s770 + $0xbc] sm:$0xf]
        %v882 = vld [vmem:[%s774] sm:$0x7]
        %v884 = vlaneseq
        %v885 = vshrl.u32 %v884, 7
        %v886 = vsub.s32 0, %v885
        %v887 = vrot.slane %v882, %v886
        %v888 = vlaneseq
        %v889 = vshrl.u32 %v888, 7
        %v890 = vsub.s32 1, %v889
        %v891 = vrot.slane %v882, %v890
        %v892 = vlaneseq
        %v893 = vshrl.u32 %v892, 7
        %v894 = vsub.s32 2, %v893
        %v895 = vrot.slane %v882, %v894
        %v931 = vunpack.c.l.b16 %v850
        %v932 = vunpack.c.h.b16 %v850
        %v933 = vunpack.c.l.b16 %v851
        %v934 = vunpack.c.l.b16 %v852
        %v935 = vunpack.c.h.b16 %v852
        %v936 = vunpack.c.l.b16 %v853
        %v937 = vunpack.c.l.b16 %v854
        %v938 = vunpack.c.h.b16 %v854
        %v939 = vunpack.c.l.b16 %v855
        %v940 = vunpack.c.l.b16 %v856
        %v941 = vunpack.c.h.b16 %v856
        %v942 = vunpack.c.l.b16 %v857
        %v943 = vunpack.c.l.b16 %v858
        %v944 = vunpack.c.h.b16 %v858
        %v945 = vunpack.c.l.b16 %v859
        %v946 = vunpack.c.l.b16 %v860
        %v947 = vunpack.c.h.b16 %v860
        %v948 = vunpack.c.l.b16 %v861
        %v949 = vunpack.c.l.b16 %v862
        %v950 = vunpack.c.h.b16 %v862
        %v951 = vunpack.c.l.b16 %v863
        %v952 = vunpack.c.l.b16 %v864
        %v953 = vunpack.c.h.b16 %v864
        %v954 = vunpack.c.l.b16 %v865
        %v955 = vunpack.c.l.b16 %v866
        %v956 = vunpack.c.h.b16 %v866
        %v957 = vunpack.c.l.b16 %v867
        %v958 = vunpack.c.l.b16 %v868
        %v959 = vunpack.c.h.b16 %v868
        %v960 = vunpack.c.l.b16 %v869
        %v961 = vunpack.c.l.b16 %v870
        %v962 = vunpack.c.h.b16 %v870
        %v963 = vunpack.c.l.b16 %v871
        %v964 = vunpack.c.l.b16 %v872
        %v965 = vunpack.c.h.b16 %v872
        %v966 = vunpack.c.l.b16 %v873
        %v967 = vunpack.c.l.b16 %v874
        %v968 = vunpack.c.h.b16 %v874
        %v969 = vunpack.c.l.b16 %v875
        %v970 = vunpack.c.l.b16 %v876
        %v971 = vunpack.c.h.b16 %v876
        %v972 = vunpack.c.l.b16 %v877
        %v973 = vunpack.c.l.b16 %v878
        %v974 = vunpack.c.h.b16 %v878
        %v975 = vunpack.c.l.b16 %v879
        %v976 = vunpack.c.l.b16 %v880
        %v977 = vunpack.c.h.b16 %v880
        %v978 = vunpack.c.l.b16 %v881
        %v979 = vpack.c.b16 %v934, %v931
        %v980 = vpack.c.b16 %v935, %v932
        %v981 = vpack.c.b16 %v936, %v933
        %v982 = vpack.c.b16 %v940, %v937
        %v983 = vpack.c.b16 %v941, %v938
        %v984 = vpack.c.b16 %v942, %v939
        %v985 = vpack.c.b16 %v946, %v943
        %v986 = vpack.c.b16 %v947, %v944
        %v987 = vpack.c.b16 %v948, %v945
        %v988 = vpack.c.b16 %v952, %v949
        %v989 = vpack.c.b16 %v953, %v950
        %v990 = vpack.c.b16 %v954, %v951
        %v991 = vpack.c.b16 %v958, %v955
        %v992 = vpack.c.b16 %v959, %v956
        %v993 = vpack.c.b16 %v960, %v957
        %v994 = vpack.c.b16 %v964, %v961
        %v995 = vpack.c.b16 %v965, %v962
        %v996 = vpack.c.b16 %v966, %v963
        %v997 = vpack.c.b16 %v970, %v967
        %v998 = vpack.c.b16 %v971, %v968
        %v999 = vpack.c.b16 %v972, %v969
        %v1000 = vpack.c.b16 %v976, %v973
        %v1001 = vpack.c.b16 %v977, %v974
        %v1002 = vpack.c.b16 %v978, %v975
        %1027 = vmatprep.subr.bf16.mxu0 %v1001
        %1028 = vmatpush1.bf16.msra.mxu0 %v1000
        %1029 = vmatprep.subr.bf16.mxu0 %v998
        %1030 = vmatpush1.bf16.msra.mxu0 %v997
        %1031 = vmatprep.subr.bf16.mxu0 %v995
        %1032 = vmatpush1.bf16.msra.mxu0 %v994
        %1033 = vmatprep.subr.bf16.mxu0 %v992
        %1034 = vmatpush1.bf16.msra.mxu0 %v991
        %1035 = vmatprep.subr.bf16.mxu0 %v989
        %1036 = vmatpush1.bf16.msra.mxu0 %v988
        %1037 = vmatprep.subr.bf16.mxu0 %v986
        %1038 = vmatpush1.bf16.msra.mxu0 %v985
        %1039 = vmatprep.subr.bf16.mxu0 %v983
        %1040 = vmatpush1.bf16.msra.mxu0 %v982
        %1041 = vmatprep.subr.bf16.mxu0 %v980
        %1042 = vmatpush1.bf16.msra.mxu0 %v979
        %1043 = vmatprep.subr.bf16.mxu0 0
        %1044 = vmatpush2.bf16.msra.mxu0 0
        %1045 = vmatprep.subr.bf16.mxu0 0
        %1046 = vmatpush2.bf16.msra.mxu0 0
        %1047 = vmatprep.subr.bf16.mxu0 0
        %1048 = vmatpush2.bf16.msra.mxu0 0
        %1049 = vmatprep.subr.bf16.mxu0 0
        %1050 = vmatpush2.bf16.msra.mxu0 0
        %1051 = vmatprep.subr.bf16.mxu0 0
        %1052 = vmatpush2.bf16.msra.mxu0 0
        %1053 = vmatprep.subr.bf16.mxu0 0
        %1054 = vmatpush2.bf16.msra.mxu0 0
        %1055 = vmatprep.subr.bf16.mxu0 0
        %1056 = vmatpush2.bf16.msra.mxu0 0
        %1057 = vmatprep.subr.bf16.mxu0 0
        %1058 = vmatpush2.bf16.msra.mxu0 0
        %1059 = vmatprep.mubr.bf16.mxu0 0
        %1060 = vmatmul.mubr.bf16.gmra.mxu0 %v849
        %v1061 = vpop.f32.mrf.mxu0
        %v1062 = vadd.f32 %v887, %v1061
        %v1063 = vpop.f32.mrf.mxu0
        %v1064 = vadd.f32 %v891, %v1063
        %v1065 = vpop.f32.mrf.mxu0
        %v1066 = vadd.f32 %v887, %v1065
        %v1067 = vpop.f32.mrf.mxu0
        %v1068 = vadd.f32 %v891, %v1067
        %1069 = vdwg.mxu0
        %1070 = vmatprep.subr.bf16.mxu0 0
        %1071 = vmatpush1.bf16.msra.mxu0 %v1002
        %1072 = vmatprep.subr.bf16.mxu0 0
        %1073 = vmatpush1.bf16.msra.mxu0 %v999
        %1074 = vmatprep.subr.bf16.mxu0 0
        %1075 = vmatpush1.bf16.msra.mxu0 %v996
        %1076 = vmatprep.subr.bf16.mxu0 0
        %1077 = vmatpush1.bf16.msra.mxu0 %v993
        %1078 = vmatprep.subr.bf16.mxu0 0
        %1079 = vmatpush1.bf16.msra.mxu0 %v990
        %1080 = vmatprep.subr.bf16.mxu0 0
        %1081 = vmatpush1.bf16.msra.mxu0 %v987
        %1082 = vmatprep.subr.bf16.mxu0 0
        %1083 = vmatpush1.bf16.msra.mxu0 %v984
        %1084 = vmatprep.subr.bf16.mxu0 0
        %1085 = vmatpush1.bf16.msra.mxu0 %v981
        %1086 = vmatprep.subr.bf16.mxu0 0
        %1087 = vmatpush2.bf16.msra.mxu0 0
        %1088 = vmatprep.subr.bf16.mxu0 0
        %1089 = vmatpush2.bf16.msra.mxu0 0
        %1090 = vmatprep.subr.bf16.mxu0 0
        %1091 = vmatpush2.bf16.msra.mxu0 0
        %1092 = vmatprep.subr.bf16.mxu0 0
        %1093 = vmatpush2.bf16.msra.mxu0 0
        %1094 = vmatprep.subr.bf16.mxu0 0
        %1095 = vmatpush2.bf16.msra.mxu0 0
        %1096 = vmatprep.subr.bf16.mxu0 0
        %1097 = vmatpush2.bf16.msra.mxu0 0
        %1098 = vmatprep.subr.bf16.mxu0 0
        %1099 = vmatpush2.bf16.msra.mxu0 0
        %1100 = vmatprep.subr.bf16.mxu0 0
        %1101 = vmatpush2.bf16.msra.mxu0 0
        %1102 = vmatprep.mubr.bf16.mxu0 0
        %1103 = vmatmul.mubr.bf16.gmra.mxu0 %v849
        %v1104 = vpop.f32.mrf.mxu0
        %v1105 = vadd.f32 %v895, %v1104
        %v1106 = vpop.f32.mrf.mxu0
        %v1107 = vpop.f32.mrf.mxu0
        %v1108 = vadd.f32 %v895, %v1107
        %v1109 = vpop.f32.mrf.mxu0
        %1110 = vdwg.mxu0
        %v1111 = vmul.f32 %v1062, 0.17677669
        %v1112 = vmul.f32 %v1066, 0.17677669
        %v1113 = vld [vmem:[%s1] sm:$0x1]
        %v1114 = vld [vmem:[%s1 + $0x1] sm:$0x1]
        %v1117 = vlaneseq
        %v1118 = vshrl.u32 %v1117, 7
        %v1119 = vsub.s32 0, %v1118
        %v1120 = vrot.slane %v1113, %v1119
        %v1121 = vlaneseq
        %v1122 = vshrl.u32 %v1121, 7
        %v1123 = vsub.s32 0, %v1122
        %v1124 = vrot.slane %v1114, %v1123
        %vm1127 = vcmask 261120
        %v1129 = vsel %vm1127, %v1111, 0
        %v1132 = vsel %vm1127, %v1064, 0
        %1134 = vmatprep.subr.mxu0 0.0
        %1135 = vmatpush1.xpose.msra.mxu0 0.0
        %1136 = vmatprep.subr.mxu0 0.0
        %1137 = vmatpush1.xpose.msra.mxu0 0.0
        %1138 = vmatprep.subr.mxu0 0.0
        %1139 = vmatpush1.xpose.msra.mxu0 0.0
        %1140 = vmatprep.subr.mxu0 0.0
        %1141 = vmatpush1.xpose.msra.mxu0 0.0
        %1142 = vmatprep.subr.mxu0 0.0
        %1143 = vmatpush1.xpose.msra.mxu0 0.0
        %1144 = vmatprep.subr.mxu0 0.0
        %1145 = vmatpush1.xpose.msra.mxu0 0.0
        %1146 = vmatprep.subr.mxu0 0.0
        %1147 = vmatpush1.xpose.msra.mxu0 0.0
        %1148 = vmatprep.subr.mxu0 0.0
        %1149 = vmatpush1.xpose.msra.mxu0 0.0
        %1150 = vmatprep.subr.mxu0 0.0
        %1151 = vmatpush1.xpose.msra.mxu0 0.0
        %1152 = vmatprep.subr.mxu0 0.0
        %1153 = vmatpush1.xpose.msra.mxu0 0.0
        %1154 = vmatprep.subr.mxu0 0.0
        %1155 = vmatpush1.xpose.msra.mxu0 0.0
        %1156 = vmatprep.subr.mxu0 0.0
        %1157 = vmatpush1.xpose.msra.mxu0 0.0
        %1158 = vmatprep.subr.mxu0 0.0
        %1159 = vmatpush1.xpose.msra.mxu0 0.0
        %1160 = vmatprep.subr.mxu0 0.0
        %1161 = vmatpush1.xpose.msra.mxu0 0.0
        %1162 = vmatprep.subr.mxu0 0.0
        %1163 = vmatpush1.xpose.msra.mxu0 0.0
        %1164 = vmatprep.subr.mxu0 0.0
        %1165 = vmatpush1.xpose.msra.mxu0 %v1132
        %1166 = vmatprep.subr.mxu0 0.0
        %1167 = vmatpush2.xpose.msra.mxu0 0.0
        %1168 = vmatprep.subr.mxu0 0.0
        %1169 = vmatpush2.xpose.msra.mxu0 0.0
        %1170 = vmatprep.subr.mxu0 0.0
        %1171 = vmatpush2.xpose.msra.mxu0 0.0
        %1172 = vmatprep.subr.mxu0 0.0
        %1173 = vmatpush2.xpose.msra.mxu0 0.0
        %1174 = vmatprep.subr.mxu0 0.0
        %1175 = vmatpush2.xpose.msra.mxu0 0.0
        %1176 = vmatprep.subr.mxu0 0.0
        %1177 = vmatpush2.xpose.msra.mxu0 0.0
        %1178 = vmatprep.subr.mxu0 0.0
        %1179 = vmatpush2.xpose.msra.mxu0 0.0
        %1180 = vmatprep.subr.mxu0 0.0
        %1181 = vmatpush2.xpose.msra.mxu0 0.0
        %1182 = vmatprep.subr.mxu0 0.0
        %1183 = vmatpush2.xpose.msra.mxu0 0.0
        %1184 = vmatprep.subr.mxu0 0.0
        %1185 = vmatpush2.xpose.msra.mxu0 0.0
        %1186 = vmatprep.subr.mxu0 0.0
        %1187 = vmatpush2.xpose.msra.mxu0 0.0
        %1188 = vmatprep.subr.mxu0 0.0
        %1189 = vmatpush2.xpose.msra.mxu0 0.0
        %1190 = vmatprep.subr.mxu0 0.0
        %1191 = vmatpush2.xpose.msra.mxu0 0.0
        %1192 = vmatprep.subr.mxu0 0.0
        %1193 = vmatpush2.xpose.msra.mxu0 0.0
        %1194 = vmatprep.subr.mxu0 0.0
        %1195 = vmatpush2.xpose.msra.mxu0 0.0
        %1196 = vmatprep.subr.mxu0 0.0
        %1197 = vmatpush2.xpose.msra.mxu0 0.0
        %1198 = vmatprep.mubr.f32.mxu0 0.0
        %1199 = vmatmul.mubr.f32.gmra.mxu0 %v1129
        %v1200 = vpop.f32.mrf.mxu0
        %v1201 = vadd.f32 %v1120, %v1200
        %v1202 = vpop.f32.mrf.mxu0
        %1203 = vdwg.mxu0
        %v1205 = vsel %vm1127, %v1112, 0
        %v1208 = vsel %vm1127, %v1068, 0
        %1210 = vmatprep.subr.mxu0 0.0
        %1211 = vmatpush1.xpose.msra.mxu0 0.0
        %1212 = vmatprep.subr.mxu0 0.0
        %1213 = vmatpush1.xpose.msra.mxu0 0.0
        %1214 = vmatprep.subr.mxu0 0.0
        %1215 = vmatpush1.xpose.msra.mxu0 0.0
        %1216 = vmatprep.subr.mxu0 0.0
        %1217 = vmatpush1.xpose.msra.mxu0 0.0
        %1218 = vmatprep.subr.mxu0 0.0
        %1219 = vmatpush1.xpose.msra.mxu0 0.0
        %1220 = vmatprep.subr.mxu0 0.0
        %1221 = vmatpush1.xpose.msra.mxu0 0.0
        %1222 = vmatprep.subr.mxu0 0.0
        %1223 = vmatpush1.xpose.msra.mxu0 0.0
        %1224 = vmatprep.subr.mxu0 0.0
        %1225 = vmatpush1.xpose.msra.mxu0 0.0
        %1226 = vmatprep.subr.mxu0 0.0
        %1227 = vmatpush1.xpose.msra.mxu0 0.0
        %1228 = vmatprep.subr.mxu0 0.0
        %1229 = vmatpush1.xpose.msra.mxu0 0.0
        %1230 = vmatprep.subr.mxu0 0.0
        %1231 = vmatpush1.xpose.msra.mxu0 0.0
        %1232 = vmatprep.subr.mxu0 0.0
        %1233 = vmatpush1.xpose.msra.mxu0 0.0
        %1234 = vmatprep.subr.mxu0 0.0
        %1235 = vmatpush1.xpose.msra.mxu0 0.0
        %1236 = vmatprep.subr.mxu0 0.0
        %1237 = vmatpush1.xpose.msra.mxu0 0.0
        %1238 = vmatprep.subr.mxu0 0.0
        %1239 = vmatpush1.xpose.msra.mxu0 0.0
        %1240 = vmatprep.subr.mxu0 0.0
        %1241 = vmatpush1.xpose.msra.mxu0 %v1208
        %1242 = vmatprep.subr.mxu0 0.0
        %1243 = vmatpush2.xpose.msra.mxu0 0.0
        %1244 = vmatprep.subr.mxu0 0.0
        %1245 = vmatpush2.xpose.msra.mxu0 0.0
        %1246 = vmatprep.subr.mxu0 0.0
        %1247 = vmatpush2.xpose.msra.mxu0 0.0
        %1248 = vmatprep.subr.mxu0 0.0
        %1249 = vmatpush2.xpose.msra.mxu0 0.0
        %1250 = vmatprep.subr.mxu0 0.0
        %1251 = vmatpush2.xpose.msra.mxu0 0.0
        %1252 = vmatprep.subr.mxu0 0.0
        %1253 = vmatpush2.xpose.msra.mxu0 0.0
        %1254 = vmatprep.subr.mxu0 0.0
        %1255 = vmatpush2.xpose.msra.mxu0 0.0
        %1256 = vmatprep.subr.mxu0 0.0
        %1257 = vmatpush2.xpose.msra.mxu0 0.0
        %1258 = vmatprep.subr.mxu0 0.0
        %1259 = vmatpush2.xpose.msra.mxu0 0.0
        %1260 = vmatprep.subr.mxu0 0.0
        %1261 = vmatpush2.xpose.msra.mxu0 0.0
        %1262 = vmatprep.subr.mxu0 0.0
        %1263 = vmatpush2.xpose.msra.mxu0 0.0
        %1264 = vmatprep.subr.mxu0 0.0
        %1265 = vmatpush2.xpose.msra.mxu0 0.0
        %1266 = vmatprep.subr.mxu0 0.0
        %1267 = vmatpush2.xpose.msra.mxu0 0.0
        %1268 = vmatprep.subr.mxu0 0.0
        %1269 = vmatpush2.xpose.msra.mxu0 0.0
        %1270 = vmatprep.subr.mxu0 0.0
        %1271 = vmatpush2.xpose.msra.mxu0 0.0
        %1272 = vmatprep.subr.mxu0 0.0
        %1273 = vmatpush2.xpose.msra.mxu0 0.0
        %1274 = vmatprep.mubr.f32.mxu0 0.0
        %1275 = vmatmul.mubr.f32.gmra.mxu0 %v1205
        %v1276 = vpop.f32.mrf.mxu0
        %v1277 = vadd.f32 %v1124, %v1276
        %v1278 = vpop.f32.mrf.mxu0
        %1279 = vdwg.mxu0
        %vm1280 = vcmask 64512
        %v1281 = vsel %vm1280, %v1201, -inf
        %1282 = vmax.xlane.f32.xlu0 %v1281
        %v1283 = vpop.xlane.xlu0 %1282
        %v1284 = vsel %vm1280, %v1277, -inf
        %1285 = vmax.xlane.f32.xlu0 %v1284
        %v1286 = vpop.xlane.xlu0 %1285
        %v1287 = vsub.f32 %v1201, %v1283
        %v1288 = vsub.f32 %v1277, %v1286
        %v1289 = vmul.f32 %v1287, 1.442695
        %v1290 = vpow.pop %v1289
        %v1291 = vmul.f32 %v1288, 1.442695
        %v1292 = vpow.pop %v1291
        %v1293 = vsel %vm1280, %v1290, 0.0
        %1294 = vadd.xlane.f32.xlu0 %v1293
        %v1295 = vpop.xlane.xlu0 %1294
        %v1296 = vsel %vm1280, %v1292, 0.0
        %1297 = vadd.xlane.f32.xlu0 %v1296
        %v1298 = vpop.xlane.xlu0 %1297
        %v1299 = vrcp.pop %v1295
        %v1300 = vrcp.pop %v1298
        %v1301 = vmul.f32 %v1290, %v1299
        %v1302 = vmul.f32 %v1292, %v1300
        %v1304 = vsel %vm1280, %v1301, 0
        %1306 = vmatprep.subr.mxu0 0.0
        %1307 = vmatpush1.msra.mxu0 0.0
        %1308 = vmatprep.subr.mxu0 0.0
        %1309 = vmatpush1.msra.mxu0 0.0
        %1310 = vmatprep.subr.mxu0 0.0
        %1311 = vmatpush1.msra.mxu0 0.0
        %1312 = vmatprep.subr.mxu0 0.0
        %1313 = vmatpush1.msra.mxu0 0.0
        %1314 = vmatprep.subr.mxu0 0.0
        %1315 = vmatpush1.msra.mxu0 0.0
        %1316 = vmatprep.subr.mxu0 0.0
        %1317 = vmatpush1.msra.mxu0 0.0
        %1318 = vmatprep.subr.mxu0 0.0
        %1319 = vmatpush1.msra.mxu0 0.0
        %1320 = vmatprep.subr.mxu0 0.0
        %1321 = vmatpush1.msra.mxu0 0.0
        %1322 = vmatprep.subr.mxu0 0.0
        %1323 = vmatpush1.msra.mxu0 0.0
        %1324 = vmatprep.subr.mxu0 0.0
        %1325 = vmatpush1.msra.mxu0 0.0
        %1326 = vmatprep.subr.mxu0 0.0
        %1327 = vmatpush1.msra.mxu0 0.0
        %1328 = vmatprep.subr.mxu0 0.0
        %1329 = vmatpush1.msra.mxu0 0.0
        %1330 = vmatprep.subr.mxu0 0.0
        %1331 = vmatpush1.msra.mxu0 0.0
        %1332 = vmatprep.subr.mxu0 0.0
        %1333 = vmatpush1.msra.mxu0 0.0
        %1334 = vmatprep.subr.mxu0 0.0
        %1335 = vmatpush1.msra.mxu0 0.0
        %1336 = vmatprep.subr.mxu0 0.0
        %1337 = vmatpush1.msra.mxu0 %v1105
        %1338 = vmatprep.subr.mxu0 0.0
        %1339 = vmatpush2.msra.mxu0 0.0
        %1340 = vmatprep.subr.mxu0 0.0
        %1341 = vmatpush2.msra.mxu0 0.0
        %1342 = vmatprep.subr.mxu0 0.0
        %1343 = vmatpush2.msra.mxu0 0.0
        %1344 = vmatprep.subr.mxu0 0.0
        %1345 = vmatpush2.msra.mxu0 0.0
        %1346 = vmatprep.subr.mxu0 0.0
        %1347 = vmatpush2.msra.mxu0 0.0
        %1348 = vmatprep.subr.mxu0 0.0
        %1349 = vmatpush2.msra.mxu0 0.0
        %1350 = vmatprep.subr.mxu0 0.0
        %1351 = vmatpush2.msra.mxu0 0.0
        %1352 = vmatprep.subr.mxu0 0.0
        %1353 = vmatpush2.msra.mxu0 0.0
        %1354 = vmatprep.subr.mxu0 0.0
        %1355 = vmatpush2.msra.mxu0 0.0
        %1356 = vmatprep.subr.mxu0 0.0
        %1357 = vmatpush2.msra.mxu0 0.0
        %1358 = vmatprep.subr.mxu0 0.0
        %1359 = vmatpush2.msra.mxu0 0.0
        %1360 = vmatprep.subr.mxu0 0.0
        %1361 = vmatpush2.msra.mxu0 0.0
        %1362 = vmatprep.subr.mxu0 0.0
        %1363 = vmatpush2.msra.mxu0 0.0
        %1364 = vmatprep.subr.mxu0 0.0
        %1365 = vmatpush2.msra.mxu0 0.0
        %1366 = vmatprep.subr.mxu0 0.0
        %1367 = vmatpush2.msra.mxu0 0.0
        %1368 = vmatprep.subr.mxu0 0.0
        %1369 = vmatpush2.msra.mxu0 0.0
        %1370 = vmatprep.mubr.f32.mxu0 0.0
        %1371 = vmatmul.mubr.f32.gmra.mxu0 %v1304
        %v1372 = vpop.f32.mrf.mxu0
        %v1373 = vadd.f32 0.0, %v1372
        %v1374 = vpop.f32.mrf.mxu0
        %1375 = vdwg.mxu0
        %v1377 = vsel %vm1280, %v1302, 0
        %1379 = vmatprep.subr.mxu0 0.0
        %1380 = vmatpush1.msra.mxu0 0.0
        %1381 = vmatprep.subr.mxu0 0.0
        %1382 = vmatpush1.msra.mxu0 0.0
        %1383 = vmatprep.subr.mxu0 0.0
        %1384 = vmatpush1.msra.mxu0 0.0
        %1385 = vmatprep.subr.mxu0 0.0
        %1386 = vmatpush1.msra.mxu0 0.0
        %1387 = vmatprep.subr.mxu0 0.0
        %1388 = vmatpush1.msra.mxu0 0.0
        %1389 = vmatprep.subr.mxu0 0.0
        %1390 = vmatpush1.msra.mxu0 0.0
        %1391 = vmatprep.subr.mxu0 0.0
        %1392 = vmatpush1.msra.mxu0 0.0
        %1393 = vmatprep.subr.mxu0 0.0
        %1394 = vmatpush1.msra.mxu0 0.0
        %1395 = vmatprep.subr.mxu0 0.0
        %1396 = vmatpush1.msra.mxu0 0.0
        %1397 = vmatprep.subr.mxu0 0.0
        %1398 = vmatpush1.msra.mxu0 0.0
        %1399 = vmatprep.subr.mxu0 0.0
        %1400 = vmatpush1.msra.mxu0 0.0
        %1401 = vmatprep.subr.mxu0 0.0
        %1402 = vmatpush1.msra.mxu0 0.0
        %1403 = vmatprep.subr.mxu0 0.0
        %1404 = vmatpush1.msra.mxu0 0.0
        %1405 = vmatprep.subr.mxu0 0.0
        %1406 = vmatpush1.msra.mxu0 0.0
        %1407 = vmatprep.subr.mxu0 0.0
        %1408 = vmatpush1.msra.mxu0 0.0
        %1409 = vmatprep.subr.mxu0 0.0
        %1410 = vmatpush1.msra.mxu0 %v1108
        %1411 = vmatprep.subr.mxu0 0.0
        %1412 = vmatpush2.msra.mxu0 0.0
        %1413 = vmatprep.subr.mxu0 0.0
        %1414 = vmatpush2.msra.mxu0 0.0
        %1415 = vmatprep.subr.mxu0 0.0
        %1416 = vmatpush2.msra.mxu0 0.0
        %1417 = vmatprep.subr.mxu0 0.0
        %1418 = vmatpush2.msra.mxu0 0.0
        %1419 = vmatprep.subr.mxu0 0.0
        %1420 = vmatpush2.msra.mxu0 0.0
        %1421 = vmatprep.subr.mxu0 0.0
        %1422 = vmatpush2.msra.mxu0 0.0
        %1423 = vmatprep.subr.mxu0 0.0
        %1424 = vmatpush2.msra.mxu0 0.0
        %1425 = vmatprep.subr.mxu0 0.0
        %1426 = vmatpush2.msra.mxu0 0.0
        %1427 = vmatprep.subr.mxu0 0.0
        %1428 = vmatpush2.msra.mxu0 0.0
        %1429 = vmatprep.subr.mxu0 0.0
        %1430 = vmatpush2.msra.mxu0 0.0
        %1431 = vmatprep.subr.mxu0 0.0
        %1432 = vmatpush2.msra.mxu0 0.0
        %1433 = vmatprep.subr.mxu0 0.0
        %1434 = vmatpush2.msra.mxu0 0.0
        %1435 = vmatprep.subr.mxu0 0.0
        %1436 = vmatpush2.msra.mxu0 0.0
        %1437 = vmatprep.subr.mxu0 0.0
        %1438 = vmatpush2.msra.mxu0 0.0
        %1439 = vmatprep.subr.mxu0 0.0
        %1440 = vmatpush2.msra.mxu0 0.0
        %1441 = vmatprep.subr.mxu0 0.0
        %1442 = vmatpush2.msra.mxu0 0.0
        %1443 = vmatprep.mubr.f32.mxu0 0.0
        %1444 = vmatmul.mubr.f32.gmra.mxu0 %v1377
        %v1445 = vpop.f32.mrf.mxu0
        %v1446 = vadd.f32 0.0, %v1445
        %v1447 = vpop.f32.mrf.mxu0
        %1448 = vdwg.mxu0
        %1449 = vrot.lane.b32.xlu0 %v1111, 96
        %v1450 = vpop.permute.xlu0 %1449
        %1451 = vrot.lane.b32.xlu0 %v1064, 96
        %v1452 = vpop.permute.xlu0 %1451
        %v1453 = vsel %vm1127, %v1450, 0
        %v1455 = vsel %vm1127, %v1452, 0
        %1457 = vmatprep.subr.mxu0 0.0
        %1458 = vmatpush1.xpose.msra.mxu0 0.0
        %1459 = vmatprep.subr.mxu0 0.0
        %1460 = vmatpush1.xpose.msra.mxu0 0.0
        %1461 = vmatprep.subr.mxu0 0.0
        %1462 = vmatpush1.xpose.msra.mxu0 0.0
        %1463 = vmatprep.subr.mxu0 0.0
        %1464 = vmatpush1.xpose.msra.mxu0 0.0
        %1465 = vmatprep.subr.mxu0 0.0
        %1466 = vmatpush1.xpose.msra.mxu0 0.0
        %1467 = vmatprep.subr.mxu0 0.0
        %1468 = vmatpush1.xpose.msra.mxu0 0.0
        %1469 = vmatprep.subr.mxu0 0.0
        %1470 = vmatpush1.xpose.msra.mxu0 0.0
        %1471 = vmatprep.subr.mxu0 0.0
        %1472 = vmatpush1.xpose.msra.mxu0 0.0
        %1473 = vmatprep.subr.mxu0 0.0
        %1474 = vmatpush1.xpose.msra.mxu0 0.0
        %1475 = vmatprep.subr.mxu0 0.0
        %1476 = vmatpush1.xpose.msra.mxu0 0.0
        %1477 = vmatprep.subr.mxu0 0.0
        %1478 = vmatpush1.xpose.msra.mxu0 0.0
        %1479 = vmatprep.subr.mxu0 0.0
        %1480 = vmatpush1.xpose.msra.mxu0 0.0
        %1481 = vmatprep.subr.mxu0 0.0
        %1482 = vmatpush1.xpose.msra.mxu0 0.0
        %1483 = vmatprep.subr.mxu0 0.0
        %1484 = vmatpush1.xpose.msra.mxu0 0.0
        %1485 = vmatprep.subr.mxu0 0.0
        %1486 = vmatpush1.xpose.msra.mxu0 0.0
        %1487 = vmatprep.subr.mxu0 0.0
        %1488 = vmatpush1.xpose.msra.mxu0 %v1455
        %1489 = vmatprep.subr.mxu0 0.0
        %1490 = vmatpush2.xpose.msra.mxu0 0.0
        %1491 = vmatprep.subr.mxu0 0.0
        %1492 = vmatpush2.xpose.msra.mxu0 0.0
        %1493 = vmatprep.subr.mxu0 0.0
        %1494 = vmatpush2.xpose.msra.mxu0 0.0
        %1495 = vmatprep.subr.mxu0 0.0
        %1496 = vmatpush2.xpose.msra.mxu0 0.0
        %1497 = vmatprep.subr.mxu0 0.0
        %1498 = vmatpush2.xpose.msra.mxu0 0.0
        %1499 = vmatprep.subr.mxu0 0.0
        %1500 = vmatpush2.xpose.msra.mxu0 0.0
        %1501 = vmatprep.subr.mxu0 0.0
        %1502 = vmatpush2.xpose.msra.mxu0 0.0
        %1503 = vmatprep.subr.mxu0 0.0
        %1504 = vmatpush2.xpose.msra.mxu0 0.0
        %1505 = vmatprep.subr.mxu0 0.0
        %1506 = vmatpush2.xpose.msra.mxu0 0.0
        %1507 = vmatprep.subr.mxu0 0.0
        %1508 = vmatpush2.xpose.msra.mxu0 0.0
        %1509 = vmatprep.subr.mxu0 0.0
        %1510 = vmatpush2.xpose.msra.mxu0 0.0
        %1511 = vmatprep.subr.mxu0 0.0
        %1512 = vmatpush2.xpose.msra.mxu0 0.0
        %1513 = vmatprep.subr.mxu0 0.0
        %1514 = vmatpush2.xpose.msra.mxu0 0.0
        %1515 = vmatprep.subr.mxu0 0.0
        %1516 = vmatpush2.xpose.msra.mxu0 0.0
        %1517 = vmatprep.subr.mxu0 0.0
        %1518 = vmatpush2.xpose.msra.mxu0 0.0
        %1519 = vmatprep.subr.mxu0 0.0
        %1520 = vmatpush2.xpose.msra.mxu0 0.0
        %1521 = vmatprep.mubr.f32.mxu0 0.0
        %1522 = vmatmul.mubr.f32.gmra.mxu0 %v1453
        %v1523 = vpop.f32.mrf.mxu0
        %v1524 = vadd.f32 %v1120, %v1523
        %v1525 = vpop.f32.mrf.mxu0
        %1526 = vdwg.mxu0
        %1527 = vrot.lane.b32.xlu0 %v1112, 96
        %v1528 = vpop.permute.xlu0 %1527
        %1529 = vrot.lane.b32.xlu0 %v1068, 96
        %v1530 = vpop.permute.xlu0 %1529
        %v1531 = vsel %vm1127, %v1528, 0
        %v1533 = vsel %vm1127, %v1530, 0
        %1535 = vmatprep.subr.mxu0 0.0
        %1536 = vmatpush1.xpose.msra.mxu0 0.0
        %1537 = vmatprep.subr.mxu0 0.0
        %1538 = vmatpush1.xpose.msra.mxu0 0.0
        %1539 = vmatprep.subr.mxu0 0.0
        %1540 = vmatpush1.xpose.msra.mxu0 0.0
        %1541 = vmatprep.subr.mxu0 0.0
        %1542 = vmatpush1.xpose.msra.mxu0 0.0
        %1543 = vmatprep.subr.mxu0 0.0
        %1544 = vmatpush1.xpose.msra.mxu0 0.0
        %1545 = vmatprep.subr.mxu0 0.0
        %1546 = vmatpush1.xpose.msra.mxu0 0.0
        %1547 = vmatprep.subr.mxu0 0.0
        %1548 = vmatpush1.xpose.msra.mxu0 0.0
        %1549 = vmatprep.subr.mxu0 0.0
        %1550 = vmatpush1.xpose.msra.mxu0 0.0
        %1551 = vmatprep.subr.mxu0 0.0
        %1552 = vmatpush1.xpose.msra.mxu0 0.0
        %1553 = vmatprep.subr.mxu0 0.0
        %1554 = vmatpush1.xpose.msra.mxu0 0.0
        %1555 = vmatprep.subr.mxu0 0.0
        %1556 = vmatpush1.xpose.msra.mxu0 0.0
        %1557 = vmatprep.subr.mxu0 0.0
        %1558 = vmatpush1.xpose.msra.mxu0 0.0
        %1559 = vmatprep.subr.mxu0 0.0
        %1560 = vmatpush1.xpose.msra.mxu0 0.0
        %1561 = vmatprep.subr.mxu0 0.0
        %1562 = vmatpush1.xpose.msra.mxu0 0.0
        %1563 = vmatprep.subr.mxu0 0.0
        %1564 = vmatpush1.xpose.msra.mxu0 0.0
        %1565 = vmatprep.subr.mxu0 0.0
        %1566 = vmatpush1.xpose.msra.mxu0 %v1533
        %1567 = vmatprep.subr.mxu0 0.0
        %1568 = vmatpush2.xpose.msra.mxu0 0.0
        %1569 = vmatprep.subr.mxu0 0.0
        %1570 = vmatpush2.xpose.msra.mxu0 0.0
        %1571 = vmatprep.subr.mxu0 0.0
        %1572 = vmatpush2.xpose.msra.mxu0 0.0
        %1573 = vmatprep.subr.mxu0 0.0
        %1574 = vmatpush2.xpose.msra.mxu0 0.0
        %1575 = vmatprep.subr.mxu0 0.0
        %1576 = vmatpush2.xpose.msra.mxu0 0.0
        %1577 = vmatprep.subr.mxu0 0.0
        %1578 = vmatpush2.xpose.msra.mxu0 0.0
        %1579 = vmatprep.subr.mxu0 0.0
        %1580 = vmatpush2.xpose.msra.mxu0 0.0
        %1581 = vmatprep.subr.mxu0 0.0
        %1582 = vmatpush2.xpose.msra.mxu0 0.0
        %1583 = vmatprep.subr.mxu0 0.0
        %1584 = vmatpush2.xpose.msra.mxu0 0.0
        %1585 = vmatprep.subr.mxu0 0.0
        %1586 = vmatpush2.xpose.msra.mxu0 0.0
        %1587 = vmatprep.subr.mxu0 0.0
        %1588 = vmatpush2.xpose.msra.mxu0 0.0
        %1589 = vmatprep.subr.mxu0 0.0
        %1590 = vmatpush2.xpose.msra.mxu0 0.0
        %1591 = vmatprep.subr.mxu0 0.0
        %1592 = vmatpush2.xpose.msra.mxu0 0.0
        %1593 = vmatprep.subr.mxu0 0.0
        %1594 = vmatpush2.xpose.msra.mxu0 0.0
        %1595 = vmatprep.subr.mxu0 0.0
        %1596 = vmatpush2.xpose.msra.mxu0 0.0
        %1597 = vmatprep.subr.mxu0 0.0
        %1598 = vmatpush2.xpose.msra.mxu0 0.0
        %1599 = vmatprep.mubr.f32.mxu0 0.0
        %1600 = vmatmul.mubr.f32.gmra.mxu0 %v1531
        %v1601 = vpop.f32.mrf.mxu0
        %v1602 = vadd.f32 %v1124, %v1601
        %v1603 = vpop.f32.mrf.mxu0
        %1604 = vdwg.mxu0
        %v1605 = vsel %vm1280, %v1524, -inf
        %1606 = vmax.xlane.f32.xlu0 %v1605
        %v1607 = vpop.xlane.xlu0 %1606
        %v1608 = vsel %vm1280, %v1602, -inf
        %1609 = vmax.xlane.f32.xlu0 %v1608
        %v1610 = vpop.xlane.xlu0 %1609
        %v1611 = vsub.f32 %v1524, %v1607
        %v1612 = vsub.f32 %v1602, %v1610
        %v1613 = vmul.f32 %v1611, 1.442695
        %v1614 = vpow.pop %v1613
        %v1615 = vmul.f32 %v1612, 1.442695
        %v1616 = vpow.pop %v1615
        %v1617 = vsel %vm1280, %v1614, 0.0
        %1618 = vadd.xlane.f32.xlu0 %v1617
        %v1619 = vpop.xlane.xlu0 %1618
        %v1620 = vsel %vm1280, %v1616, 0.0
        %1621 = vadd.xlane.f32.xlu0 %v1620
        %v1622 = vpop.xlane.xlu0 %1621
        %v1623 = vrcp.pop %v1619
        %v1624 = vrcp.pop %v1622
        %v1625 = vmul.f32 %v1614, %v1623
        %v1626 = vmul.f32 %v1616, %v1624
        %1628 = vrot.lane.b32.xlu0 %v1105, 96
        %v1629 = vpop.permute.xlu0 %1628
        %v1632 = vsel %vm1280, %v1625, 0
        %1634 = vmatprep.subr.mxu0 0.0
        %1635 = vmatpush1.msra.mxu0 0.0
        %1636 = vmatprep.subr.mxu0 0.0
        %1637 = vmatpush1.msra.mxu0 0.0
        %1638 = vmatprep.subr.mxu0 0.0
        %1639 = vmatpush1.msra.mxu0 0.0
        %1640 = vmatprep.subr.mxu0 0.0
        %1641 = vmatpush1.msra.mxu0 0.0
        %1642 = vmatprep.subr.mxu0 0.0
        %1643 = vmatpush1.msra.mxu0 0.0
        %1644 = vmatprep.subr.mxu0 0.0
        %1645 = vmatpush1.msra.mxu0 0.0
        %1646 = vmatprep.subr.mxu0 0.0
        %1647 = vmatpush1.msra.mxu0 0.0
        %1648 = vmatprep.subr.mxu0 0.0
        %1649 = vmatpush1.msra.mxu0 0.0
        %1650 = vmatprep.subr.mxu0 0.0
        %1651 = vmatpush1.msra.mxu0 0.0
        %1652 = vmatprep.subr.mxu0 0.0
        %1653 = vmatpush1.msra.mxu0 0.0
        %1654 = vmatprep.subr.mxu0 0.0
        %1655 = vmatpush1.msra.mxu0 0.0
        %1656 = vmatprep.subr.mxu0 0.0
        %1657 = vmatpush1.msra.mxu0 0.0
        %1658 = vmatprep.subr.mxu0 0.0
        %1659 = vmatpush1.msra.mxu0 0.0
        %1660 = vmatprep.subr.mxu0 0.0
        %1661 = vmatpush1.msra.mxu0 0.0
        %1662 = vmatprep.subr.mxu0 0.0
        %1663 = vmatpush1.msra.mxu0 0.0
        %1664 = vmatprep.subr.mxu0 0.0
        %1665 = vmatpush1.msra.mxu0 %v1629
        %1666 = vmatprep.subr.mxu0 0.0
        %1667 = vmatpush2.msra.mxu0 0.0
        %1668 = vmatprep.subr.mxu0 0.0
        %1669 = vmatpush2.msra.mxu0 0.0
        %1670 = vmatprep.subr.mxu0 0.0
        %1671 = vmatpush2.msra.mxu0 0.0
        %1672 = vmatprep.subr.mxu0 0.0
        %1673 = vmatpush2.msra.mxu0 0.0
        %1674 = vmatprep.subr.mxu0 0.0
        %1675 = vmatpush2.msra.mxu0 0.0
        %1676 = vmatprep.subr.mxu0 0.0
        %1677 = vmatpush2.msra.mxu0 0.0
        %1678 = vmatprep.subr.mxu0 0.0
        %1679 = vmatpush2.msra.mxu0 0.0
        %1680 = vmatprep.subr.mxu0 0.0
        %1681 = vmatpush2.msra.mxu0 0.0
        %1682 = vmatprep.subr.mxu0 0.0
        %1683 = vmatpush2.msra.mxu0 0.0
        %1684 = vmatprep.subr.mxu0 0.0
        %1685 = vmatpush2.msra.mxu0 0.0
        %1686 = vmatprep.subr.mxu0 0.0
        %1687 = vmatpush2.msra.mxu0 0.0
        %1688 = vmatprep.subr.mxu0 0.0
        %1689 = vmatpush2.msra.mxu0 0.0
        %1690 = vmatprep.subr.mxu0 0.0
        %1691 = vmatpush2.msra.mxu0 0.0
        %1692 = vmatprep.subr.mxu0 0.0
        %1693 = vmatpush2.msra.mxu0 0.0
        %1694 = vmatprep.subr.mxu0 0.0
        %1695 = vmatpush2.msra.mxu0 0.0
        %1696 = vmatprep.subr.mxu0 0.0
        %1697 = vmatpush2.msra.mxu0 0.0
        %1698 = vmatprep.mubr.f32.mxu0 0.0
        %1699 = vmatmul.mubr.f32.gmra.mxu0 %v1632
        %v1700 = vpop.f32.mrf.mxu0
        %v1701 = vadd.f32 0.0, %v1700
        %v1702 = vpop.f32.mrf.mxu0
        %1703 = vdwg.mxu0
        %1705 = vrot.lane.b32.xlu0 %v1108, 96
        %v1706 = vpop.permute.xlu0 %1705
        %v1709 = vsel %vm1280, %v1626, 0
        %1711 = vmatprep.subr.mxu0 0.0
        %1712 = vmatpush1.msra.mxu0 0.0
        %1713 = vmatprep.subr.mxu0 0.0
        %1714 = vmatpush1.msra.mxu0 0.0
        %1715 = vmatprep.subr.mxu0 0.0
        %1716 = vmatpush1.msra.mxu0 0.0
        %1717 = vmatprep.subr.mxu0 0.0
        %1718 = vmatpush1.msra.mxu0 0.0
        %1719 = vmatprep.subr.mxu0 0.0
        %1720 = vmatpush1.msra.mxu0 0.0
        %1721 = vmatprep.subr.mxu0 0.0
        %1722 = vmatpush1.msra.mxu0 0.0
        %1723 = vmatprep.subr.mxu0 0.0
        %1724 = vmatpush1.msra.mxu0 0.0
        %1725 = vmatprep.subr.mxu0 0.0
        %1726 = vmatpush1.msra.mxu0 0.0
        %1727 = vmatprep.subr.mxu0 0.0
        %1728 = vmatpush1.msra.mxu0 0.0
        %1729 = vmatprep.subr.mxu0 0.0
        %1730 = vmatpush1.msra.mxu0 0.0
        %1731 = vmatprep.subr.mxu0 0.0
        %1732 = vmatpush1.msra.mxu0 0.0
        %1733 = vmatprep.subr.mxu0 0.0
        %1734 = vmatpush1.msra.mxu0 0.0
        %1735 = vmatprep.subr.mxu0 0.0
        %1736 = vmatpush1.msra.mxu0 0.0
        %1737 = vmatprep.subr.mxu0 0.0
        %1738 = vmatpush1.msra.mxu0 0.0
        %1739 = vmatprep.subr.mxu0 0.0
        %1740 = vmatpush1.msra.mxu0 0.0
        %1741 = vmatprep.subr.mxu0 0.0
        %1742 = vmatpush1.msra.mxu0 %v1706
        %1743 = vmatprep.subr.mxu0 0.0
        %1744 = vmatpush2.msra.mxu0 0.0
        %1745 = vmatprep.subr.mxu0 0.0
        %1746 = vmatpush2.msra.mxu0 0.0
        %1747 = vmatprep.subr.mxu0 0.0
        %1748 = vmatpush2.msra.mxu0 0.0
        %1749 = vmatprep.subr.mxu0 0.0
        %1750 = vmatpush2.msra.mxu0 0.0
        %1751 = vmatprep.subr.mxu0 0.0
        %1752 = vmatpush2.msra.mxu0 0.0
        %1753 = vmatprep.subr.mxu0 0.0
        %1754 = vmatpush2.msra.mxu0 0.0
        %1755 = vmatprep.subr.mxu0 0.0
        %1756 = vmatpush2.msra.mxu0 0.0
        %1757 = vmatprep.subr.mxu0 0.0
        %1758 = vmatpush2.msra.mxu0 0.0
        %1759 = vmatprep.subr.mxu0 0.0
        %1760 = vmatpush2.msra.mxu0 0.0
        %1761 = vmatprep.subr.mxu0 0.0
        %1762 = vmatpush2.msra.mxu0 0.0
        %1763 = vmatprep.subr.mxu0 0.0
        %1764 = vmatpush2.msra.mxu0 0.0
        %1765 = vmatprep.subr.mxu0 0.0
        %1766 = vmatpush2.msra.mxu0 0.0
        %1767 = vmatprep.subr.mxu0 0.0
        %1768 = vmatpush2.msra.mxu0 0.0
        %1769 = vmatprep.subr.mxu0 0.0
        %1770 = vmatpush2.msra.mxu0 0.0
        %1771 = vmatprep.subr.mxu0 0.0
        %1772 = vmatpush2.msra.mxu0 0.0
        %1773 = vmatprep.subr.mxu0 0.0
        %1774 = vmatpush2.msra.mxu0 0.0
        %1775 = vmatprep.mubr.f32.mxu0 0.0
        %1776 = vmatmul.mubr.f32.gmra.mxu0 %v1709
        %v1777 = vpop.f32.mrf.mxu0
        %v1778 = vadd.f32 0.0, %v1777
        %v1779 = vpop.f32.mrf.mxu0
        %1780 = vdwg.mxu0
        %1781 = vrot.lane.b32.xlu0 %v1111, 64
        %v1782 = vpop.permute.xlu0 %1781
        %1783 = vrot.lane.b32.xlu0 %v1064, 64
        %v1784 = vpop.permute.xlu0 %1783
        %v1785 = vsel %vm1127, %v1782, 0
        %v1787 = vsel %vm1127, %v1784, 0
        %1789 = vmatprep.subr.mxu0 0.0
        %1790 = vmatpush1.xpose.msra.mxu0 0.0
        %1791 = vmatprep.subr.mxu0 0.0
        %1792 = vmatpush1.xpose.msra.mxu0 0.0
        %1793 = vmatprep.subr.mxu0 0.0
        %1794 = vmatpush1.xpose.msra.mxu0 0.0
        %1795 = vmatprep.subr.mxu0 0.0
        %1796 = vmatpush1.xpose.msra.mxu0 0.0
        %1797 = vmatprep.subr.mxu0 0.0
        %1798 = vmatpush1.xpose.msra.mxu0 0.0
        %1799 = vmatprep.subr.mxu0 0.0
        %1800 = vmatpush1.xpose.msra.mxu0 0.0
        %1801 = vmatprep.subr.mxu0 0.0
        %1802 = vmatpush1.xpose.msra.mxu0 0.0
        %1803 = vmatprep.subr.mxu0 0.0
        %1804 = vmatpush1.xpose.msra.mxu0 0.0
        %1805 = vmatprep.subr.mxu0 0.0
        %1806 = vmatpush1.xpose.msra.mxu0 0.0
        %1807 = vmatprep.subr.mxu0 0.0
        %1808 = vmatpush1.xpose.msra.mxu0 0.0
        %1809 = vmatprep.subr.mxu0 0.0
        %1810 = vmatpush1.xpose.msra.mxu0 0.0
        %1811 = vmatprep.subr.mxu0 0.0
        %1812 = vmatpush1.xpose.msra.mxu0 0.0
        %1813 = vmatprep.subr.mxu0 0.0
        %1814 = vmatpush1.xpose.msra.mxu0 0.0
        %1815 = vmatprep.subr.mxu0 0.0
        %1816 = vmatpush1.xpose.msra.mxu0 0.0
        %1817 = vmatprep.subr.mxu0 0.0
        %1818 = vmatpush1.xpose.msra.mxu0 0.0
        %1819 = vmatprep.subr.mxu0 0.0
        %1820 = vmatpush1.xpose.msra.mxu0 %v1787
        %1821 = vmatprep.subr.mxu0 0.0
        %1822 = vmatpush2.xpose.msra.mxu0 0.0
        %1823 = vmatprep.subr.mxu0 0.0
        %1824 = vmatpush2.xpose.msra.mxu0 0.0
        %1825 = vmatprep.subr.mxu0 0.0
        %1826 = vmatpush2.xpose.msra.mxu0 0.0
        %1827 = vmatprep.subr.mxu0 0.0
        %1828 = vmatpush2.xpose.msra.mxu0 0.0
        %1829 = vmatprep.subr.mxu0 0.0
        %1830 = vmatpush2.xpose.msra.mxu0 0.0
        %1831 = vmatprep.subr.mxu0 0.0
        %1832 = vmatpush2.xpose.msra.mxu0 0.0
        %1833 = vmatprep.subr.mxu0 0.0
        %1834 = vmatpush2.xpose.msra.mxu0 0.0
        %1835 = vmatprep.subr.mxu0 0.0
        %1836 = vmatpush2.xpose.msra.mxu0 0.0
        %1837 = vmatprep.subr.mxu0 0.0
        %1838 = vmatpush2.xpose.msra.mxu0 0.0
        %1839 = vmatprep.subr.mxu0 0.0
        %1840 = vmatpush2.xpose.msra.mxu0 0.0
        %1841 = vmatprep.subr.mxu0 0.0
        %1842 = vmatpush2.xpose.msra.mxu0 0.0
        %1843 = vmatprep.subr.mxu0 0.0
        %1844 = vmatpush2.xpose.msra.mxu0 0.0
        %1845 = vmatprep.subr.mxu0 0.0
        %1846 = vmatpush2.xpose.msra.mxu0 0.0
        %1847 = vmatprep.subr.mxu0 0.0
        %1848 = vmatpush2.xpose.msra.mxu0 0.0
        %1849 = vmatprep.subr.mxu0 0.0
        %1850 = vmatpush2.xpose.msra.mxu0 0.0
        %1851 = vmatprep.subr.mxu0 0.0
        %1852 = vmatpush2.xpose.msra.mxu0 0.0
        %1853 = vmatprep.mubr.f32.mxu0 0.0
        %1854 = vmatmul.mubr.f32.gmra.mxu0 %v1785
        %v1855 = vpop.f32.mrf.mxu0
        %v1856 = vadd.f32 %v1120, %v1855
        %v1857 = vpop.f32.mrf.mxu0
        %1858 = vdwg.mxu0
        %1859 = vrot.lane.b32.xlu0 %v1112, 64
        %v1860 = vpop.permute.xlu0 %1859
        %1861 = vrot.lane.b32.xlu0 %v1068, 64
        %v1862 = vpop.permute.xlu0 %1861
        %v1863 = vsel %vm1127, %v1860, 0
        %v1865 = vsel %vm1127, %v1862, 0
        %1867 = vmatprep.subr.mxu0 0.0
        %1868 = vmatpush1.xpose.msra.mxu0 0.0
        %1869 = vmatprep.subr.mxu0 0.0
        %1870 = vmatpush1.xpose.msra.mxu0 0.0
        %1871 = vmatprep.subr.mxu0 0.0
        %1872 = vmatpush1.xpose.msra.mxu0 0.0
        %1873 = vmatprep.subr.mxu0 0.0
        %1874 = vmatpush1.xpose.msra.mxu0 0.0
        %1875 = vmatprep.subr.mxu0 0.0
        %1876 = vmatpush1.xpose.msra.mxu0 0.0
        %1877 = vmatprep.subr.mxu0 0.0
        %1878 = vmatpush1.xpose.msra.mxu0 0.0
        %1879 = vmatprep.subr.mxu0 0.0
        %1880 = vmatpush1.xpose.msra.mxu0 0.0
        %1881 = vmatprep.subr.mxu0 0.0
        %1882 = vmatpush1.xpose.msra.mxu0 0.0
        %1883 = vmatprep.subr.mxu0 0.0
        %1884 = vmatpush1.xpose.msra.mxu0 0.0
        %1885 = vmatprep.subr.mxu0 0.0
        %1886 = vmatpush1.xpose.msra.mxu0 0.0
        %1887 = vmatprep.subr.mxu0 0.0
        %1888 = vmatpush1.xpose.msra.mxu0 0.0
        %1889 = vmatprep.subr.mxu0 0.0
        %1890 = vmatpush1.xpose.msra.mxu0 0.0
        %1891 = vmatprep.subr.mxu0 0.0
        %1892 = vmatpush1.xpose.msra.mxu0 0.0
        %1893 = vmatprep.subr.mxu0 0.0
        %1894 = vmatpush1.xpose.msra.mxu0 0.0
        %1895 = vmatprep.subr.mxu0 0.0
        %1896 = vmatpush1.xpose.msra.mxu0 0.0
        %1897 = vmatprep.subr.mxu0 0.0
        %1898 = vmatpush1.xpose.msra.mxu0 %v1865
        %1899 = vmatprep.subr.mxu0 0.0
        %1900 = vmatpush2.xpose.msra.mxu0 0.0
        %1901 = vmatprep.subr.mxu0 0.0
        %1902 = vmatpush2.xpose.msra.mxu0 0.0
        %1903 = vmatprep.subr.mxu0 0.0
        %1904 = vmatpush2.xpose.msra.mxu0 0.0
        %1905 = vmatprep.subr.mxu0 0.0
        %1906 = vmatpush2.xpose.msra.mxu0 0.0
        %1907 = vmatprep.subr.mxu0 0.0
        %1908 = vmatpush2.xpose.msra.mxu0 0.0
        %1909 = vmatprep.subr.mxu0 0.0
        %1910 = vmatpush2.xpose.msra.mxu0 0.0
        %1911 = vmatprep.subr.mxu0 0.0
        %1912 = vmatpush2.xpose.msra.mxu0 0.0
        %1913 = vmatprep.subr.mxu0 0.0
        %1914 = vmatpush2.xpose.msra.mxu0 0.0
        %1915 = vmatprep.subr.mxu0 0.0
        %1916 = vmatpush2.xpose.msra.mxu0 0.0
        %1917 = vmatprep.subr.mxu0 0.0
        %1918 = vmatpush2.xpose.msra.mxu0 0.0
        %1919 = vmatprep.subr.mxu0 0.0
        %1920 = vmatpush2.xpose.msra.mxu0 0.0
        %1921 = vmatprep.subr.mxu0 0.0
        %1922 = vmatpush2.xpose.msra.mxu0 0.0
        %1923 = vmatprep.subr.mxu0 0.0
        %1924 = vmatpush2.xpose.msra.mxu0 0.0
        %1925 = vmatprep.subr.mxu0 0.0
        %1926 = vmatpush2.xpose.msra.mxu0 0.0
        %1927 = vmatprep.subr.mxu0 0.0
        %1928 = vmatpush2.xpose.msra.mxu0 0.0
        %1929 = vmatprep.subr.mxu0 0.0
        %1930 = vmatpush2.xpose.msra.mxu0 0.0
        %1931 = vmatprep.mubr.f32.mxu0 0.0
        %1932 = vmatmul.mubr.f32.gmra.mxu0 %v1863
        %v1933 = vpop.f32.mrf.mxu0
        %v1934 = vadd.f32 %v1124, %v1933
        %v1935 = vpop.f32.mrf.mxu0
        %1936 = vdwg.mxu0
        %v1937 = vsel %vm1280, %v1856, -inf
        %1938 = vmax.xlane.f32.xlu0 %v1937
        %v1939 = vpop.xlane.xlu0 %1938
        %v1940 = vsel %vm1280, %v1934, -inf
        %1941 = vmax.xlane.f32.xlu0 %v1940
        %v1942 = vpop.xlane.xlu0 %1941
        %v1943 = vsub.f32 %v1856, %v1939
        %v1944 = vsub.f32 %v1934, %v1942
        %v1945 = vmul.f32 %v1943, 1.442695
        %v1946 = vpow.pop %v1945
        %v1947 = vmul.f32 %v1944, 1.442695
        %v1948 = vpow.pop %v1947
        %v1949 = vsel %vm1280, %v1946, 0.0
        %1950 = vadd.xlane.f32.xlu0 %v1949
        %v1951 = vpop.xlane.xlu0 %1950
        %v1952 = vsel %vm1280, %v1948, 0.0
        %1953 = vadd.xlane.f32.xlu0 %v1952
        %v1954 = vpop.xlane.xlu0 %1953
        %v1955 = vrcp.pop %v1951
        %v1956 = vrcp.pop %v1954
        %v1957 = vmul.f32 %v1946, %v1955
        %v1958 = vmul.f32 %v1948, %v1956
        %1959 = vrot.lane.b32.xlu0 %v1105, 64
        %v1960 = vpop.permute.xlu0 %1959
        %v1963 = vsel %vm1280, %v1957, 0
        %1965 = vmatprep.subr.mxu0 0.0
        %1966 = vmatpush1.msra.mxu0 0.0
        %1967 = vmatprep.subr.mxu0 0.0
        %1968 = vmatpush1.msra.mxu0 0.0
        %1969 = vmatprep.subr.mxu0 0.0
        %1970 = vmatpush1.msra.mxu0 0.0
        %1971 = vmatprep.subr.mxu0 0.0
        %1972 = vmatpush1.msra.mxu0 0.0
        %1973 = vmatprep.subr.mxu0 0.0
        %1974 = vmatpush1.msra.mxu0 0.0
        %1975 = vmatprep.subr.mxu0 0.0
        %1976 = vmatpush1.msra.mxu0 0.0
        %1977 = vmatprep.subr.mxu0 0.0
        %1978 = vmatpush1.msra.mxu0 0.0
        %1979 = vmatprep.subr.mxu0 0.0
        %1980 = vmatpush1.msra.mxu0 0.0
        %1981 = vmatprep.subr.mxu0 0.0
        %1982 = vmatpush1.msra.mxu0 0.0
        %1983 = vmatprep.subr.mxu0 0.0
        %1984 = vmatpush1.msra.mxu0 0.0
        %1985 = vmatprep.subr.mxu0 0.0
        %1986 = vmatpush1.msra.mxu0 0.0
        %1987 = vmatprep.subr.mxu0 0.0
        %1988 = vmatpush1.msra.mxu0 0.0
        %1989 = vmatprep.subr.mxu0 0.0
        %1990 = vmatpush1.msra.mxu0 0.0
        %1991 = vmatprep.subr.mxu0 0.0
        %1992 = vmatpush1.msra.mxu0 0.0
        %1993 = vmatprep.subr.mxu0 0.0
        %1994 = vmatpush1.msra.mxu0 0.0
        %1995 = vmatprep.subr.mxu0 0.0
        %1996 = vmatpush1.msra.mxu0 %v1960
        %1997 = vmatprep.subr.mxu0 0.0
        %1998 = vmatpush2.msra.mxu0 0.0
        %1999 = vmatprep.subr.mxu0 0.0
        %2000 = vmatpush2.msra.mxu0 0.0
        %2001 = vmatprep.subr.mxu0 0.0
        %2002 = vmatpush2.msra.mxu0 0.0
        %2003 = vmatprep.subr.mxu0 0.0
        %2004 = vmatpush2.msra.mxu0 0.0
        %2005 = vmatprep.subr.mxu0 0.0
        %2006 = vmatpush2.msra.mxu0 0.0
        %2007 = vmatprep.subr.mxu0 0.0
        %2008 = vmatpush2.msra.mxu0 0.0
        %2009 = vmatprep.subr.mxu0 0.0
        %2010 = vmatpush2.msra.mxu0 0.0
        %2011 = vmatprep.subr.mxu0 0.0
        %2012 = vmatpush2.msra.mxu0 0.0
        %2013 = vmatprep.subr.mxu0 0.0
        %2014 = vmatpush2.msra.mxu0 0.0
        %2015 = vmatprep.subr.mxu0 0.0
        %2016 = vmatpush2.msra.mxu0 0.0
        %2017 = vmatprep.subr.mxu0 0.0
        %2018 = vmatpush2.msra.mxu0 0.0
        %2019 = vmatprep.subr.mxu0 0.0
        %2020 = vmatpush2.msra.mxu0 0.0
        %2021 = vmatprep.subr.mxu0 0.0
        %2022 = vmatpush2.msra.mxu0 0.0
        %2023 = vmatprep.subr.mxu0 0.0
        %2024 = vmatpush2.msra.mxu0 0.0
        %2025 = vmatprep.subr.mxu0 0.0
        %2026 = vmatpush2.msra.mxu0 0.0
        %2027 = vmatprep.subr.mxu0 0.0
        %2028 = vmatpush2.msra.mxu0 0.0
        %2029 = vmatprep.mubr.f32.mxu0 0.0
        %2030 = vmatmul.mubr.f32.gmra.mxu0 %v1963
        %v2031 = vpop.f32.mrf.mxu0
        %v2032 = vadd.f32 0.0, %v2031
        %v2033 = vpop.f32.mrf.mxu0
        %2034 = vdwg.mxu0
        %2035 = vrot.lane.b32.xlu0 %v1108, 64
        %v2036 = vpop.permute.xlu0 %2035
        %v2039 = vsel %vm1280, %v1958, 0
        %2041 = vmatprep.subr.mxu0 0.0
        %2042 = vmatpush1.msra.mxu0 0.0
        %2043 = vmatprep.subr.mxu0 0.0
        %2044 = vmatpush1.msra.mxu0 0.0
        %2045 = vmatprep.subr.mxu0 0.0
        %2046 = vmatpush1.msra.mxu0 0.0
        %2047 = vmatprep.subr.mxu0 0.0
        %2048 = vmatpush1.msra.mxu0 0.0
        %2049 = vmatprep.subr.mxu0 0.0
        %2050 = vmatpush1.msra.mxu0 0.0
        %2051 = vmatprep.subr.mxu0 0.0
        %2052 = vmatpush1.msra.mxu0 0.0
        %2053 = vmatprep.subr.mxu0 0.0
        %2054 = vmatpush1.msra.mxu0 0.0
        %2055 = vmatprep.subr.mxu0 0.0
        %2056 = vmatpush1.msra.mxu0 0.0
        %2057 = vmatprep.subr.mxu0 0.0
        %2058 = vmatpush1.msra.mxu0 0.0
        %2059 = vmatprep.subr.mxu0 0.0
        %2060 = vmatpush1.msra.mxu0 0.0
        %2061 = vmatprep.subr.mxu0 0.0
        %2062 = vmatpush1.msra.mxu0 0.0
        %2063 = vmatprep.subr.mxu0 0.0
        %2064 = vmatpush1.msra.mxu0 0.0
        %2065 = vmatprep.subr.mxu0 0.0
        %2066 = vmatpush1.msra.mxu0 0.0
        %2067 = vmatprep.subr.mxu0 0.0
        %2068 = vmatpush1.msra.mxu0 0.0
        %2069 = vmatprep.subr.mxu0 0.0
        %2070 = vmatpush1.msra.mxu0 0.0
        %2071 = vmatprep.subr.mxu0 0.0
        %2072 = vmatpush1.msra.mxu0 %v2036
        %2073 = vmatprep.subr.mxu0 0.0
        %2074 = vmatpush2.msra.mxu0 0.0
        %2075 = vmatprep.subr.mxu0 0.0
        %2076 = vmatpush2.msra.mxu0 0.0
        %2077 = vmatprep.subr.mxu0 0.0
        %2078 = vmatpush2.msra.mxu0 0.0
        %2079 = vmatprep.subr.mxu0 0.0
        %2080 = vmatpush2.msra.mxu0 0.0
        %2081 = vmatprep.subr.mxu0 0.0
        %2082 = vmatpush2.msra.mxu0 0.0
        %2083 = vmatprep.subr.mxu0 0.0
        %2084 = vmatpush2.msra.mxu0 0.0
        %2085 = vmatprep.subr.mxu0 0.0
        %2086 = vmatpush2.msra.mxu0 0.0
        %2087 = vmatprep.subr.mxu0 0.0
        %2088 = vmatpush2.msra.mxu0 0.0
        %2089 = vmatprep.subr.mxu0 0.0
        %2090 = vmatpush2.msra.mxu0 0.0
        %2091 = vmatprep.subr.mxu0 0.0
        %2092 = vmatpush2.msra.mxu0 0.0
        %2093 = vmatprep.subr.mxu0 0.0
        %2094 = vmatpush2.msra.mxu0 0.0
        %2095 = vmatprep.subr.mxu0 0.0
        %2096 = vmatpush2.msra.mxu0 0.0
        %2097 = vmatprep.subr.mxu0 0.0
        %2098 = vmatpush2.msra.mxu0 0.0
        %2099 = vmatprep.subr.mxu0 0.0
        %2100 = vmatpush2.msra.mxu0 0.0
        %2101 = vmatprep.subr.mxu0 0.0
        %2102 = vmatpush2.msra.mxu0 0.0
        %2103 = vmatprep.subr.mxu0 0.0
        %2104 = vmatpush2.msra.mxu0 0.0
        %2105 = vmatprep.mubr.f32.mxu0 0.0
        %2106 = vmatmul.mubr.f32.gmra.mxu0 %v2039
        %v2107 = vpop.f32.mrf.mxu0
        %v2108 = vadd.f32 0.0, %v2107
        %v2109 = vpop.f32.mrf.mxu0
        %2110 = vdwg.mxu0
        %2111 = vrot.lane.b32.xlu0 %v1111, 32
        %v2112 = vpop.permute.xlu0 %2111
        %2113 = vrot.lane.b32.xlu0 %v1064, 32
        %v2114 = vpop.permute.xlu0 %2113
        %v2115 = vsel %vm1127, %v2112, 0
        %v2117 = vsel %vm1127, %v2114, 0
        %2119 = vmatprep.subr.mxu0 0.0
        %2120 = vmatpush1.xpose.msra.mxu0 0.0
        %2121 = vmatprep.subr.mxu0 0.0
        %2122 = vmatpush1.xpose.msra.mxu0 0.0
        %2123 = vmatprep.subr.mxu0 0.0
        %2124 = vmatpush1.xpose.msra.mxu0 0.0
        %2125 = vmatprep.subr.mxu0 0.0
        %2126 = vmatpush1.xpose.msra.mxu0 0.0
        %2127 = vmatprep.subr.mxu0 0.0
        %2128 = vmatpush1.xpose.msra.mxu0 0.0
        %2129 = vmatprep.subr.mxu0 0.0
        %2130 = vmatpush1.xpose.msra.mxu0 0.0
        %2131 = vmatprep.subr.mxu0 0.0
        %2132 = vmatpush1.xpose.msra.mxu0 0.0
        %2133 = vmatprep.subr.mxu0 0.0
        %2134 = vmatpush1.xpose.msra.mxu0 0.0
        %2135 = vmatprep.subr.mxu0 0.0
        %2136 = vmatpush1.xpose.msra.mxu0 0.0
        %2137 = vmatprep.subr.mxu0 0.0
        %2138 = vmatpush1.xpose.msra.mxu0 0.0
        %2139 = vmatprep.subr.mxu0 0.0
        %2140 = vmatpush1.xpose.msra.mxu0 0.0
        %2141 = vmatprep.subr.mxu0 0.0
        %2142 = vmatpush1.xpose.msra.mxu0 0.0
        %2143 = vmatprep.subr.mxu0 0.0
        %2144 = vmatpush1.xpose.msra.mxu0 0.0
        %2145 = vmatprep.subr.mxu0 0.0
        %2146 = vmatpush1.xpose.msra.mxu0 0.0
        %2147 = vmatprep.subr.mxu0 0.0
        %2148 = vmatpush1.xpose.msra.mxu0 0.0
        %2149 = vmatprep.subr.mxu0 0.0
        %2150 = vmatpush1.xpose.msra.mxu0 %v2117
        %2151 = vmatprep.subr.mxu0 0.0
        %2152 = vmatpush2.xpose.msra.mxu0 0.0
        %2153 = vmatprep.subr.mxu0 0.0
        %2154 = vmatpush2.xpose.msra.mxu0 0.0
        %2155 = vmatprep.subr.mxu0 0.0
        %2156 = vmatpush2.xpose.msra.mxu0 0.0
        %2157 = vmatprep.subr.mxu0 0.0
        %2158 = vmatpush2.xpose.msra.mxu0 0.0
        %2159 = vmatprep.subr.mxu0 0.0
        %2160 = vmatpush2.xpose.msra.mxu0 0.0
        %2161 = vmatprep.subr.mxu0 0.0
        %2162 = vmatpush2.xpose.msra.mxu0 0.0
        %2163 = vmatprep.subr.mxu0 0.0
        %2164 = vmatpush2.xpose.msra.mxu0 0.0
        %2165 = vmatprep.subr.mxu0 0.0
        %2166 = vmatpush2.xpose.msra.mxu0 0.0
        %2167 = vmatprep.subr.mxu0 0.0
        %2168 = vmatpush2.xpose.msra.mxu0 0.0
        %2169 = vmatprep.subr.mxu0 0.0
        %2170 = vmatpush2.xpose.msra.mxu0 0.0
        %2171 = vmatprep.subr.mxu0 0.0
        %2172 = vmatpush2.xpose.msra.mxu0 0.0
        %2173 = vmatprep.subr.mxu0 0.0
        %2174 = vmatpush2.xpose.msra.mxu0 0.0
        %2175 = vmatprep.subr.mxu0 0.0
        %2176 = vmatpush2.xpose.msra.mxu0 0.0
        %2177 = vmatprep.subr.mxu0 0.0
        %2178 = vmatpush2.xpose.msra.mxu0 0.0
        %2179 = vmatprep.subr.mxu0 0.0
        %2180 = vmatpush2.xpose.msra.mxu0 0.0
        %2181 = vmatprep.subr.mxu0 0.0
        %2182 = vmatpush2.xpose.msra.mxu0 0.0
        %2183 = vmatprep.mubr.f32.mxu0 0.0
        %2184 = vmatmul.mubr.f32.gmra.mxu0 %v2115
        %v2185 = vpop.f32.mrf.mxu0
        %v2186 = vadd.f32 %v1120, %v2185
        %v2187 = vpop.f32.mrf.mxu0
        %2188 = vdwg.mxu0
        %2189 = vrot.lane.b32.xlu0 %v1112, 32
        %v2190 = vpop.permute.xlu0 %2189
        %2191 = vrot.lane.b32.xlu0 %v1068, 32
        %v2192 = vpop.permute.xlu0 %2191
        %v2193 = vsel %vm1127, %v2190, 0
        %v2195 = vsel %vm1127, %v2192, 0
        %2197 = vmatprep.subr.mxu0 0.0
        %2198 = vmatpush1.xpose.msra.mxu0 0.0
        %2199 = vmatprep.subr.mxu0 0.0
        %2200 = vmatpush1.xpose.msra.mxu0 0.0
        %2201 = vmatprep.subr.mxu0 0.0
        %2202 = vmatpush1.xpose.msra.mxu0 0.0
        %2203 = vmatprep.subr.mxu0 0.0
        %2204 = vmatpush1.xpose.msra.mxu0 0.0
        %2205 = vmatprep.subr.mxu0 0.0
        %2206 = vmatpush1.xpose.msra.mxu0 0.0
        %2207 = vmatprep.subr.mxu0 0.0
        %2208 = vmatpush1.xpose.msra.mxu0 0.0
        %2209 = vmatprep.subr.mxu0 0.0
        %2210 = vmatpush1.xpose.msra.mxu0 0.0
        %2211 = vmatprep.subr.mxu0 0.0
        %2212 = vmatpush1.xpose.msra.mxu0 0.0
        %2213 = vmatprep.subr.mxu0 0.0
        %2214 = vmatpush1.xpose.msra.mxu0 0.0
        %2215 = vmatprep.subr.mxu0 0.0
        %2216 = vmatpush1.xpose.msra.mxu0 0.0
        %2217 = vmatprep.subr.mxu0 0.0
        %2218 = vmatpush1.xpose.msra.mxu0 0.0
        %2219 = vmatprep.subr.mxu0 0.0
        %2220 = vmatpush1.xpose.msra.mxu0 0.0
        %2221 = vmatprep.subr.mxu0 0.0
        %2222 = vmatpush1.xpose.msra.mxu0 0.0
        %2223 = vmatprep.subr.mxu0 0.0
        %2224 = vmatpush1.xpose.msra.mxu0 0.0
        %2225 = vmatprep.subr.mxu0 0.0
        %2226 = vmatpush1.xpose.msra.mxu0 0.0
        %2227 = vmatprep.subr.mxu0 0.0
        %2228 = vmatpush1.xpose.msra.mxu0 %v2195
        %2229 = vmatprep.subr.mxu0 0.0
        %2230 = vmatpush2.xpose.msra.mxu0 0.0
        %2231 = vmatprep.subr.mxu0 0.0
        %2232 = vmatpush2.xpose.msra.mxu0 0.0
        %2233 = vmatprep.subr.mxu0 0.0
        %2234 = vmatpush2.xpose.msra.mxu0 0.0
        %2235 = vmatprep.subr.mxu0 0.0
        %2236 = vmatpush2.xpose.msra.mxu0 0.0
        %2237 = vmatprep.subr.mxu0 0.0
        %2238 = vmatpush2.xpose.msra.mxu0 0.0
        %2239 = vmatprep.subr.mxu0 0.0
        %2240 = vmatpush2.xpose.msra.mxu0 0.0
        %2241 = vmatprep.subr.mxu0 0.0
        %2242 = vmatpush2.xpose.msra.mxu0 0.0
        %2243 = vmatprep.subr.mxu0 0.0
        %2244 = vmatpush2.xpose.msra.mxu0 0.0
        %2245 = vmatprep.subr.mxu0 0.0
        %2246 = vmatpush2.xpose.msra.mxu0 0.0
        %2247 = vmatprep.subr.mxu0 0.0
        %2248 = vmatpush2.xpose.msra.mxu0 0.0
        %2249 = vmatprep.subr.mxu0 0.0
        %2250 = vmatpush2.xpose.msra.mxu0 0.0
        %2251 = vmatprep.subr.mxu0 0.0
        %2252 = vmatpush2.xpose.msra.mxu0 0.0
        %2253 = vmatprep.subr.mxu0 0.0
        %2254 = vmatpush2.xpose.msra.mxu0 0.0
        %2255 = vmatprep.subr.mxu0 0.0
        %2256 = vmatpush2.xpose.msra.mxu0 0.0
        %2257 = vmatprep.subr.mxu0 0.0
        %2258 = vmatpush2.xpose.msra.mxu0 0.0
        %2259 = vmatprep.subr.mxu0 0.0
        %2260 = vmatpush2.xpose.msra.mxu0 0.0
        %2261 = vmatprep.mubr.f32.mxu0 0.0
        %2262 = vmatmul.mubr.f32.gmra.mxu0 %v2193
        %v2263 = vpop.f32.mrf.mxu0
        %v2264 = vadd.f32 %v1124, %v2263
        %v2265 = vpop.f32.mrf.mxu0
        %2266 = vdwg.mxu0
        %v2267 = vsel %vm1280, %v2186, -inf
        %2268 = vmax.xlane.f32.xlu0 %v2267
        %v2269 = vpop.xlane.xlu0 %2268
        %v2270 = vsel %vm1280, %v2264, -inf
        %2271 = vmax.xlane.f32.xlu0 %v2270
        %v2272 = vpop.xlane.xlu0 %2271
        %v2273 = vsub.f32 %v2186, %v2269
        %v2274 = vsub.f32 %v2264, %v2272
        %v2275 = vmul.f32 %v2273, 1.442695
        %v2276 = vpow.pop %v2275
        %v2277 = vmul.f32 %v2274, 1.442695
        %v2278 = vpow.pop %v2277
        %v2279 = vsel %vm1280, %v2276, 0.0
        %2280 = vadd.xlane.f32.xlu0 %v2279
        %v2281 = vpop.xlane.xlu0 %2280
        %v2282 = vsel %vm1280, %v2278, 0.0
        %2283 = vadd.xlane.f32.xlu0 %v2282
        %v2284 = vpop.xlane.xlu0 %2283
        %v2285 = vrcp.pop %v2281
        %v2286 = vrcp.pop %v2284
        %v2287 = vmul.f32 %v2276, %v2285
        %v2288 = vmul.f32 %v2278, %v2286
        %2289 = vrot.lane.b32.xlu0 %v1105, 32
        %v2290 = vpop.permute.xlu0 %2289
        %v2293 = vsel %vm1280, %v2287, 0
        %2295 = vmatprep.subr.mxu0 0.0
        %2296 = vmatpush1.msra.mxu0 0.0
        %2297 = vmatprep.subr.mxu0 0.0
        %2298 = vmatpush1.msra.mxu0 0.0
        %2299 = vmatprep.subr.mxu0 0.0
        %2300 = vmatpush1.msra.mxu0 0.0
        %2301 = vmatprep.subr.mxu0 0.0
        %2302 = vmatpush1.msra.mxu0 0.0
        %2303 = vmatprep.subr.mxu0 0.0
        %2304 = vmatpush1.msra.mxu0 0.0
        %2305 = vmatprep.subr.mxu0 0.0
        %2306 = vmatpush1.msra.mxu0 0.0
        %2307 = vmatprep.subr.mxu0 0.0
        %2308 = vmatpush1.msra.mxu0 0.0
        %2309 = vmatprep.subr.mxu0 0.0
        %2310 = vmatpush1.msra.mxu0 0.0
        %2311 = vmatprep.subr.mxu0 0.0
        %2312 = vmatpush1.msra.mxu0 0.0
        %2313 = vmatprep.subr.mxu0 0.0
        %2314 = vmatpush1.msra.mxu0 0.0
        %2315 = vmatprep.subr.mxu0 0.0
        %2316 = vmatpush1.msra.mxu0 0.0
        %2317 = vmatprep.subr.mxu0 0.0
        %2318 = vmatpush1.msra.mxu0 0.0
        %2319 = vmatprep.subr.mxu0 0.0
        %2320 = vmatpush1.msra.mxu0 0.0
        %2321 = vmatprep.subr.mxu0 0.0
        %2322 = vmatpush1.msra.mxu0 0.0
        %2323 = vmatprep.subr.mxu0 0.0
        %2324 = vmatpush1.msra.mxu0 0.0
        %2325 = vmatprep.subr.mxu0 0.0
        %2326 = vmatpush1.msra.mxu0 %v2290
        %2327 = vmatprep.subr.mxu0 0.0
        %2328 = vmatpush2.msra.mxu0 0.0
        %2329 = vmatprep.subr.mxu0 0.0
        %2330 = vmatpush2.msra.mxu0 0.0
        %2331 = vmatprep.subr.mxu0 0.0
        %2332 = vmatpush2.msra.mxu0 0.0
        %2333 = vmatprep.subr.mxu0 0.0
        %2334 = vmatpush2.msra.mxu0 0.0
        %2335 = vmatprep.subr.mxu0 0.0
        %2336 = vmatpush2.msra.mxu0 0.0
        %2337 = vmatprep.subr.mxu0 0.0
        %2338 = vmatpush2.msra.mxu0 0.0
        %2339 = vmatprep.subr.mxu0 0.0
        %2340 = vmatpush2.msra.mxu0 0.0
        %2341 = vmatprep.subr.mxu0 0.0
        %2342 = vmatpush2.msra.mxu0 0.0
        %2343 = vmatprep.subr.mxu0 0.0
        %2344 = vmatpush2.msra.mxu0 0.0
        %2345 = vmatprep.subr.mxu0 0.0
        %2346 = vmatpush2.msra.mxu0 0.0
        %2347 = vmatprep.subr.mxu0 0.0
        %2348 = vmatpush2.msra.mxu0 0.0
        %2349 = vmatprep.subr.mxu0 0.0
        %2350 = vmatpush2.msra.mxu0 0.0
        %2351 = vmatprep.subr.mxu0 0.0
        %2352 = vmatpush2.msra.mxu0 0.0
        %2353 = vmatprep.subr.mxu0 0.0
        %2354 = vmatpush2.msra.mxu0 0.0
        %2355 = vmatprep.subr.mxu0 0.0
        %2356 = vmatpush2.msra.mxu0 0.0
        %2357 = vmatprep.subr.mxu0 0.0
        %2358 = vmatpush2.msra.mxu0 0.0
        %2359 = vmatprep.mubr.f32.mxu0 0.0
        %2360 = vmatmul.mubr.f32.gmra.mxu0 %v2293
        %v2361 = vpop.f32.mrf.mxu0
        %v2362 = vadd.f32 0.0, %v2361
        %v2363 = vpop.f32.mrf.mxu0
        %2364 = vdwg.mxu0
        %2365 = vrot.lane.b32.xlu0 %v1108, 32
        %v2366 = vpop.permute.xlu0 %2365
        %v2369 = vsel %vm1280, %v2288, 0
        %2371 = vmatprep.subr.mxu0 0.0
        %2372 = vmatpush1.msra.mxu0 0.0
        %2373 = vmatprep.subr.mxu0 0.0
        %2374 = vmatpush1.msra.mxu0 0.0
        %2375 = vmatprep.subr.mxu0 0.0
        %2376 = vmatpush1.msra.mxu0 0.0
        %2377 = vmatprep.subr.mxu0 0.0
        %2378 = vmatpush1.msra.mxu0 0.0
        %2379 = vmatprep.subr.mxu0 0.0
        %2380 = vmatpush1.msra.mxu0 0.0
        %2381 = vmatprep.subr.mxu0 0.0
        %2382 = vmatpush1.msra.mxu0 0.0
        %2383 = vmatprep.subr.mxu0 0.0
        %2384 = vmatpush1.msra.mxu0 0.0
        %2385 = vmatprep.subr.mxu0 0.0
        %2386 = vmatpush1.msra.mxu0 0.0
        %2387 = vmatprep.subr.mxu0 0.0
        %2388 = vmatpush1.msra.mxu0 0.0
        %2389 = vmatprep.subr.mxu0 0.0
        %2390 = vmatpush1.msra.mxu0 0.0
        %2391 = vmatprep.subr.mxu0 0.0
        %2392 = vmatpush1.msra.mxu0 0.0
        %2393 = vmatprep.subr.mxu0 0.0
        %2394 = vmatpush1.msra.mxu0 0.0
        %2395 = vmatprep.subr.mxu0 0.0
        %2396 = vmatpush1.msra.mxu0 0.0
        %2397 = vmatprep.subr.mxu0 0.0
        %2398 = vmatpush1.msra.mxu0 0.0
        %2399 = vmatprep.subr.mxu0 0.0
        %2400 = vmatpush1.msra.mxu0 0.0
        %2401 = vmatprep.subr.mxu0 0.0
        %2402 = vmatpush1.msra.mxu0 %v2366
        %2403 = vmatprep.subr.mxu0 0.0
        %2404 = vmatpush2.msra.mxu0 0.0
        %2405 = vmatprep.subr.mxu0 0.0
        %2406 = vmatpush2.msra.mxu0 0.0
        %2407 = vmatprep.subr.mxu0 0.0
        %2408 = vmatpush2.msra.mxu0 0.0
        %2409 = vmatprep.subr.mxu0 0.0
        %2410 = vmatpush2.msra.mxu0 0.0
        %2411 = vmatprep.subr.mxu0 0.0
        %2412 = vmatpush2.msra.mxu0 0.0
        %2413 = vmatprep.subr.mxu0 0.0
        %2414 = vmatpush2.msra.mxu0 0.0
        %2415 = vmatprep.subr.mxu0 0.0
        %2416 = vmatpush2.msra.mxu0 0.0
        %2417 = vmatprep.subr.mxu0 0.0
        %2418 = vmatpush2.msra.mxu0 0.0
        %2419 = vmatprep.subr.mxu0 0.0
        %2420 = vmatpush2.msra.mxu0 0.0
        %2421 = vmatprep.subr.mxu0 0.0
        %2422 = vmatpush2.msra.mxu0 0.0
        %2423 = vmatprep.subr.mxu0 0.0
        %2424 = vmatpush2.msra.mxu0 0.0
        %2425 = vmatprep.subr.mxu0 0.0
        %2426 = vmatpush2.msra.mxu0 0.0
        %2427 = vmatprep.subr.mxu0 0.0
        %2428 = vmatpush2.msra.mxu0 0.0
        %2429 = vmatprep.subr.mxu0 0.0
        %2430 = vmatpush2.msra.mxu0 0.0
        %2431 = vmatprep.subr.mxu0 0.0
        %2432 = vmatpush2.msra.mxu0 0.0
        %2433 = vmatprep.subr.mxu0 0.0
        %2434 = vmatpush2.msra.mxu0 0.0
        %2435 = vmatprep.mubr.f32.mxu0 0.0
        %2436 = vmatmul.mubr.f32.gmra.mxu0 %v2369
        %v2437 = vpop.f32.mrf.mxu0
        %v2438 = vadd.f32 0.0, %v2437
        %v2439 = vpop.f32.mrf.mxu0
        %2440 = vdwg.mxu0
        %2443 = vrot.lane.b32.xlu0 %v1701, 32
        %v2444 = vpop.permute.xlu0 %2443
        %2445 = vrot.lane.b32.xlu0 %v1778, 32
        %v2446 = vpop.permute.xlu0 %2445
        %2451 = vrot.lane.b32.xlu0 %v2032, 64
        %v2452 = vpop.permute.xlu0 %2451
        %2453 = vrot.lane.b32.xlu0 %v2108, 64
        %v2454 = vpop.permute.xlu0 %2453
        %2459 = vrot.lane.b32.xlu0 %v2362, 96
        %v2460 = vpop.permute.xlu0 %2459
        %2461 = vrot.lane.b32.xlu0 %v2438, 96
        %v2462 = vpop.permute.xlu0 %2461
        %v2465 = vsel %vm1127, %v1373, %v2444
        %v2466 = vsel %vm1127, %v1446, %v2446
        %vm2467 = vcmask 523264
        %v2468 = vsel %vm2467, %v2465, %v2452
        %v2469 = vsel %vm2467, %v2466, %v2454
        %vm2470 = vcmask 785408
        %v2471 = vsel %vm2470, %v2468, %v2460
        %v2472 = vsel %vm2470, %v2469, %v2462
        %v2473 = vpack.c.bf16 %v2472, %v2471
        %v2474 = vld [vmem:[%s659] sm:$0xf]
        %v2475 = vld [vmem:[%s659 + $0x4] sm:$0xf]
        %v2476 = vld [vmem:[%s659 + $0x8] sm:$0xf]
        %v2477 = vld [vmem:[%s659 + $0xc] sm:$0xf]
        %v2478 = vld [vmem:[%s659 + $0x10] sm:$0xf]
        %v2479 = vld [vmem:[%s659 + $0x14] sm:$0xf]
        %v2480 = vld [vmem:[%s659 + $0x18] sm:$0xf]
        %v2481 = vld [vmem:[%s659 + $0x1c] sm:$0xf]
        %v2482 = vld [vmem:[%s659 + $0x20] sm:$0xf]
        %v2483 = vld [vmem:[%s659 + $0x24] sm:$0xf]
        %v2484 = vld [vmem:[%s659 + $0x28] sm:$0xf]
        %v2485 = vld [vmem:[%s659 + $0x2c] sm:$0xf]
        %v2486 = vld [vmem:[%s659 + $0x30] sm:$0xf]
        %v2487 = vld [vmem:[%s659 + $0x34] sm:$0xf]
        %v2488 = vld [vmem:[%s659 + $0x38] sm:$0xf]
        %v2489 = vld [vmem:[%s659 + $0x3c] sm:$0xf]
        %v2490 = vld [vmem:[%s777] sm:$0x1]
        %v2492 = vlaneseq
        %v2493 = vshrl.u32 %v2492, 7
        %v2494 = vsub.s32 0, %v2493
        %v2495 = vrot.slane %v2490, %v2494
        %v2513 = vunpack.c.l.b16 %v2474
        %v2514 = vunpack.c.l.b16 %v2475
        %v2515 = vunpack.c.l.b16 %v2476
        %v2516 = vunpack.c.l.b16 %v2477
        %v2517 = vunpack.c.l.b16 %v2478
        %v2518 = vunpack.c.l.b16 %v2479
        %v2519 = vunpack.c.l.b16 %v2480
        %v2520 = vunpack.c.l.b16 %v2481
        %v2521 = vunpack.c.l.b16 %v2482
        %v2522 = vunpack.c.l.b16 %v2483
        %v2523 = vunpack.c.l.b16 %v2484
        %v2524 = vunpack.c.l.b16 %v2485
        %v2525 = vunpack.c.l.b16 %v2486
        %v2526 = vunpack.c.l.b16 %v2487
        %v2527 = vunpack.c.l.b16 %v2488
        %v2528 = vunpack.c.l.b16 %v2489
        %v2529 = vpack.c.b16 %v2514, %v2513
        %v2530 = vpack.c.b16 %v2516, %v2515
        %v2531 = vpack.c.b16 %v2518, %v2517
        %v2532 = vpack.c.b16 %v2520, %v2519
        %v2533 = vpack.c.b16 %v2522, %v2521
        %v2534 = vpack.c.b16 %v2524, %v2523
        %v2535 = vpack.c.b16 %v2526, %v2525
        %v2536 = vpack.c.b16 %v2528, %v2527
        %2545 = vmatprep.subr.bf16.mxu0 0
        %2546 = vmatpush1.bf16.msra.mxu0 %v2536
        %2547 = vmatprep.subr.bf16.mxu0 0
        %2548 = vmatpush1.bf16.msra.mxu0 %v2535
        %2549 = vmatprep.subr.bf16.mxu0 0
        %2550 = vmatpush1.bf16.msra.mxu0 %v2534
        %2551 = vmatprep.subr.bf16.mxu0 0
        %2552 = vmatpush1.bf16.msra.mxu0 %v2533
        %2553 = vmatprep.subr.bf16.mxu0 0
        %2554 = vmatpush1.bf16.msra.mxu0 %v2532
        %2555 = vmatprep.subr.bf16.mxu0 0
        %2556 = vmatpush1.bf16.msra.mxu0 %v2531
        %2557 = vmatprep.subr.bf16.mxu0 0
        %2558 = vmatpush1.bf16.msra.mxu0 %v2530
        %2559 = vmatprep.subr.bf16.mxu0 0
        %2560 = vmatpush1.bf16.msra.mxu0 %v2529
        %2561 = vmatprep.subr.bf16.mxu0 0
        %2562 = vmatpush2.bf16.msra.mxu0 0
        %2563 = vmatprep.subr.bf16.mxu0 0
        %2564 = vmatpush2.bf16.msra.mxu0 0
        %2565 = vmatprep.subr.bf16.mxu0 0
        %2566 = vmatpush2.bf16.msra.mxu0 0
        %2567 = vmatprep.subr.bf16.mxu0 0
        %2568 = vmatpush2.bf16.msra.mxu0 0
        %2569 = vmatprep.subr.bf16.mxu0 0
        %2570 = vmatpush2.bf16.msra.mxu0 0
        %2571 = vmatprep.subr.bf16.mxu0 0
        %2572 = vmatpush2.bf16.msra.mxu0 0
        %2573 = vmatprep.subr.bf16.mxu0 0
        %2574 = vmatpush2.bf16.msra.mxu0 0
        %2575 = vmatprep.subr.bf16.mxu0 0
        %2576 = vmatpush2.bf16.msra.mxu0 0
        %2577 = vmatprep.mubr.bf16.mxu0 0
        %2578 = vmatmul.mubr.bf16.gmra.mxu0 %v2473
        %v2579 = vpop.f32.mrf.mxu0
        %v2580 = vadd.f32 %v2495, %v2579
        %v2581 = vpop.f32.mrf.mxu0
        %v2582 = vpop.f32.mrf.mxu0
        %v2583 = vadd.f32 %v2495, %v2582
        %v2584 = vpop.f32.mrf.mxu0
        %2585 = vdwg.mxu0
        %v2586 = vadd.f32 %v847, %v2580
        %v2587 = vadd.f32 %v848, %v2583
        %v2588 = vld [vmem:[%s780] sm:$0x1]
        %v2589 = vld [vmem:[%s783] sm:$0x1]
        %2590 = vadd.xlane.f32.xlu0 %v2586
        %v2591 = vpop.xlane.xlu0 %2590
        %2592 = vadd.xlane.f32.xlu0 %v2587
        %v2593 = vpop.xlane.xlu0 %2592
        %v2594 = vrcp.pop 128.0
        %v2595 = vmul.f32 %v2591, %v2594
        %v2596 = vmul.f32 %v2593, %v2594
        %v2597 = vsub.f32 %v2586, %v2595
        %v2598 = vsub.f32 %v2587, %v2596
        %v2599 = vmul.f32 %v2597, %v2597
        %v2600 = vmul.f32 %v2598, %v2598
        %2601 = vadd.xlane.f32.xlu0 %v2599
        %v2602 = vpop.xlane.xlu0 %2601
        %2603 = vadd.xlane.f32.xlu0 %v2600
        %v2604 = vpop.xlane.xlu0 %2603
        %v2605 = vmul.f32 %v2602, %v2594
        %v2606 = vmul.f32 %v2604, %v2594
        %v2607 = vadd.f32 %v2605, 1e-12
        %v2608 = vadd.f32 %v2606, 1e-12
        %v2609 = vrsqrt.pop %v2607
        %v2610 = vrsqrt.pop %v2608
        %v2611 = vmul.f32 %v2597, %v2609
        %v2612 = vmul.f32 %v2598, %v2610
        %v2614 = vlaneseq
        %v2615 = vshrl.u32 %v2614, 7
        %v2616 = vsub.s32 0, %v2615
        %v2617 = vrot.slane %v2588, %v2616
        %v2619 = vmul.f32 %v2611, %v2617
        %v2620 = vmul.f32 %v2612, %v2617
        %v2622 = vlaneseq
        %v2623 = vshrl.u32 %v2622, 7
        %v2624 = vsub.s32 0, %v2623
        %v2625 = vrot.slane %v2589, %v2624
        %v2627 = vadd.f32 %v2619, %v2625
        %v2628 = vadd.f32 %v2620, %v2625
        %v2629 = vpack.c.bf16 %v2628, %v2627
        %v2630 = vld [vmem:[%s668] sm:$0xff]
        %v2631 = vld [vmem:[%s668 + $0x8] sm:$0xff]
        %v2632 = vld [vmem:[%s668 + $0x10] sm:$0xff]
        %v2633 = vld [vmem:[%s668 + $0x18] sm:$0xff]
        %v2634 = vld [vmem:[%s668 + $0x20] sm:$0xff]
        %v2635 = vld [vmem:[%s668 + $0x28] sm:$0xff]
        %v2636 = vld [vmem:[%s668 + $0x30] sm:$0xff]
        %v2637 = vld [vmem:[%s668 + $0x38] sm:$0xff]
        %v2638 = vld [vmem:[%s668 + $0x40] sm:$0xff]
        %v2639 = vld [vmem:[%s668 + $0x48] sm:$0xff]
        %v2640 = vld [vmem:[%s668 + $0x50] sm:$0xff]
        %v2641 = vld [vmem:[%s668 + $0x58] sm:$0xff]
        %v2642 = vld [vmem:[%s668 + $0x60] sm:$0xff]
        %v2643 = vld [vmem:[%s668 + $0x68] sm:$0xff]
        %v2644 = vld [vmem:[%s668 + $0x70] sm:$0xff]
        %v2645 = vld [vmem:[%s668 + $0x78] sm:$0xff]
        %v2646 = vld [vmem:[%s668 + $0x80] sm:$0xff]
        %v2647 = vld [vmem:[%s668 + $0x88] sm:$0xff]
        %v2648 = vld [vmem:[%s668 + $0x90] sm:$0xff]
        %v2649 = vld [vmem:[%s668 + $0x98] sm:$0xff]
        %v2650 = vld [vmem:[%s668 + $0xa0] sm:$0xff]
        %v2651 = vld [vmem:[%s668 + $0xa8] sm:$0xff]
        %v2652 = vld [vmem:[%s668 + $0xb0] sm:$0xff]
        %v2653 = vld [vmem:[%s668 + $0xb8] sm:$0xff]
        %v2654 = vld [vmem:[%s668 + $0xc0] sm:$0xff]
        %v2655 = vld [vmem:[%s668 + $0xc8] sm:$0xff]
        %v2656 = vld [vmem:[%s668 + $0xd0] sm:$0xff]
        %v2657 = vld [vmem:[%s668 + $0xd8] sm:$0xff]
        %v2658 = vld [vmem:[%s668 + $0xe0] sm:$0xff]
        %v2659 = vld [vmem:[%s668 + $0xe8] sm:$0xff]
        %v2660 = vld [vmem:[%s668 + $0xf0] sm:$0xff]
        %v2661 = vld [vmem:[%s668 + $0xf8] sm:$0xff]
        %v2662 = vld [vmem:[%s787] sm:$0xf]
        %v2664 = vlaneseq
        %v2665 = vshrl.u32 %v2664, 7
        %v2666 = vsub.s32 0, %v2665
        %v2667 = vrot.slane %v2662, %v2666
        %v2668 = vlaneseq
        %v2669 = vshrl.u32 %v2668, 7
        %v2670 = vsub.s32 1, %v2669
        %v2671 = vrot.slane %v2662, %v2670
        %v2672 = vlaneseq
        %v2673 = vshrl.u32 %v2672, 7
        %v2674 = vsub.s32 2, %v2673
        %v2675 = vrot.slane %v2662, %v2674
        %v2676 = vlaneseq
        %v2677 = vshrl.u32 %v2676, 7
        %v2678 = vsub.s32 3, %v2677
        %v2679 = vrot.slane %v2662, %v2678
        %v2716 = vunpack.c.l.b16 %v2630
        %v2717 = vunpack.c.h.b16 %v2630
        %v2718 = vunpack.c.l.b16 %v2631
        %v2719 = vunpack.c.h.b16 %v2631
        %v2720 = vunpack.c.l.b16 %v2632
        %v2721 = vunpack.c.h.b16 %v2632
        %v2722 = vunpack.c.l.b16 %v2633
        %v2723 = vunpack.c.h.b16 %v2633
        %v2724 = vunpack.c.l.b16 %v2634
        %v2725 = vunpack.c.h.b16 %v2634
        %v2726 = vunpack.c.l.b16 %v2635
        %v2727 = vunpack.c.h.b16 %v2635
        %v2728 = vunpack.c.l.b16 %v2636
        %v2729 = vunpack.c.h.b16 %v2636
        %v2730 = vunpack.c.l.b16 %v2637
        %v2731 = vunpack.c.h.b16 %v2637
        %v2732 = vunpack.c.l.b16 %v2638
        %v2733 = vunpack.c.h.b16 %v2638
        %v2734 = vunpack.c.l.b16 %v2639
        %v2735 = vunpack.c.h.b16 %v2639
        %v2736 = vunpack.c.l.b16 %v2640
        %v2737 = vunpack.c.h.b16 %v2640
        %v2738 = vunpack.c.l.b16 %v2641
        %v2739 = vunpack.c.h.b16 %v2641
        %v2740 = vunpack.c.l.b16 %v2642
        %v2741 = vunpack.c.h.b16 %v2642
        %v2742 = vunpack.c.l.b16 %v2643
        %v2743 = vunpack.c.h.b16 %v2643
        %v2744 = vunpack.c.l.b16 %v2644
        %v2745 = vunpack.c.h.b16 %v2644
        %v2746 = vunpack.c.l.b16 %v2645
        %v2747 = vunpack.c.h.b16 %v2645
        %v2748 = vunpack.c.l.b16 %v2646
        %v2749 = vunpack.c.h.b16 %v2646
        %v2750 = vunpack.c.l.b16 %v2647
        %v2751 = vunpack.c.h.b16 %v2647
        %v2752 = vunpack.c.l.b16 %v2648
        %v2753 = vunpack.c.h.b16 %v2648
        %v2754 = vunpack.c.l.b16 %v2649
        %v2755 = vunpack.c.h.b16 %v2649
        %v2756 = vunpack.c.l.b16 %v2650
        %v2757 = vunpack.c.h.b16 %v2650
        %v2758 = vunpack.c.l.b16 %v2651
        %v2759 = vunpack.c.h.b16 %v2651
        %v2760 = vunpack.c.l.b16 %v2652
        %v2761 = vunpack.c.h.b16 %v2652
        %v2762 = vunpack.c.l.b16 %v2653
        %v2763 = vunpack.c.h.b16 %v2653
        %v2764 = vunpack.c.l.b16 %v2654
        %v2765 = vunpack.c.h.b16 %v2654
        %v2766 = vunpack.c.l.b16 %v2655
        %v2767 = vunpack.c.h.b16 %v2655
        %v2768 = vunpack.c.l.b16 %v2656
        %v2769 = vunpack.c.h.b16 %v2656
        %v2770 = vunpack.c.l.b16 %v2657
        %v2771 = vunpack.c.h.b16 %v2657
        %v2772 = vunpack.c.l.b16 %v2658
        %v2773 = vunpack.c.h.b16 %v2658
        %v2774 = vunpack.c.l.b16 %v2659
        %v2775 = vunpack.c.h.b16 %v2659
        %v2776 = vunpack.c.l.b16 %v2660
        %v2777 = vunpack.c.h.b16 %v2660
        %v2778 = vunpack.c.l.b16 %v2661
        %v2779 = vunpack.c.h.b16 %v2661
        %v2780 = vpack.c.b16 %v2720, %v2716
        %v2781 = vpack.c.b16 %v2721, %v2717
        %v2782 = vpack.c.b16 %v2722, %v2718
        %v2783 = vpack.c.b16 %v2723, %v2719
        %v2784 = vpack.c.b16 %v2728, %v2724
        %v2785 = vpack.c.b16 %v2729, %v2725
        %v2786 = vpack.c.b16 %v2730, %v2726
        %v2787 = vpack.c.b16 %v2731, %v2727
        %v2788 = vpack.c.b16 %v2736, %v2732
        %v2789 = vpack.c.b16 %v2737, %v2733
        %v2790 = vpack.c.b16 %v2738, %v2734
        %v2791 = vpack.c.b16 %v2739, %v2735
        %v2792 = vpack.c.b16 %v2744, %v2740
        %v2793 = vpack.c.b16 %v2745, %v2741
        %v2794 = vpack.c.b16 %v2746, %v2742
        %v2795 = vpack.c.b16 %v2747, %v2743
        %v2796 = vpack.c.b16 %v2752, %v2748
        %v2797 = vpack.c.b16 %v2753, %v2749
        %v2798 = vpack.c.b16 %v2754, %v2750
        %v2799 = vpack.c.b16 %v2755, %v2751
        %v2800 = vpack.c.b16 %v2760, %v2756
        %v2801 = vpack.c.b16 %v2761, %v2757
        %v2802 = vpack.c.b16 %v2762, %v2758
        %v2803 = vpack.c.b16 %v2763, %v2759
        %v2804 = vpack.c.b16 %v2768, %v2764
        %v2805 = vpack.c.b16 %v2769, %v2765
        %v2806 = vpack.c.b16 %v2770, %v2766
        %v2807 = vpack.c.b16 %v2771, %v2767
        %v2808 = vpack.c.b16 %v2776, %v2772
        %v2809 = vpack.c.b16 %v2777, %v2773
        %v2810 = vpack.c.b16 %v2778, %v2774
        %v2811 = vpack.c.b16 %v2779, %v2775
        %2844 = vmatprep.subr.bf16.mxu0 %v2809
        %2845 = vmatpush1.bf16.msra.mxu0 %v2808
        %2846 = vmatprep.subr.bf16.mxu0 %v2805
        %2847 = vmatpush1.bf16.msra.mxu0 %v2804
        %2848 = vmatprep.subr.bf16.mxu0 %v2801
        %2849 = vmatpush1.bf16.msra.mxu0 %v2800
        %2850 = vmatprep.subr.bf16.mxu0 %v2797
        %2851 = vmatpush1.bf16.msra.mxu0 %v2796
        %2852 = vmatprep.subr.bf16.mxu0 %v2793
        %2853 = vmatpush1.bf16.msra.mxu0 %v2792
        %2854 = vmatprep.subr.bf16.mxu0 %v2789
        %2855 = vmatpush1.bf16.msra.mxu0 %v2788
        %2856 = vmatprep.subr.bf16.mxu0 %v2785
        %2857 = vmatpush1.bf16.msra.mxu0 %v2784
        %2858 = vmatprep.subr.bf16.mxu0 %v2781
        %2859 = vmatpush1.bf16.msra.mxu0 %v2780
        %2860 = vmatprep.subr.bf16.mxu0 0
        %2861 = vmatpush2.bf16.msra.mxu0 0
        %2862 = vmatprep.subr.bf16.mxu0 0
        %2863 = vmatpush2.bf16.msra.mxu0 0
        %2864 = vmatprep.subr.bf16.mxu0 0
        %2865 = vmatpush2.bf16.msra.mxu0 0
        %2866 = vmatprep.subr.bf16.mxu0 0
        %2867 = vmatpush2.bf16.msra.mxu0 0
        %2868 = vmatprep.subr.bf16.mxu0 0
        %2869 = vmatpush2.bf16.msra.mxu0 0
        %2870 = vmatprep.subr.bf16.mxu0 0
        %2871 = vmatpush2.bf16.msra.mxu0 0
        %2872 = vmatprep.subr.bf16.mxu0 0
        %2873 = vmatpush2.bf16.msra.mxu0 0
        %2874 = vmatprep.subr.bf16.mxu0 0
        %2875 = vmatpush2.bf16.msra.mxu0 0
        %2876 = vmatprep.mubr.bf16.mxu0 0
        %2877 = vmatmul.mubr.bf16.gmra.mxu0 %v2629
        %v2878 = vpop.f32.mrf.mxu0
        %v2879 = vadd.f32 %v2667, %v2878
        %v2880 = vpop.f32.mrf.mxu0
        %v2881 = vadd.f32 %v2671, %v2880
        %v2882 = vpop.f32.mrf.mxu0
        %v2883 = vadd.f32 %v2667, %v2882
        %v2884 = vpop.f32.mrf.mxu0
        %v2885 = vadd.f32 %v2671, %v2884
        %2886 = vdwg.mxu0
        %2887 = vmatprep.subr.bf16.mxu0 %v2811
        %2888 = vmatpush1.bf16.msra.mxu0 %v2810
        %2889 = vmatprep.subr.bf16.mxu0 %v2807
        %2890 = vmatpush1.bf16.msra.mxu0 %v2806
        %2891 = vmatprep.subr.bf16.mxu0 %v2803
        %2892 = vmatpush1.bf16.msra.mxu0 %v2802
        %2893 = vmatprep.subr.bf16.mxu0 %v2799
        %2894 = vmatpush1.bf16.msra.mxu0 %v2798
        %2895 = vmatprep.subr.bf16.mxu0 %v2795
        %2896 = vmatpush1.bf16.msra.mxu0 %v2794
        %2897 = vmatprep.subr.bf16.mxu0 %v2791
        %2898 = vmatpush1.bf16.msra.mxu0 %v2790
        %2899 = vmatprep.subr.bf16.mxu0 %v2787
        %2900 = vmatpush1.bf16.msra.mxu0 %v2786
        %2901 = vmatprep.subr.bf16.mxu0 %v2783
        %2902 = vmatpush1.bf16.msra.mxu0 %v2782
        %2903 = vmatprep.subr.bf16.mxu0 0
        %2904 = vmatpush2.bf16.msra.mxu0 0
        %2905 = vmatprep.subr.bf16.mxu0 0
        %2906 = vmatpush2.bf16.msra.mxu0 0
        %2907 = vmatprep.subr.bf16.mxu0 0
        %2908 = vmatpush2.bf16.msra.mxu0 0
        %2909 = vmatprep.subr.bf16.mxu0 0
        %2910 = vmatpush2.bf16.msra.mxu0 0
        %2911 = vmatprep.subr.bf16.mxu0 0
        %2912 = vmatpush2.bf16.msra.mxu0 0
        %2913 = vmatprep.subr.bf16.mxu0 0
        %2914 = vmatpush2.bf16.msra.mxu0 0
        %2915 = vmatprep.subr.bf16.mxu0 0
        %2916 = vmatpush2.bf16.msra.mxu0 0
        %2917 = vmatprep.subr.bf16.mxu0 0
        %2918 = vmatpush2.bf16.msra.mxu0 0
        %2919 = vmatprep.mubr.bf16.mxu0 0
        %2920 = vmatmul.mubr.bf16.gmra.mxu0 %v2629
        %v2921 = vpop.f32.mrf.mxu0
        %v2922 = vadd.f32 %v2675, %v2921
        %v2923 = vpop.f32.mrf.mxu0
        %v2924 = vadd.f32 %v2679, %v2923
        %v2925 = vpop.f32.mrf.mxu0
        %v2926 = vadd.f32 %v2675, %v2925
        %v2927 = vpop.f32.mrf.mxu0
        %v2928 = vadd.f32 %v2679, %v2927
        %2929 = vdwg.mxu0
        %v2930 = vmul.f32 %v2879, %v2879
        %v2931 = vmul.f32 %v2881, %v2881
        %v2932 = vmul.f32 %v2922, %v2922
        %v2933 = vmul.f32 %v2924, %v2924
        %v2934 = vmul.f32 %v2883, %v2883
        %v2935 = vmul.f32 %v2885, %v2885
        %v2936 = vmul.f32 %v2926, %v2926
        %v2937 = vmul.f32 %v2928, %v2928
        %v2938 = vmul.f32 %v2879, %v2930
        %v2939 = vmul.f32 %v2881, %v2931
        %v2940 = vmul.f32 %v2922, %v2932
        %v2941 = vmul.f32 %v2924, %v2933
        %v2942 = vmul.f32 %v2883, %v2934
        %v2943 = vmul.f32 %v2885, %v2935
        %v2944 = vmul.f32 %v2926, %v2936
        %v2945 = vmul.f32 %v2928, %v2937
        %v2946 = vmul.f32 %v2938, 0.044715
        %v2947 = vmul.f32 %v2939, 0.044715
        %v2948 = vmul.f32 %v2940, 0.044715
        %v2949 = vmul.f32 %v2941, 0.044715
        %v2950 = vmul.f32 %v2942, 0.044715
        %v2951 = vmul.f32 %v2943, 0.044715
        %v2952 = vmul.f32 %v2944, 0.044715
        %v2953 = vmul.f32 %v2945, 0.044715
        %v2954 = vadd.f32 %v2879, %v2946
        %v2955 = vadd.f32 %v2881, %v2947
        %v2956 = vadd.f32 %v2922, %v2948
        %v2957 = vadd.f32 %v2924, %v2949
        %v2958 = vadd.f32 %v2883, %v2950
        %v2959 = vadd.f32 %v2885, %v2951
        %v2960 = vadd.f32 %v2926, %v2952
        %v2961 = vadd.f32 %v2928, %v2953
        %v2962 = vmul.f32 %v2954, 0.7978846
        %v2963 = vmul.f32 %v2955, 0.7978846
        %v2964 = vmul.f32 %v2956, 0.7978846
        %v2965 = vmul.f32 %v2957, 0.7978846
        %v2966 = vmul.f32 %v2958, 0.7978846
        %v2967 = vmul.f32 %v2959, 0.7978846
        %v2968 = vmul.f32 %v2960, 0.7978846
        %v2969 = vmul.f32 %v2961, 0.7978846
        %v2970 = vtanh.pop %v2962
        %v2971 = vtanh.pop %v2963
        %v2972 = vtanh.pop %v2964
        %v2973 = vtanh.pop %v2965
        %v2974 = vtanh.pop %v2966
        %v2975 = vtanh.pop %v2967
        %v2976 = vtanh.pop %v2968
        %v2977 = vtanh.pop %v2969
        %v2978 = vadd.f32 %v2970, 1.0
        %v2979 = vadd.f32 %v2971, 1.0
        %v2980 = vadd.f32 %v2972, 1.0
        %v2981 = vadd.f32 %v2973, 1.0
        %v2982 = vadd.f32 %v2974, 1.0
        %v2983 = vadd.f32 %v2975, 1.0
        %v2984 = vadd.f32 %v2976, 1.0
        %v2985 = vadd.f32 %v2977, 1.0
        %v2986 = vmul.f32 %v2978, 0.5
        %v2987 = vmul.f32 %v2979, 0.5
        %v2988 = vmul.f32 %v2980, 0.5
        %v2989 = vmul.f32 %v2981, 0.5
        %v2990 = vmul.f32 %v2982, 0.5
        %v2991 = vmul.f32 %v2983, 0.5
        %v2992 = vmul.f32 %v2984, 0.5
        %v2993 = vmul.f32 %v2985, 0.5
        %v2994 = vmul.f32 %v2879, %v2986
        %v2995 = vmul.f32 %v2881, %v2987
        %v2996 = vmul.f32 %v2922, %v2988
        %v2997 = vmul.f32 %v2924, %v2989
        %v2998 = vmul.f32 %v2883, %v2990
        %v2999 = vmul.f32 %v2885, %v2991
        %v3000 = vmul.f32 %v2926, %v2992
        %v3001 = vmul.f32 %v2928, %v2993
        %v3002 = vpack.c.bf16 %v2998, %v2994
        %v3003 = vpack.c.bf16 %v2999, %v2995
        %v3004 = vpack.c.bf16 %v3000, %v2996
        %v3005 = vpack.c.bf16 %v3001, %v2997
        %v3006 = vld [vmem:[%s677] sm:$0xf]
        %v3007 = vld [vmem:[%s677 + $0x4] sm:$0xf]
        %v3008 = vld [vmem:[%s677 + $0x8] sm:$0xf]
        %v3009 = vld [vmem:[%s677 + $0xc] sm:$0xf]
        %v3010 = vld [vmem:[%s677 + $0x10] sm:$0xf]
        %v3011 = vld [vmem:[%s677 + $0x14] sm:$0xf]
        %v3012 = vld [vmem:[%s677 + $0x18] sm:$0xf]
        %v3013 = vld [vmem:[%s677 + $0x1c] sm:$0xf]
        %v3014 = vld [vmem:[%s677 + $0x20] sm:$0xf]
        %v3015 = vld [vmem:[%s677 + $0x24] sm:$0xf]
        %v3016 = vld [vmem:[%s677 + $0x28] sm:$0xf]
        %v3017 = vld [vmem:[%s677 + $0x2c] sm:$0xf]
        %v3018 = vld [vmem:[%s677 + $0x30] sm:$0xf]
        %v3019 = vld [vmem:[%s677 + $0x34] sm:$0xf]
        %v3020 = vld [vmem:[%s677 + $0x38] sm:$0xf]
        %v3021 = vld [vmem:[%s677 + $0x3c] sm:$0xf]
        %v3022 = vld [vmem:[%s677 + $0x40] sm:$0xf]
        %v3023 = vld [vmem:[%s677 + $0x44] sm:$0xf]
        %v3024 = vld [vmem:[%s677 + $0x48] sm:$0xf]
        %v3025 = vld [vmem:[%s677 + $0x4c] sm:$0xf]
        %v3026 = vld [vmem:[%s677 + $0x50] sm:$0xf]
        %v3027 = vld [vmem:[%s677 + $0x54] sm:$0xf]
        %v3028 = vld [vmem:[%s677 + $0x58] sm:$0xf]
        %v3029 = vld [vmem:[%s677 + $0x5c] sm:$0xf]
        %v3030 = vld [vmem:[%s677 + $0x60] sm:$0xf]
        %v3031 = vld [vmem:[%s677 + $0x64] sm:$0xf]
        %v3032 = vld [vmem:[%s677 + $0x68] sm:$0xf]
        %v3033 = vld [vmem:[%s677 + $0x6c] sm:$0xf]
        %v3034 = vld [vmem:[%s677 + $0x70] sm:$0xf]
        %v3035 = vld [vmem:[%s677 + $0x74] sm:$0xf]
        %v3036 = vld [vmem:[%s677 + $0x78] sm:$0xf]
        %v3037 = vld [vmem:[%s677 + $0x7c] sm:$0xf]
        %v3038 = vld [vmem:[%s677 + $0x80] sm:$0xf]
        %v3039 = vld [vmem:[%s677 + $0x84] sm:$0xf]
        %v3040 = vld [vmem:[%s677 + $0x88] sm:$0xf]
        %v3041 = vld [vmem:[%s677 + $0x8c] sm:$0xf]
        %v3042 = vld [vmem:[%s677 + $0x90] sm:$0xf]
        %v3043 = vld [vmem:[%s677 + $0x94] sm:$0xf]
        %v3044 = vld [vmem:[%s677 + $0x98] sm:$0xf]
        %v3045 = vld [vmem:[%s677 + $0x9c] sm:$0xf]
        %v3046 = vld [vmem:[%s677 + $0xa0] sm:$0xf]
        %v3047 = vld [vmem:[%s677 + $0xa4] sm:$0xf]
        %v3048 = vld [vmem:[%s677 + $0xa8] sm:$0xf]
        %v3049 = vld [vmem:[%s677 + $0xac] sm:$0xf]
        %v3050 = vld [vmem:[%s677 + $0xb0] sm:$0xf]
        %v3051 = vld [vmem:[%s677 + $0xb4] sm:$0xf]
        %v3052 = vld [vmem:[%s677 + $0xb8] sm:$0xf]
        %v3053 = vld [vmem:[%s677 + $0xbc] sm:$0xf]
        %v3054 = vld [vmem:[%s677 + $0xc0] sm:$0xf]
        %v3055 = vld [vmem:[%s677 + $0xc4] sm:$0xf]
        %v3056 = vld [vmem:[%s677 + $0xc8] sm:$0xf]
        %v3057 = vld [vmem:[%s677 + $0xcc] sm:$0xf]
        %v3058 = vld [vmem:[%s677 + $0xd0] sm:$0xf]
        %v3059 = vld [vmem:[%s677 + $0xd4] sm:$0xf]
        %v3060 = vld [vmem:[%s677 + $0xd8] sm:$0xf]
        %v3061 = vld [vmem:[%s677 + $0xdc] sm:$0xf]
        %v3062 = vld [vmem:[%s677 + $0xe0] sm:$0xf]
        %v3063 = vld [vmem:[%s677 + $0xe4] sm:$0xf]
        %v3064 = vld [vmem:[%s677 + $0xe8] sm:$0xf]
        %v3065 = vld [vmem:[%s677 + $0xec] sm:$0xf]
        %v3066 = vld [vmem:[%s677 + $0xf0] sm:$0xf]
        %v3067 = vld [vmem:[%s677 + $0xf4] sm:$0xf]
        %v3068 = vld [vmem:[%s677 + $0xf8] sm:$0xf]
        %v3069 = vld [vmem:[%s677 + $0xfc] sm:$0xf]
        %v3070 = vld [vmem:[%s790] sm:$0x1]
        %v3072 = vlaneseq
        %v3073 = vshrl.u32 %v3072, 7
        %v3074 = vsub.s32 0, %v3073
        %v3075 = vrot.slane %v3070, %v3074
        %v3141 = vunpack.c.l.b16 %v3006
        %v3142 = vunpack.c.l.b16 %v3007
        %v3143 = vunpack.c.l.b16 %v3008
        %v3144 = vunpack.c.l.b16 %v3009
        %v3145 = vunpack.c.l.b16 %v3010
        %v3146 = vunpack.c.l.b16 %v3011
        %v3147 = vunpack.c.l.b16 %v3012
        %v3148 = vunpack.c.l.b16 %v3013
        %v3149 = vunpack.c.l.b16 %v3014
        %v3150 = vunpack.c.l.b16 %v3015
        %v3151 = vunpack.c.l.b16 %v3016
        %v3152 = vunpack.c.l.b16 %v3017
        %v3153 = vunpack.c.l.b16 %v3018
        %v3154 = vunpack.c.l.b16 %v3019
        %v3155 = vunpack.c.l.b16 %v3020
        %v3156 = vunpack.c.l.b16 %v3021
        %v3157 = vunpack.c.l.b16 %v3022
        %v3158 = vunpack.c.l.b16 %v3023
        %v3159 = vunpack.c.l.b16 %v3024
        %v3160 = vunpack.c.l.b16 %v3025
        %v3161 = vunpack.c.l.b16 %v3026
        %v3162 = vunpack.c.l.b16 %v3027
        %v3163 = vunpack.c.l.b16 %v3028
        %v3164 = vunpack.c.l.b16 %v3029
        %v3165 = vunpack.c.l.b16 %v3030
        %v3166 = vunpack.c.l.b16 %v3031
        %v3167 = vunpack.c.l.b16 %v3032
        %v3168 = vunpack.c.l.b16 %v3033
        %v3169 = vunpack.c.l.b16 %v3034
        %v3170 = vunpack.c.l.b16 %v3035
        %v3171 = vunpack.c.l.b16 %v3036
        %v3172 = vunpack.c.l.b16 %v3037
        %v3173 = vunpack.c.l.b16 %v3038
        %v3174 = vunpack.c.l.b16 %v3039
        %v3175 = vunpack.c.l.b16 %v3040
        %v3176 = vunpack.c.l.b16 %v3041
        %v3177 = vunpack.c.l.b16 %v3042
        %v3178 = vunpack.c.l.b16 %v3043
        %v3179 = vunpack.c.l.b16 %v3044
        %v3180 = vunpack.c.l.b16 %v3045
        %v3181 = vunpack.c.l.b16 %v3046
        %v3182 = vunpack.c.l.b16 %v3047
        %v3183 = vunpack.c.l.b16 %v3048
        %v3184 = vunpack.c.l.b16 %v3049
        %v3185 = vunpack.c.l.b16 %v3050
        %v3186 = vunpack.c.l.b16 %v3051
        %v3187 = vunpack.c.l.b16 %v3052
        %v3188 = vunpack.c.l.b16 %v3053
        %v3189 = vunpack.c.l.b16 %v3054
        %v3190 = vunpack.c.l.b16 %v3055
        %v3191 = vunpack.c.l.b16 %v3056
        %v3192 = vunpack.c.l.b16 %v3057
        %v3193 = vunpack.c.l.b16 %v3058
        %v3194 = vunpack.c.l.b16 %v3059
        %v3195 = vunpack.c.l.b16 %v3060
        %v3196 = vunpack.c.l.b16 %v3061
        %v3197 = vunpack.c.l.b16 %v3062
        %v3198 = vunpack.c.l.b16 %v3063
        %v3199 = vunpack.c.l.b16 %v3064
        %v3200 = vunpack.c.l.b16 %v3065
        %v3201 = vunpack.c.l.b16 %v3066
        %v3202 = vunpack.c.l.b16 %v3067
        %v3203 = vunpack.c.l.b16 %v3068
        %v3204 = vunpack.c.l.b16 %v3069
        %v3205 = vpack.c.b16 %v3142, %v3141
        %v3206 = vpack.c.b16 %v3144, %v3143
        %v3207 = vpack.c.b16 %v3146, %v3145
        %v3208 = vpack.c.b16 %v3148, %v3147
        %v3209 = vpack.c.b16 %v3150, %v3149
        %v3210 = vpack.c.b16 %v3152, %v3151
        %v3211 = vpack.c.b16 %v3154, %v3153
        %v3212 = vpack.c.b16 %v3156, %v3155
        %v3213 = vpack.c.b16 %v3158, %v3157
        %v3214 = vpack.c.b16 %v3160, %v3159
        %v3215 = vpack.c.b16 %v3162, %v3161
        %v3216 = vpack.c.b16 %v3164, %v3163
        %v3217 = vpack.c.b16 %v3166, %v3165
        %v3218 = vpack.c.b16 %v3168, %v3167
        %v3219 = vpack.c.b16 %v3170, %v3169
        %v3220 = vpack.c.b16 %v3172, %v3171
        %v3221 = vpack.c.b16 %v3174, %v3173
        %v3222 = vpack.c.b16 %v3176, %v3175
        %v3223 = vpack.c.b16 %v3178, %v3177
        %v3224 = vpack.c.b16 %v3180, %v3179
        %v3225 = vpack.c.b16 %v3182, %v3181
        %v3226 = vpack.c.b16 %v3184, %v3183
        %v3227 = vpack.c.b16 %v3186, %v3185
        %v3228 = vpack.c.b16 %v3188, %v3187
        %v3229 = vpack.c.b16 %v3190, %v3189
        %v3230 = vpack.c.b16 %v3192, %v3191
        %v3231 = vpack.c.b16 %v3194, %v3193
        %v3232 = vpack.c.b16 %v3196, %v3195
        %v3233 = vpack.c.b16 %v3198, %v3197
        %v3234 = vpack.c.b16 %v3200, %v3199
        %v3235 = vpack.c.b16 %v3202, %v3201
        %v3236 = vpack.c.b16 %v3204, %v3203
        %3269 = vmatprep.subr.bf16.mxu0 0
        %3270 = vmatpush1.bf16.msra.mxu0 %v3212
        %3271 = vmatprep.subr.bf16.mxu0 0
        %3272 = vmatpush1.bf16.msra.mxu0 %v3211
        %3273 = vmatprep.subr.bf16.mxu0 0
        %3274 = vmatpush1.bf16.msra.mxu0 %v3210
        %3275 = vmatprep.subr.bf16.mxu0 0
        %3276 = vmatpush1.bf16.msra.mxu0 %v3209
        %3277 = vmatprep.subr.bf16.mxu0 0
        %3278 = vmatpush1.bf16.msra.mxu0 %v3208
        %3279 = vmatprep.subr.bf16.mxu0 0
        %3280 = vmatpush1.bf16.msra.mxu0 %v3207
        %3281 = vmatprep.subr.bf16.mxu0 0
        %3282 = vmatpush1.bf16.msra.mxu0 %v3206
        %3283 = vmatprep.subr.bf16.mxu0 0
        %3284 = vmatpush1.bf16.msra.mxu0 %v3205
        %3285 = vmatprep.subr.bf16.mxu0 0
        %3286 = vmatpush2.bf16.msra.mxu0 %v3220
        %3287 = vmatprep.subr.bf16.mxu0 0
        %3288 = vmatpush2.bf16.msra.mxu0 %v3219
        %3289 = vmatprep.subr.bf16.mxu0 0
        %3290 = vmatpush2.bf16.msra.mxu0 %v3218
        %3291 = vmatprep.subr.bf16.mxu0 0
        %3292 = vmatpush2.bf16.msra.mxu0 %v3217
        %3293 = vmatprep.subr.bf16.mxu0 0
        %3294 = vmatpush2.bf16.msra.mxu0 %v3216
        %3295 = vmatprep.subr.bf16.mxu0 0
        %3296 = vmatpush2.bf16.msra.mxu0 %v3215
        %3297 = vmatprep.subr.bf16.mxu0 0
        %3298 = vmatpush2.bf16.msra.mxu0 %v3214
        %3299 = vmatprep.subr.bf16.mxu0 0
        %3300 = vmatpush2.bf16.msra.mxu0 %v3213
        %3301 = vmatprep.mubr.bf16.mxu0 %v3003
        %3302 = vmatmul.mubr.bf16.gmra.mxu0 %v3002
        %v3303 = vpop.f32.mrf.mxu0
        %v3304 = vadd.f32 %v3075, %v3303
        %v3305 = vpop.f32.mrf.mxu0
        %v3306 = vpop.f32.mrf.mxu0
        %v3307 = vadd.f32 %v3075, %v3306
        %v3308 = vpop.f32.mrf.mxu0
        %3309 = vdwg.mxu0
        %3310 = vmatprep.subr.bf16.mxu0 0
        %3311 = vmatpush1.bf16.msra.mxu0 %v3228
        %3312 = vmatprep.subr.bf16.mxu0 0
        %3313 = vmatpush1.bf16.msra.mxu0 %v3227
        %3314 = vmatprep.subr.bf16.mxu0 0
        %3315 = vmatpush1.bf16.msra.mxu0 %v3226
        %3316 = vmatprep.subr.bf16.mxu0 0
        %3317 = vmatpush1.bf16.msra.mxu0 %v3225
        %3318 = vmatprep.subr.bf16.mxu0 0
        %3319 = vmatpush1.bf16.msra.mxu0 %v3224
        %3320 = vmatprep.subr.bf16.mxu0 0
        %3321 = vmatpush1.bf16.msra.mxu0 %v3223
        %3322 = vmatprep.subr.bf16.mxu0 0
        %3323 = vmatpush1.bf16.msra.mxu0 %v3222
        %3324 = vmatprep.subr.bf16.mxu0 0
        %3325 = vmatpush1.bf16.msra.mxu0 %v3221
        %3326 = vmatprep.subr.bf16.mxu0 0
        %3327 = vmatpush2.bf16.msra.mxu0 %v3236
        %3328 = vmatprep.subr.bf16.mxu0 0
        %3329 = vmatpush2.bf16.msra.mxu0 %v3235
        %3330 = vmatprep.subr.bf16.mxu0 0
        %3331 = vmatpush2.bf16.msra.mxu0 %v3234
        %3332 = vmatprep.subr.bf16.mxu0 0
        %3333 = vmatpush2.bf16.msra.mxu0 %v3233
        %3334 = vmatprep.subr.bf16.mxu0 0
        %3335 = vmatpush2.bf16.msra.mxu0 %v3232
        %3336 = vmatprep.subr.bf16.mxu0 0
        %3337 = vmatpush2.bf16.msra.mxu0 %v3231
        %3338 = vmatprep.subr.bf16.mxu0 0
        %3339 = vmatpush2.bf16.msra.mxu0 %v3230
        %3340 = vmatprep.subr.bf16.mxu0 0
        %3341 = vmatpush2.bf16.msra.mxu0 %v3229
        %3342 = vmatprep.mubr.bf16.mxu0 %v3005
        %3343 = vmatmul.mubr.bf16.gmra.mxu0 %v3004
        %v3344 = vpop.f32.mrf.mxu0
        %v3345 = vadd.f32 %v3304, %v3344
        %v3346 = vpop.f32.mrf.mxu0
        %v3347 = vpop.f32.mrf.mxu0
        %v3348 = vadd.f32 %v3307, %v3347
        %v3349 = vpop.f32.mrf.mxu0
        %3350 = vdwg.mxu0
        %v3351 = vadd.f32 %v2627, %v3345
        %v3352 = vadd.f32 %v2628, %v3348
        %v3353 = vld [vmem:[%s793] sm:$0x1]
        %v3354 = vld [vmem:[%s796] sm:$0x1]
        %3355 = vadd.xlane.f32.xlu0 %v3351
        %v3356 = vpop.xlane.xlu0 %3355
        %3357 = vadd.xlane.f32.xlu0 %v3352
        %v3358 = vpop.xlane.xlu0 %3357
        %v3359 = vmul.f32 %v3356, %v2594
        %v3360 = vmul.f32 %v3358, %v2594
        %v3361 = vsub.f32 %v3351, %v3359
        %v3362 = vsub.f32 %v3352, %v3360
        %v3363 = vmul.f32 %v3361, %v3361
        %v3364 = vmul.f32 %v3362, %v3362
        %3365 = vadd.xlane.f32.xlu0 %v3363
        %v3366 = vpop.xlane.xlu0 %3365
        %3367 = vadd.xlane.f32.xlu0 %v3364
        %v3368 = vpop.xlane.xlu0 %3367
        %v3369 = vmul.f32 %v3366, %v2594
        %v3370 = vmul.f32 %v3368, %v2594
        %v3371 = vadd.f32 %v3369, 1e-12
        %v3372 = vadd.f32 %v3370, 1e-12
        %v3373 = vrsqrt.pop %v3371
        %v3374 = vrsqrt.pop %v3372
        %v3375 = vmul.f32 %v3361, %v3373
        %v3376 = vmul.f32 %v3362, %v3374
        %v3378 = vlaneseq
        %v3379 = vshrl.u32 %v3378, 7
        %v3380 = vsub.s32 0, %v3379
        %v3381 = vrot.slane %v3353, %v3380
        %v3383 = vmul.f32 %v3375, %v3381
        %v3384 = vmul.f32 %v3376, %v3381
        %v3386 = vlaneseq
        %v3387 = vshrl.u32 %v3386, 7
        %v3388 = vsub.s32 0, %v3387
        %v3389 = vrot.slane %v3354, %v3388
        %v3391 = vadd.f32 %v3383, %v3389
        %v3392 = vadd.f32 %v3384, %v3389
        %3393 = vst [vmem:[#allocation2] sm:$0xff] %v3391
        %3394 = vst [vmem:[#allocation2 + $0x8] sm:$0xff] %v3392
        %p3395 = scmp.eq.s32.totalorder %s36, 3
        // Predicated region
        $region109: #{forward.1} parent=91 // pred_check
          %p3396 = pneg %p3395
        $region110: #{forward.1} parent=91 // pred_check_branch
          %3398 = sbr.rel (%p3396) target = $region112
        $region111: #{forward.1} parent=91 // pred_region
          %v3399 = vld [vmem:[%s16] sm:$0xff]
          %v3400 = vld [vmem:[%s16 + $0x8] sm:$0xff]
          %v3401 = vld [vmem:[%s16 + $0x10] sm:$0xff]
          %v3402 = vld [vmem:[%s16 + $0x18] sm:$0xff]
          %v3403 = vld [vmem:[%s16 + $0x20] sm:$0xff]
          %v3404 = vld [vmem:[%s16 + $0x28] sm:$0xff]
          %v3405 = vld [vmem:[%s16 + $0x30] sm:$0xff]
          %v3406 = vld [vmem:[%s16 + $0x38] sm:$0xff]
          %v3407 = vld [vmem:[%s16 + $0x40] sm:$0xff]
          %v3408 = vld [vmem:[%s16 + $0x48] sm:$0xff]
          %v3409 = vld [vmem:[%s16 + $0x50] sm:$0xff]
          %v3410 = vld [vmem:[%s16 + $0x58] sm:$0xff]
          %v3411 = vld [vmem:[%s16 + $0x60] sm:$0xff]
          %v3412 = vld [vmem:[%s16 + $0x68] sm:$0xff]
          %v3413 = vld [vmem:[%s16 + $0x70] sm:$0xff]
          %v3414 = vld [vmem:[%s16 + $0x78] sm:$0xff]
          %v3415 = vld [vmem:[%s17] sm:$0x1]
          %v3417 = vlaneseq
          %v3418 = vshrl.u32 %v3417, 7
          %v3419 = vsub.s32 0, %v3418
          %v3420 = vrot.slane %v3415, %v3419
          %v3424 = vrot.slane %v3392, 7
          %vm3425 = vcmask 1041409
          %v3426 = vsel %vm3425, %v3424, %v3391
          %3428 = vmatprep.subr.mxu0 0.0
          %3429 = vmatpush1.msra.mxu0 %v3414
          %3430 = vmatprep.subr.mxu0 0.0
          %3431 = vmatpush1.msra.mxu0 %v3413
          %3432 = vmatprep.subr.mxu0 0.0
          %3433 = vmatpush1.msra.mxu0 %v3412
          %3434 = vmatprep.subr.mxu0 0.0
          %3435 = vmatpush1.msra.mxu0 %v3411
          %3436 = vmatprep.subr.mxu0 0.0
          %3437 = vmatpush1.msra.mxu0 %v3410
          %3438 = vmatprep.subr.mxu0 0.0
          %3439 = vmatpush1.msra.mxu0 %v3409
          %3440 = vmatprep.subr.mxu0 0.0
          %3441 = vmatpush1.msra.mxu0 %v3408
          %3442 = vmatprep.subr.mxu0 0.0
          %3443 = vmatpush1.msra.mxu0 %v3407
          %3444 = vmatprep.subr.mxu0 0.0
          %3445 = vmatpush1.msra.mxu0 %v3406
          %3446 = vmatprep.subr.mxu0 0.0
          %3447 = vmatpush1.msra.mxu0 %v3405
          %3448 = vmatprep.subr.mxu0 0.0
          %3449 = vmatpush1.msra.mxu0 %v3404
          %3450 = vmatprep.subr.mxu0 0.0
          %3451 = vmatpush1.msra.mxu0 %v3403
          %3452 = vmatprep.subr.mxu0 0.0
          %3453 = vmatpush1.msra.mxu0 %v3402
          %3454 = vmatprep.subr.mxu0 0.0
          %3455 = vmatpush1.msra.mxu0 %v3401
          %3456 = vmatprep.subr.mxu0 0.0
          %3457 = vmatpush1.msra.mxu0 %v3400
          %3458 = vmatprep.subr.mxu0 0.0
          %3459 = vmatpush1.msra.mxu0 %v3399
          %3460 = vmatprep.subr.mxu0 0.0
          %3461 = vmatpush2.msra.mxu0 0.0
          %3462 = vmatprep.subr.mxu0 0.0
          %3463 = vmatpush2.msra.mxu0 0.0
          %3464 = vmatprep.subr.mxu0 0.0
          %3465 = vmatpush2.msra.mxu0 0.0
          %3466 = vmatprep.subr.mxu0 0.0
          %3467 = vmatpush2.msra.mxu0 0.0
          %3468 = vmatprep.subr.mxu0 0.0
          %3469 = vmatpush2.msra.mxu0 0.0
          %3470 = vmatprep.subr.mxu0 0.0
          %3471 = vmatpush2.msra.mxu0 0.0
          %3472 = vmatprep.subr.mxu0 0.0
          %3473 = vmatpush2.msra.mxu0 0.0
          %3474 = vmatprep.subr.mxu0 0.0
          %3475 = vmatpush2.msra.mxu0 0.0
          %3476 = vmatprep.subr.mxu0 0.0
          %3477 = vmatpush2.msra.mxu0 0.0
          %3478 = vmatprep.subr.mxu0 0.0
          %3479 = vmatpush2.msra.mxu0 0.0
          %3480 = vmatprep.subr.mxu0 0.0
          %3481 = vmatpush2.msra.mxu0 0.0
          %3482 = vmatprep.subr.mxu0 0.0
          %3483 = vmatpush2.msra.mxu0 0.0
          %3484 = vmatprep.subr.mxu0 0.0
          %3485 = vmatpush2.msra.mxu0 0.0
          %3486 = vmatprep.subr.mxu0 0.0
          %3487 = vmatpush2.msra.mxu0 0.0
          %3488 = vmatprep.subr.mxu0 0.0
          %3489 = vmatpush2.msra.mxu0 0.0
          %3490 = vmatprep.subr.mxu0 0.0
          %3491 = vmatpush2.msra.mxu0 0.0
          %3492 = vmatprep.mubr.f32.mxu0 0.0
          %3493 = vmatmul.mubr.f32.gmra.mxu0 %v3426
          %v3494 = vpop.f32.mrf.mxu0
          %v3495 = vadd.f32 %v3420, %v3494
          %v3496 = vpop.f32.mrf.mxu0
          %3497 = vdwg.mxu0
          %3498 = vst [vmem:[#allocation9] sm:$0x3] %v3495
        $region112: #{forward.1} parent=91 // pred_fallthru
          _
        // Predicated region
        $region113: #{forward.1} parent=91 // pred_check
          %p3499 = pneg %p487
        $region114: #{forward.1} parent=91 // pred_check_branch
          %3501 = sbr.rel (%p3499) target = $region116
        $region115: #{forward.1} parent=91 // pred_region
          %s3503 = ssub.s32 32, 32
          %3504 = vsyncadd [#allocation5], %s3503
          %s3506 = sshll.u32 [#allocation9], 4
          %s3507 = int_to_ptr.vmem [resolvable:$true] %s3506
          %3509 = dma.vmem_to_hbm [thread:$0]  %s3507, 32, %s18, [#allocation5]
        $region116: #{forward.1} parent=91 // pred_fallthru
          _
        // Predicated region
        $region117: #{forward.1} parent=91 // pred_check
          %p3510 = pneg %p487
        $region118: #{forward.1} parent=91 // pred_check_branch
          %3512 = sbr.rel (%p3510) target = $region120
        $region119: #{forward.1} parent=91 // pred_region
          %3513 = dma.done [#allocation5], 32
        $region120: #{forward.1} parent=91 // pred_fallthru
          _
      $region92: #{forward.1} parent=5 // pred_fallthru
        _
      %p3514 = scmp.le.s32.totalorder 2, %s31
      // Predicated region
      $region121: #{forward.1} parent=5 // pred_check
        %p3515 = pneg %p3514
      $region122: #{forward.1} parent=5 // pred_check_branch
        %3517 = sbr.rel (%p3515) target = $region124
      $region123: #{forward.1} parent=5 // pred_region
        %s3518 = ssub.s32 %s31, 2
      $region124: #{forward.1} parent=5 // pred_fallthru
        _
    $region6: #{forward.1} parent=1 // loop_footer
      %s35 = sadd.s32 1, %s31
    $region7: #{forward.1} parent=1 // loop_footer_branch
      %30 = sbr.rel target = $region3
    $region8: #{forward.1} parent=1 // loop_exit
      _
    %3519 = vsyncpa [#allocation4], 1
    %s3520 = scalar_lea.sflag [#allocation4], 1
    %3521 = vsyncpa %s3520, 1
    %3522 = vsyncpa [#allocation7], 1
    %s3523 = scalar_lea.sflag [#allocation7], 1
    %3524 = vsyncpa %s3523, 1
    %3525 = vsyncpa [#allocation5], 1
    %s3526 = scalar_lea.sflag [#allocation5], 1
    %3527 = vsyncpa %s3526, 1

</llo_original>
